<compile_context>
chip_gen: v7x
topology: tpu7x:2x2x1
jax: 0.10.0
libtpu: 0.0.40
codegen_flags: <defaults>
</compile_context>

<pallas_src>
import functools

import jax
import jax.numpy as jnp
from jax.experimental import pallas as pl
from jax.experimental.pallas import tpu as pltpu

# ---- model config (from Seq2SeqLSTM.args) ----
V_INPUT = 40
V_TARGET = 32
D_INPUT = 16
D_TARGET = 16
D_H = 16
NUM_LAYERS = 2

# small example shapes
B = 2
N_SEQ = 8
N_T = 6


def seq2seq_kernel(n_seq, n_t, bp,
                   x_ref, y_ref,
                   enc_wx0_ref, enc_wh0_ref, enc_b0_ref, enc_wup_ref, enc_bup_ref,
                   dec_wx0_ref, dec_wh0_ref, dec_b0_ref, dec_wup_ref, dec_bup_ref,
                   wcomb_ref, bcomb_ref,
                   logits_ref, h_out_ref, c_out_ref):
    f32 = jnp.float32
    x_flat = x_ref[...]                      # [n_seq*bp, d_input]
    y_flat = y_ref[...]                      # [n_t*bp,   d_target]

    # Gate-packed weights (built in the wrapper; PyTorch gate order i,f,g,o along lanes).
    enc_wh0 = enc_wh0_ref[...]               # [d_h, 4*d_h]
    dec_wh0 = dec_wh0_ref[...]
    enc_wup = [enc_wup_ref[l] for l in range(NUM_LAYERS - 1)]   # each [2*d_h, 4*d_h]
    enc_bup = [enc_bup_ref[l] for l in range(NUM_LAYERS - 1)]   # each [1, 4*d_h]
    dec_wup = [dec_wup_ref[l] for l in range(NUM_LAYERS - 1)]
    dec_bup = [dec_bup_ref[l] for l in range(NUM_LAYERS - 1)]

    # Hoisted, gate-packed layer-0 x-projections (no recurrent dependence): ONE dot per path,
    # layer-0 bias folded in so the recurrence only does the h-path matmuls.
    enc_xp = (jnp.dot(x_flat, enc_wx0_ref[...], preferred_element_type=f32)
              + enc_b0_ref[...])             # [n_seq*bp, 4*d_h]
    dec_xp = (jnp.dot(y_flat, dec_wx0_ref[...], preferred_element_type=f32)
              + dec_b0_ref[...])             # [n_t*bp,   4*d_h]

    h = [jnp.zeros((bp, D_H), f32) for _ in range(NUM_LAYERS)]
    c = [jnp.zeros((bp, D_H), f32) for _ in range(NUM_LAYERS)]

    def packed_cell(pre, c_prev):
        """PyTorch LSTMCell gate math on a gate-packed [bp, 4*d_h] pre-activation."""
        sig = jax.nn.sigmoid(pre)            # full 64-lane EUP op
        tnh = jnp.tanh(pre)                  # full 64-lane EUP op
        i_g = sig[:, 0:D_H]
        f_g = sig[:, D_H:2 * D_H]
        g_g = tnh[:, 2 * D_H:3 * D_H]
        o_g = sig[:, 3 * D_H:4 * D_H]
        c_new = f_g * c_prev + i_g * g_g
        h_new = o_g * jnp.tanh(c_new)
        return h_new, c_new

    def step(xp, wh0, wup, bup, t):
        r0 = t * bp                          # bp is a multiple of 8 -> aligned sublane slice
        # layer 0: hoisted x-projection slab + ONE recurrent dot (gate-packed)
        pre0 = xp[r0:r0 + bp] + jnp.dot(h[0], wh0, preferred_element_type=f32)
        h[0], c[0] = packed_cell(pre0, c[0])
        # upper layers: ONE fused dot over [h[l-1], h[l]] (input + recurrent paths combined)
        for l in range(1, NUM_LAYERS):
            hcat = jnp.concatenate([h[l - 1], h[l]], axis=1)      # [bp, 2*d_h]
            pre = jnp.dot(hcat, wup[l - 1], preferred_element_type=f32) + bup[l - 1]
            h[l], c[l] = packed_cell(pre, c[l])

    # ---- encoder: 2-layer LSTM, zero initial state ----
    for t in range(n_seq):
        step(enc_xp, enc_wh0, enc_wup, enc_bup, t)

    # ---- decoder: 2-layer LSTM initialized with encoder final (h, c) ----
    dec_tops = []
    for t in range(n_t):
        step(dec_xp, dec_wh0, dec_wup, dec_bup, t)
        dec_tops.append(h[NUM_LAYERS - 1])   # keep live; no VMEM scratch round trip

    # ---- fused output projection: logits = h_top @ (W_o^T E_target^T) + b_o E_target^T ----
    # One matmul + one lane-dense (128-lane padded) store for all timesteps.
    dec_top = jnp.concatenate(dec_tops, axis=0)                   # [n_t*bp, d_h]
    logits_ref[...] = (jnp.dot(dec_top, wcomb_ref[...], preferred_element_type=f32)
                       + bcomb_ref[...])

    # ---- final decoder hidden state: single stacked stores ----
    h_out_ref[...] = jnp.stack(h, axis=0)
    c_out_ref[...] = jnp.stack(c, axis=0)


def make_params(key):
    ks = jax.random.split(key, 10)

    def u(k, shape, scale=0.25):
        return jax.random.uniform(k, shape, jnp.float32, -scale, scale)

    return {
        'E_input': u(ks[0], (V_INPUT, D_INPUT)),
        'E_target': u(ks[1], (V_TARGET, D_TARGET)),
        # stacked per-layer LSTM weights (PyTorch layout); bias = bias_ih + bias_hh combined
        'enc_wih': u(ks[2], (NUM_LAYERS, 4 * D_H, D_INPUT)),
        'enc_whh': u(ks[3], (NUM_LAYERS, 4 * D_H, D_H)),
        'enc_b':   u(ks[4], (NUM_LAYERS, 1, 4 * D_H)),
        'dec_wih': u(ks[5], (NUM_LAYERS, 4 * D_H, D_TARGET)),
        'dec_whh': u(ks[6], (NUM_LAYERS, 4 * D_H, D_H)),
        'dec_b':   u(ks[7], (NUM_LAYERS, 1, 4 * D_H)),
        'W_o':     u(ks[8], (D_TARGET, D_H)),
        'b_o':     u(ks[9], (1, D_TARGET)),
    }


def _pack_lstm(wih, whh, b):
    """PyTorch [L,4*d_h,d_in]/[L,4*d_h,d_h]/[L,1,4*d_h] -> gate-packed kernel layout.

    Returns:
      wx0: [d_in, 4*d_h]   layer-0 input weights (gate order i,f,g,o along lanes)
      wh0: [d_h, 4*d_h]    layer-0 recurrent weights
      b0:  [1, 4*d_h]      layer-0 combined bias
      wup: [L-1, 2*d_h, 4*d_h]  upper layers: rows 0:d_h multiply h[l-1], rows d_h:2*d_h h[l]
      bup: [L-1, 1, 4*d_h]
    """
    wx0 = wih[0].T
    wh0 = whh[0].T
    b0 = b[0]
    wup = jnp.stack([jnp.concatenate([wih[l].T, whh[l].T], axis=0)
                     for l in range(1, NUM_LAYERS)], axis=0)
    bup = jnp.stack([b[l] for l in range(1, NUM_LAYERS)], axis=0)
    return wx0, wh0, b0, wup, bup


@jax.jit
def seq2seq_forward(params, X, decoder_input):
    """Equivalent of Seq2SeqLSTM.forward(X, decoder_input, decoder_hidden_state=None)."""
    batch, n_seq = X.shape
    n_t = decoder_input.shape[1]
    bp = ((batch + 7) // 8) * 8              # pad batch to f32 sublane multiple (8)
    v_pad = ((V_TARGET + 127) // 128) * 128  # lane-dense logits store

    # glue: embedding lookups, time-major, batch padding, flatten time into sublanes
    def prep(emb_table, ids, n):
        e = jnp.take(emb_table, ids, axis=0).transpose(1, 0, 2)        # [N, B, d]
        e = jnp.pad(e, ((0, 0), (0, bp - batch), (0, 0)))              # [N, Bp, d]
        return e.reshape(n * bp, e.shape[-1])                          # [N*Bp, d]

    x_flat = prep(params['E_input'], X, n_seq)
    y_flat = prep(params['E_target'], decoder_input, n_t)

    enc_wx0, enc_wh0, enc_b0, enc_wup, enc_bup = _pack_lstm(
        params['enc_wih'], params['enc_whh'], params['enc_b'])
    dec_wx0, dec_wh0, dec_b0, dec_wup, dec_bup = _pack_lstm(
        params['dec_wih'], params['dec_whh'], params['dec_b'])

    # fused output projection (W_o then tied E_target), padded to 128 lanes
    w_comb = params['W_o'].T @ params['E_target'].T      # [d_h, V_target]
    b_comb = params['b_o'] @ params['E_target'].T        # [1, V_target]
    w_comb = jnp.pad(w_comb, ((0, 0), (0, v_pad - V_TARGET)))
    b_comb = jnp.pad(b_comb, ((0, 0), (0, v_pad - V_TARGET)))

    kernel = functools.partial(seq2seq_kernel, n_seq, n_t, bp)
    vmem = pl.BlockSpec(memory_space=pltpu.MemorySpace.VMEM)
    out_shapes = (
        jax.ShapeDtypeStruct((n_t * bp, v_pad), jnp.float32),
        jax.ShapeDtypeStruct((NUM_LAYERS, bp, D_H), jnp.float32),
        jax.ShapeDtypeStruct((NUM_LAYERS, bp, D_H), jnp.float32),
    )
    logits_flat, h_n, c_n = pl.pallas_call(
        kernel,
        out_shape=out_shapes,
        in_specs=[vmem] * 14,
        out_specs=(vmem, vmem, vmem),
    )(x_flat, y_flat,
      enc_wx0, enc_wh0, enc_b0, enc_wup, enc_bup,
      dec_wx0, dec_wh0, dec_b0, dec_wup, dec_bup,
      w_comb, b_comb)

    logits = (logits_flat[:, :V_TARGET]
              .reshape(n_t, bp, V_TARGET)[:, :batch]
              .transpose(1, 0, 2))                                     # [B, N_t, V_target]
    return logits, (h_n[:, :batch], c_n[:, :batch])


def seq2seq_reference(params, X, decoder_input):
    """Pure-JAX reference with identical semantics (PyTorch-style weights), for validation."""
    batch = X.shape[0]
    x_emb = jnp.take(params['E_input'], X, axis=0).transpose(1, 0, 2)
    y_emb = jnp.take(params['E_target'], decoder_input, axis=0).transpose(1, 0, 2)

    h = [jnp.zeros((batch, D_H), jnp.float32) for _ in range(NUM_LAYERS)]
    c = [jnp.zeros((batch, D_H), jnp.float32) for _ in range(NUM_LAYERS)]

    def cell(x, h_, c_, wih, whh, b):
        g = x @ wih.T + h_ @ whh.T + b
        i = jax.nn.sigmoid(g[:, :D_H]); f = jax.nn.sigmoid(g[:, D_H:2 * D_H])
        gg = jnp.tanh(g[:, 2 * D_H:3 * D_H]); o = jax.nn.sigmoid(g[:, 3 * D_H:])
        c_n = f * c_ + i * gg
        return o * jnp.tanh(c_n), c_n

    for t in range(x_emb.shape[0]):
        inp = x_emb[t]
        for l in range(NUM_LAYERS):
            h[l], c[l] = cell(inp, h[l], c[l], params['enc_wih'][l],
                              params['enc_whh'][l], params['enc_b'][l])
            inp = h[l]
    outs = []
    for t in range(y_emb.shape[0]):
        inp = y_emb[t]
        for l in range(NUM_LAYERS):
            h[l], c[l] = cell(inp, h[l], c[l], params['dec_wih'][l],
                              params['dec_whh'][l], params['dec_b'][l])
            inp = h[l]
        outs.append(h[-1])
    dec_out = jnp.stack(outs, 0).transpose(1, 0, 2)            # [B, N_t, d_h]
    pred = dec_out @ params['W_o'].T + params['b_o'][0]
    logits = pred @ params['E_target'].T
    return logits, (jnp.stack(h, 0), jnp.stack(c, 0))


if __name__ == "__main__":
    key = jax.random.PRNGKey(0)
    pkey, xkey, ykey = jax.random.split(key, 3)
    params = make_params(pkey)

    X = jax.random.randint(xkey, (B, N_SEQ), 0, V_INPUT, dtype=jnp.int32)
    decoder_input = jax.random.randint(ykey, (B, N_T), 0, V_TARGET, dtype=jnp.int32)

    logits, (h_n, c_n) = seq2seq_forward(params, X, decoder_input)
    jax.block_until_ready((logits, h_n, c_n))

    ref_logits, (ref_h, ref_c) = seq2seq_reference(params, X, decoder_input)
    assert logits.shape == (B, N_T, V_TARGET)
    assert h_n.shape == (NUM_LAYERS, B, D_H) and c_n.shape == (NUM_LAYERS, B, D_H)
    assert jnp.allclose(logits, ref_logits, atol=1e-4, rtol=1e-4)
    assert jnp.allclose(h_n, ref_h, atol=1e-4, rtol=1e-4)
    assert jnp.allclose(c_n, ref_c, atol=1e-4, rtol=1e-4)

    print("KERNEL_OK")
</pallas_src>

<mosaic_0001>
module attributes {stable_mosaic.version = 11 : i64} {
  func.func @seq2seq_kernel(%arg0: memref<64x16xf32, #tpu.memory_space<vmem>>, %arg1: memref<48x16xf32, #tpu.memory_space<vmem>>, %arg2: memref<16x64xf32, #tpu.memory_space<vmem>>, %arg3: memref<16x64xf32, #tpu.memory_space<vmem>>, %arg4: memref<1x64xf32, #tpu.memory_space<vmem>>, %arg5: memref<1x32x64xf32, #tpu.memory_space<vmem>>, %arg6: memref<1x1x64xf32, #tpu.memory_space<vmem>>, %arg7: memref<16x64xf32, #tpu.memory_space<vmem>>, %arg8: memref<16x64xf32, #tpu.memory_space<vmem>>, %arg9: memref<1x64xf32, #tpu.memory_space<vmem>>, %arg10: memref<1x32x64xf32, #tpu.memory_space<vmem>>, %arg11: memref<1x1x64xf32, #tpu.memory_space<vmem>>, %arg12: memref<16x128xf32, #tpu.memory_space<vmem>>, %arg13: memref<1x128xf32, #tpu.memory_space<vmem>>, %arg14: memref<48x128xf32, #tpu.memory_space<vmem>>, %arg15: memref<2x8x16xf32, #tpu.memory_space<vmem>>, %arg16: memref<2x8x16xf32, #tpu.memory_space<vmem>>) attributes {dimension_semantics = [], scalar_prefetch = 0 : i64, scratch_operands = 0 : i64, tpu.core_type = #tpu.core_type<tc>} {
    %c0 = arith.constant 0 : index
    %c0_0 = arith.constant 0 : index
    %0 = vector.load %arg0[%c0, %c0_0] : memref<64x16xf32, #tpu.memory_space<vmem>>, vector<64x16xf32>
    %c0_1 = arith.constant 0 : index
    %c0_2 = arith.constant 0 : index
    %1 = vector.load %arg1[%c0_1, %c0_2] : memref<48x16xf32, #tpu.memory_space<vmem>>, vector<48x16xf32>
    %c0_3 = arith.constant 0 : index
    %c0_4 = arith.constant 0 : index
    %2 = vector.load %arg3[%c0_3, %c0_4] : memref<16x64xf32, #tpu.memory_space<vmem>>, vector<16x64xf32>
    %c0_5 = arith.constant 0 : index
    %c0_6 = arith.constant 0 : index
    %3 = vector.load %arg8[%c0_5, %c0_6] : memref<16x64xf32, #tpu.memory_space<vmem>>, vector<16x64xf32>
    %c0_7 = arith.constant 0 : index
    %c0_8 = arith.constant 0 : index
    %c0_9 = arith.constant 0 : index
    %4 = vector.load %arg5[%c0_7, %c0_8, %c0_9] : memref<1x32x64xf32, #tpu.memory_space<vmem>>, vector<1x32x64xf32>
    %5 = vector.shape_cast %4 : vector<1x32x64xf32> to vector<32x64xf32>
    %c0_10 = arith.constant 0 : index
    %c0_11 = arith.constant 0 : index
    %c0_12 = arith.constant 0 : index
    %6 = vector.load %arg6[%c0_10, %c0_11, %c0_12] : memref<1x1x64xf32, #tpu.memory_space<vmem>>, vector<1x1x64xf32>
    %7 = vector.shape_cast %6 : vector<1x1x64xf32> to vector<1x64xf32>
    %c0_13 = arith.constant 0 : index
    %c0_14 = arith.constant 0 : index
    %c0_15 = arith.constant 0 : index
    %8 = vector.load %arg10[%c0_13, %c0_14, %c0_15] : memref<1x32x64xf32, #tpu.memory_space<vmem>>, vector<1x32x64xf32>
    %9 = vector.shape_cast %8 : vector<1x32x64xf32> to vector<32x64xf32>
    %c0_16 = arith.constant 0 : index
    %c0_17 = arith.constant 0 : index
    %c0_18 = arith.constant 0 : index
    %10 = vector.load %arg11[%c0_16, %c0_17, %c0_18] : memref<1x1x64xf32, #tpu.memory_space<vmem>>, vector<1x1x64xf32>
    %11 = vector.shape_cast %10 : vector<1x1x64xf32> to vector<1x64xf32>
    %c0_19 = arith.constant 0 : index
    %c0_20 = arith.constant 0 : index
    %12 = vector.load %arg2[%c0_19, %c0_20] : memref<16x64xf32, #tpu.memory_space<vmem>>, vector<16x64xf32>
    %cst = arith.constant dense<0.000000e+00> : vector<64x64xf32>
    %13 = tpu.matmul %0, %12, %cst {dimension_numbers = #tpu.dot_dimension_numbers<[1], [0], [0], [1], [0, 0, 1, 1], [], []>} : vector<64x16xf32>, vector<16x64xf32>, vector<64x64xf32> -> vector<64x64xf32>
    %c0_21 = arith.constant 0 : index
    %c0_22 = arith.constant 0 : index
    %14 = vector.load %arg4[%c0_21, %c0_22] : memref<1x64xf32, #tpu.memory_space<vmem>>, vector<1x64xf32>
    %15 = vector.broadcast %14 : vector<1x64xf32> to vector<64x64xf32>
    %16 = arith.addf %13, %15 : vector<64x64xf32>
    %c0_23 = arith.constant 0 : index
    %c0_24 = arith.constant 0 : index
    %17 = vector.load %arg7[%c0_23, %c0_24] : memref<16x64xf32, #tpu.memory_space<vmem>>, vector<16x64xf32>
    %cst_25 = arith.constant dense<0.000000e+00> : vector<48x64xf32>
    %18 = tpu.matmul %1, %17, %cst_25 {dimension_numbers = #tpu.dot_dimension_numbers<[1], [0], [0], [1], [0, 0, 1, 1], [], []>} : vector<48x16xf32>, vector<16x64xf32>, vector<48x64xf32> -> vector<48x64xf32>
    %c0_26 = arith.constant 0 : index
    %c0_27 = arith.constant 0 : index
    %19 = vector.load %arg9[%c0_26, %c0_27] : memref<1x64xf32, #tpu.memory_space<vmem>>, vector<1x64xf32>
    %20 = vector.broadcast %19 : vector<1x64xf32> to vector<48x64xf32>
    %21 = arith.addf %18, %20 : vector<48x64xf32>
    %cst_28 = arith.constant 0.000000e+00 : f32
    %22 = vector.broadcast %cst_28 : f32 to vector<8x16xf32>
    %cst_29 = arith.constant 0.000000e+00 : f32
    %23 = vector.broadcast %cst_29 : f32 to vector<8x16xf32>
    %cst_30 = arith.constant 0.000000e+00 : f32
    %24 = vector.broadcast %cst_30 : f32 to vector<8x16xf32>
    %cst_31 = arith.constant 0.000000e+00 : f32
    %25 = vector.broadcast %cst_31 : f32 to vector<8x16xf32>
    %26 = vector.extract_strided_slice %16 {offsets = [0, 0], sizes = [8, 64], strides = [1, 1]} : vector<64x64xf32> to vector<8x64xf32>
    %cst_32 = arith.constant dense<0.000000e+00> : vector<8x64xf32>
    %27 = tpu.matmul %22, %2, %cst_32 {dimension_numbers = #tpu.dot_dimension_numbers<[1], [0], [0], [1], [0, 0, 1, 1], [], []>} : vector<8x16xf32>, vector<16x64xf32>, vector<8x64xf32> -> vector<8x64xf32>
    %28 = arith.addf %26, %27 : vector<8x64xf32>
    %29 = arith.negf %28 : vector<8x64xf32>
    %30 = math.exp %29 : vector<8x64xf32>
    %cst_33 = arith.constant 1.000000e+00 : f32
    %31 = vector.broadcast %cst_33 : f32 to vector<8x64xf32>
    %32 = arith.addf %31, %30 : vector<8x64xf32>
    %33 = arith.divf %31, %32 : vector<8x64xf32>
    %34 = math.tanh %28 : vector<8x64xf32>
    %35 = vector.extract_strided_slice %33 {offsets = [0, 0], sizes = [8, 16], strides = [1, 1]} : vector<8x64xf32> to vector<8x16xf32>
    %36 = vector.extract_strided_slice %33 {offsets = [0, 16], sizes = [8, 16], strides = [1, 1]} : vector<8x64xf32> to vector<8x16xf32>
    %37 = vector.extract_strided_slice %34 {offsets = [0, 32], sizes = [8, 16], strides = [1, 1]} : vector<8x64xf32> to vector<8x16xf32>
    %38 = vector.extract_strided_slice %33 {offsets = [0, 48], sizes = [8, 16], strides = [1, 1]} : vector<8x64xf32> to vector<8x16xf32>
    %39 = arith.mulf %36, %24 : vector<8x16xf32>
    %40 = arith.mulf %35, %37 : vector<8x16xf32>
    %41 = arith.addf %39, %40 : vector<8x16xf32>
    %42 = math.tanh %41 : vector<8x16xf32>
    %43 = arith.mulf %38, %42 : vector<8x16xf32>
    %44 = tpu.concatenate %43, %23 in 1 : vector<8x16xf32>, vector<8x16xf32> -> vector<8x32xf32>
    %cst_34 = arith.constant dense<0.000000e+00> : vector<8x64xf32>
    %45 = tpu.matmul %44, %5, %cst_34 {dimension_numbers = #tpu.dot_dimension_numbers<[1], [0], [0], [1], [0, 0, 1, 1], [], []>} : vector<8x32xf32>, vector<32x64xf32>, vector<8x64xf32> -> vector<8x64xf32>
    %46 = vector.broadcast %7 : vector<1x64xf32> to vector<8x64xf32>
    %47 = arith.addf %45, %46 : vector<8x64xf32>
    %48 = arith.negf %47 : vector<8x64xf32>
    %49 = math.exp %48 : vector<8x64xf32>
    %cst_35 = arith.constant 1.000000e+00 : f32
    %50 = vector.broadcast %cst_35 : f32 to vector<8x64xf32>
    %51 = arith.addf %50, %49 : vector<8x64xf32>
    %52 = arith.divf %50, %51 : vector<8x64xf32>
    %53 = math.tanh %47 : vector<8x64xf32>
    %54 = vector.extract_strided_slice %52 {offsets = [0, 0], sizes = [8, 16], strides = [1, 1]} : vector<8x64xf32> to vector<8x16xf32>
    %55 = vector.extract_strided_slice %52 {offsets = [0, 16], sizes = [8, 16], strides = [1, 1]} : vector<8x64xf32> to vector<8x16xf32>
    %56 = vector.extract_strided_slice %53 {offsets = [0, 32], sizes = [8, 16], strides = [1, 1]} : vector<8x64xf32> to vector<8x16xf32>
    %57 = vector.extract_strided_slice %52 {offsets = [0, 48], sizes = [8, 16], strides = [1, 1]} : vector<8x64xf32> to vector<8x16xf32>
    %58 = arith.mulf %55, %25 : vector<8x16xf32>
    %59 = arith.mulf %54, %56 : vector<8x16xf32>
    %60 = arith.addf %58, %59 : vector<8x16xf32>
    %61 = math.tanh %60 : vector<8x16xf32>
    %62 = arith.mulf %57, %61 : vector<8x16xf32>
    %63 = vector.extract_strided_slice %16 {offsets = [8, 0], sizes = [8, 64], strides = [1, 1]} : vector<64x64xf32> to vector<8x64xf32>
    %cst_36 = arith.constant dense<0.000000e+00> : vector<8x64xf32>
    %64 = tpu.matmul %43, %2, %cst_36 {dimension_numbers = #tpu.dot_dimension_numbers<[1], [0], [0], [1], [0, 0, 1, 1], [], []>} : vector<8x16xf32>, vector<16x64xf32>, vector<8x64xf32> -> vector<8x64xf32>
    %65 = arith.addf %63, %64 : vector<8x64xf32>
    %66 = arith.negf %65 : vector<8x64xf32>
    %67 = math.exp %66 : vector<8x64xf32>
    %cst_37 = arith.constant 1.000000e+00 : f32
    %68 = vector.broadcast %cst_37 : f32 to vector<8x64xf32>
    %69 = arith.addf %68, %67 : vector<8x64xf32>
    %70 = arith.divf %68, %69 : vector<8x64xf32>
    %71 = math.tanh %65 : vector<8x64xf32>
    %72 = vector.extract_strided_slice %70 {offsets = [0, 0], sizes = [8, 16], strides = [1, 1]} : vector<8x64xf32> to vector<8x16xf32>
    %73 = vector.extract_strided_slice %70 {offsets = [0, 16], sizes = [8, 16], strides = [1, 1]} : vector<8x64xf32> to vector<8x16xf32>
    %74 = vector.extract_strided_slice %71 {offsets = [0, 32], sizes = [8, 16], strides = [1, 1]} : vector<8x64xf32> to vector<8x16xf32>
    %75 = vector.extract_strided_slice %70 {offsets = [0, 48], sizes = [8, 16], strides = [1, 1]} : vector<8x64xf32> to vector<8x16xf32>
    %76 = arith.mulf %73, %41 : vector<8x16xf32>
    %77 = arith.mulf %72, %74 : vector<8x16xf32>
    %78 = arith.addf %76, %77 : vector<8x16xf32>
    %79 = math.tanh %78 : vector<8x16xf32>
    %80 = arith.mulf %75, %79 : vector<8x16xf32>
    %81 = tpu.concatenate %80, %62 in 1 : vector<8x16xf32>, vector<8x16xf32> -> vector<8x32xf32>
    %cst_38 = arith.constant dense<0.000000e+00> : vector<8x64xf32>
    %82 = tpu.matmul %81, %5, %cst_38 {dimension_numbers = #tpu.dot_dimension_numbers<[1], [0], [0], [1], [0, 0, 1, 1], [], []>} : vector<8x32xf32>, vector<32x64xf32>, vector<8x64xf32> -> vector<8x64xf32>
    %83 = vector.broadcast %7 : vector<1x64xf32> to vector<8x64xf32>
    %84 = arith.addf %82, %83 : vector<8x64xf32>
    %85 = arith.negf %84 : vector<8x64xf32>
    %86 = math.exp %85 : vector<8x64xf32>
    %cst_39 = arith.constant 1.000000e+00 : f32
    %87 = vector.broadcast %cst_39 : f32 to vector<8x64xf32>
    %88 = arith.addf %87, %86 : vector<8x64xf32>
    %89 = arith.divf %87, %88 : vector<8x64xf32>
    %90 = math.tanh %84 : vector<8x64xf32>
    %91 = vector.extract_strided_slice %89 {offsets = [0, 0], sizes = [8, 16], strides = [1, 1]} : vector<8x64xf32> to vector<8x16xf32>
    %92 = vector.extract_strided_slice %89 {offsets = [0, 16], sizes = [8, 16], strides = [1, 1]} : vector<8x64xf32> to vector<8x16xf32>
    %93 = vector.extract_strided_slice %90 {offsets = [0, 32], sizes = [8, 16], strides = [1, 1]} : vector<8x64xf32> to vector<8x16xf32>
    %94 = vector.extract_strided_slice %89 {offsets = [0, 48], sizes = [8, 16], strides = [1, 1]} : vector<8x64xf32> to vector<8x16xf32>
    %95 = arith.mulf %92, %60 : vector<8x16xf32>
    %96 = arith.mulf %91, %93 : vector<8x16xf32>
    %97 = arith.addf %95, %96 : vector<8x16xf32>
    %98 = math.tanh %97 : vector<8x16xf32>
    %99 = arith.mulf %94, %98 : vector<8x16xf32>
    %100 = vector.extract_strided_slice %16 {offsets = [16, 0], sizes = [8, 64], strides = [1, 1]} : vector<64x64xf32> to vector<8x64xf32>
    %cst_40 = arith.constant dense<0.000000e+00> : vector<8x64xf32>
    %101 = tpu.matmul %80, %2, %cst_40 {dimension_numbers = #tpu.dot_dimension_numbers<[1], [0], [0], [1], [0, 0, 1, 1], [], []>} : vector<8x16xf32>, vector<16x64xf32>, vector<8x64xf32> -> vector<8x64xf32>
    %102 = arith.addf %100, %101 : vector<8x64xf32>
    %103 = arith.negf %102 : vector<8x64xf32>
    %104 = math.exp %103 : vector<8x64xf32>
    %cst_41 = arith.constant 1.000000e+00 : f32
    %105 = vector.broadcast %cst_41 : f32 to vector<8x64xf32>
    %106 = arith.addf %105, %104 : vector<8x64xf32>
    %107 = arith.divf %105, %106 : vector<8x64xf32>
    %108 = math.tanh %102 : vector<8x64xf32>
    %109 = vector.extract_strided_slice %107 {offsets = [0, 0], sizes = [8, 16], strides = [1, 1]} : vector<8x64xf32> to vector<8x16xf32>
    %110 = vector.extract_strided_slice %107 {offsets = [0, 16], sizes = [8, 16], strides = [1, 1]} : vector<8x64xf32> to vector<8x16xf32>
    %111 = vector.extract_strided_slice %108 {offsets = [0, 32], sizes = [8, 16], strides = [1, 1]} : vector<8x64xf32> to vector<8x16xf32>
    %112 = vector.extract_strided_slice %107 {offsets = [0, 48], sizes = [8, 16], strides = [1, 1]} : vector<8x64xf32> to vector<8x16xf32>
    %113 = arith.mulf %110, %78 : vector<8x16xf32>
    %114 = arith.mulf %109, %111 : vector<8x16xf32>
    %115 = arith.addf %113, %114 : vector<8x16xf32>
    %116 = math.tanh %115 : vector<8x16xf32>
    %117 = arith.mulf %112, %116 : vector<8x16xf32>
    %118 = tpu.concatenate %117, %99 in 1 : vector<8x16xf32>, vector<8x16xf32> -> vector<8x32xf32>
    %cst_42 = arith.constant dense<0.000000e+00> : vector<8x64xf32>
    %119 = tpu.matmul %118, %5, %cst_42 {dimension_numbers = #tpu.dot_dimension_numbers<[1], [0], [0], [1], [0, 0, 1, 1], [], []>} : vector<8x32xf32>, vector<32x64xf32>, vector<8x64xf32> -> vector<8x64xf32>
    %120 = vector.broadcast %7 : vector<1x64xf32> to vector<8x64xf32>
    %121 = arith.addf %119, %120 : vector<8x64xf32>
    %122 = arith.negf %121 : vector<8x64xf32>
    %123 = math.exp %122 : vector<8x64xf32>
    %cst_43 = arith.constant 1.000000e+00 : f32
    %124 = vector.broadcast %cst_43 : f32 to vector<8x64xf32>
    %125 = arith.addf %124, %123 : vector<8x64xf32>
    %126 = arith.divf %124, %125 : vector<8x64xf32>
    %127 = math.tanh %121 : vector<8x64xf32>
    %128 = vector.extract_strided_slice %126 {offsets = [0, 0], sizes = [8, 16], strides = [1, 1]} : vector<8x64xf32> to vector<8x16xf32>
    %129 = vector.extract_strided_slice %126 {offsets = [0, 16], sizes = [8, 16], strides = [1, 1]} : vector<8x64xf32> to vector<8x16xf32>
    %130 = vector.extract_strided_slice %127 {offsets = [0, 32], sizes = [8, 16], strides = [1, 1]} : vector<8x64xf32> to vector<8x16xf32>
    %131 = vector.extract_strided_slice %126 {offsets = [0, 48], sizes = [8, 16], strides = [1, 1]} : vector<8x64xf32> to vector<8x16xf32>
    %132 = arith.mulf %129, %97 : vector<8x16xf32>
    %133 = arith.mulf %128, %130 : vector<8x16xf32>
    %134 = arith.addf %132, %133 : vector<8x16xf32>
    %135 = math.tanh %134 : vector<8x16xf32>
    %136 = arith.mulf %131, %135 : vector<8x16xf32>
    %137 = vector.extract_strided_slice %16 {offsets = [24, 0], sizes = [8, 64], strides = [1, 1]} : vector<64x64xf32> to vector<8x64xf32>
    %cst_44 = arith.constant dense<0.000000e+00> : vector<8x64xf32>
    %138 = tpu.matmul %117, %2, %cst_44 {dimension_numbers = #tpu.dot_dimension_numbers<[1], [0], [0], [1], [0, 0, 1, 1], [], []>} : vector<8x16xf32>, vector<16x64xf32>, vector<8x64xf32> -> vector<8x64xf32>
    %139 = arith.addf %137, %138 : vector<8x64xf32>
    %140 = arith.negf %139 : vector<8x64xf32>
    %141 = math.exp %140 : vector<8x64xf32>
    %cst_45 = arith.constant 1.000000e+00 : f32
    %142 = vector.broadcast %cst_45 : f32 to vector<8x64xf32>
    %143 = arith.addf %142, %141 : vector<8x64xf32>
    %144 = arith.divf %142, %143 : vector<8x64xf32>
    %145 = math.tanh %139 : vector<8x64xf32>
    %146 = vector.extract_strided_slice %144 {offsets = [0, 0], sizes = [8, 16], strides = [1, 1]} : vector<8x64xf32> to vector<8x16xf32>
    %147 = vector.extract_strided_slice %144 {offsets = [0, 16], sizes = [8, 16], strides = [1, 1]} : vector<8x64xf32> to vector<8x16xf32>
    %148 = vector.extract_strided_slice %145 {offsets = [0, 32], sizes = [8, 16], strides = [1, 1]} : vector<8x64xf32> to vector<8x16xf32>
    %149 = vector.extract_strided_slice %144 {offsets = [0, 48], sizes = [8, 16], strides = [1, 1]} : vector<8x64xf32> to vector<8x16xf32>
    %150 = arith.mulf %147, %115 : vector<8x16xf32>
    %151 = arith.mulf %146, %148 : vector<8x16xf32>
    %152 = arith.addf %150, %151 : vector<8x16xf32>
    %153 = math.tanh %152 : vector<8x16xf32>
    %154 = arith.mulf %149, %153 : vector<8x16xf32>
    %155 = tpu.concatenate %154, %136 in 1 : vector<8x16xf32>, vector<8x16xf32> -> vector<8x32xf32>
    %cst_46 = arith.constant dense<0.000000e+00> : vector<8x64xf32>
    %156 = tpu.matmul %155, %5, %cst_46 {dimension_numbers = #tpu.dot_dimension_numbers<[1], [0], [0], [1], [0, 0, 1, 1], [], []>} : vector<8x32xf32>, vector<32x64xf32>, vector<8x64xf32> -> vector<8x64xf32>
    %157 = vector.broadcast %7 : vector<1x64xf32> to vector<8x64xf32>
    %158 = arith.addf %156, %157 : vector<8x64xf32>
    %159 = arith.negf %158 : vector<8x64xf32>
    %160 = math.exp %159 : vector<8x64xf32>
    %cst_47 = arith.constant 1.000000e+00 : f32
    %161 = vector.broadcast %cst_47 : f32 to vector<8x64xf32>
    %162 = arith.addf %161, %160 : vector<8x64xf32>
    %163 = arith.divf %161, %162 : vector<8x64xf32>
    %164 = math.tanh %158 : vector<8x64xf32>
    %165 = vector.extract_strided_slice %163 {offsets = [0, 0], sizes = [8, 16], strides = [1, 1]} : vector<8x64xf32> to vector<8x16xf32>
    %166 = vector.extract_strided_slice %163 {offsets = [0, 16], sizes = [8, 16], strides = [1, 1]} : vector<8x64xf32> to vector<8x16xf32>
    %167 = vector.extract_strided_slice %164 {offsets = [0, 32], sizes = [8, 16], strides = [1, 1]} : vector<8x64xf32> to vector<8x16xf32>
    %168 = vector.extract_strided_slice %163 {offsets = [0, 48], sizes = [8, 16], strides = [1, 1]} : vector<8x64xf32> to vector<8x16xf32>
    %169 = arith.mulf %166, %134 : vector<8x16xf32>
    %170 = arith.mulf %165, %167 : vector<8x16xf32>
    %171 = arith.addf %169, %170 : vector<8x16xf32>
    %172 = math.tanh %171 : vector<8x16xf32>
    %173 = arith.mulf %168, %172 : vector<8x16xf32>
    %174 = vector.extract_strided_slice %16 {offsets = [32, 0], sizes = [8, 64], strides = [1, 1]} : vector<64x64xf32> to vector<8x64xf32>
    %cst_48 = arith.constant dense<0.000000e+00> : vector<8x64xf32>
    %175 = tpu.matmul %154, %2, %cst_48 {dimension_numbers = #tpu.dot_dimension_numbers<[1], [0], [0], [1], [0, 0, 1, 1], [], []>} : vector<8x16xf32>, vector<16x64xf32>, vector<8x64xf32> -> vector<8x64xf32>
    %176 = arith.addf %174, %175 : vector<8x64xf32>
    %177 = arith.negf %176 : vector<8x64xf32>
    %178 = math.exp %177 : vector<8x64xf32>
    %cst_49 = arith.constant 1.000000e+00 : f32
    %179 = vector.broadcast %cst_49 : f32 to vector<8x64xf32>
    %180 = arith.addf %179, %178 : vector<8x64xf32>
    %181 = arith.divf %179, %180 : vector<8x64xf32>
    %182 = math.tanh %176 : vector<8x64xf32>
    %183 = vector.extract_strided_slice %181 {offsets = [0, 0], sizes = [8, 16], strides = [1, 1]} : vector<8x64xf32> to vector<8x16xf32>
    %184 = vector.extract_strided_slice %181 {offsets = [0, 16], sizes = [8, 16], strides = [1, 1]} : vector<8x64xf32> to vector<8x16xf32>
    %185 = vector.extract_strided_slice %182 {offsets = [0, 32], sizes = [8, 16], strides = [1, 1]} : vector<8x64xf32> to vector<8x16xf32>
    %186 = vector.extract_strided_slice %181 {offsets = [0, 48], sizes = [8, 16], strides = [1, 1]} : vector<8x64xf32> to vector<8x16xf32>
    %187 = arith.mulf %184, %152 : vector<8x16xf32>
    %188 = arith.mulf %183, %185 : vector<8x16xf32>
    %189 = arith.addf %187, %188 : vector<8x16xf32>
    %190 = math.tanh %189 : vector<8x16xf32>
    %191 = arith.mulf %186, %190 : vector<8x16xf32>
    %192 = tpu.concatenate %191, %173 in 1 : vector<8x16xf32>, vector<8x16xf32> -> vector<8x32xf32>
    %cst_50 = arith.constant dense<0.000000e+00> : vector<8x64xf32>
    %193 = tpu.matmul %192, %5, %cst_50 {dimension_numbers = #tpu.dot_dimension_numbers<[1], [0], [0], [1], [0, 0, 1, 1], [], []>} : vector<8x32xf32>, vector<32x64xf32>, vector<8x64xf32> -> vector<8x64xf32>
    %194 = vector.broadcast %7 : vector<1x64xf32> to vector<8x64xf32>
    %195 = arith.addf %193, %194 : vector<8x64xf32>
    %196 = arith.negf %195 : vector<8x64xf32>
    %197 = math.exp %196 : vector<8x64xf32>
    %cst_51 = arith.constant 1.000000e+00 : f32
    %198 = vector.broadcast %cst_51 : f32 to vector<8x64xf32>
    %199 = arith.addf %198, %197 : vector<8x64xf32>
    %200 = arith.divf %198, %199 : vector<8x64xf32>
    %201 = math.tanh %195 : vector<8x64xf32>
    %202 = vector.extract_strided_slice %200 {offsets = [0, 0], sizes = [8, 16], strides = [1, 1]} : vector<8x64xf32> to vector<8x16xf32>
    %203 = vector.extract_strided_slice %200 {offsets = [0, 16], sizes = [8, 16], strides = [1, 1]} : vector<8x64xf32> to vector<8x16xf32>
    %204 = vector.extract_strided_slice %201 {offsets = [0, 32], sizes = [8, 16], strides = [1, 1]} : vector<8x64xf32> to vector<8x16xf32>
    %205 = vector.extract_strided_slice %200 {offsets = [0, 48], sizes = [8, 16], strides = [1, 1]} : vector<8x64xf32> to vector<8x16xf32>
    %206 = arith.mulf %203, %171 : vector<8x16xf32>
    %207 = arith.mulf %202, %204 : vector<8x16xf32>
    %208 = arith.addf %206, %207 : vector<8x16xf32>
    %209 = math.tanh %208 : vector<8x16xf32>
    %210 = arith.mulf %205, %209 : vector<8x16xf32>
    %211 = vector.extract_strided_slice %16 {offsets = [40, 0], sizes = [8, 64], strides = [1, 1]} : vector<64x64xf32> to vector<8x64xf32>
    %cst_52 = arith.constant dense<0.000000e+00> : vector<8x64xf32>
    %212 = tpu.matmul %191, %2, %cst_52 {dimension_numbers = #tpu.dot_dimension_numbers<[1], [0], [0], [1], [0, 0, 1, 1], [], []>} : vector<8x16xf32>, vector<16x64xf32>, vector<8x64xf32> -> vector<8x64xf32>
    %213 = arith.addf %211, %212 : vector<8x64xf32>
    %214 = arith.negf %213 : vector<8x64xf32>
    %215 = math.exp %214 : vector<8x64xf32>
    %cst_53 = arith.constant 1.000000e+00 : f32
    %216 = vector.broadcast %cst_53 : f32 to vector<8x64xf32>
    %217 = arith.addf %216, %215 : vector<8x64xf32>
    %218 = arith.divf %216, %217 : vector<8x64xf32>
    %219 = math.tanh %213 : vector<8x64xf32>
    %220 = vector.extract_strided_slice %218 {offsets = [0, 0], sizes = [8, 16], strides = [1, 1]} : vector<8x64xf32> to vector<8x16xf32>
    %221 = vector.extract_strided_slice %218 {offsets = [0, 16], sizes = [8, 16], strides = [1, 1]} : vector<8x64xf32> to vector<8x16xf32>
    %222 = vector.extract_strided_slice %219 {offsets = [0, 32], sizes = [8, 16], strides = [1, 1]} : vector<8x64xf32> to vector<8x16xf32>
    %223 = vector.extract_strided_slice %218 {offsets = [0, 48], sizes = [8, 16], strides = [1, 1]} : vector<8x64xf32> to vector<8x16xf32>
    %224 = arith.mulf %221, %189 : vector<8x16xf32>
    %225 = arith.mulf %220, %222 : vector<8x16xf32>
    %226 = arith.addf %224, %225 : vector<8x16xf32>
    %227 = math.tanh %226 : vector<8x16xf32>
    %228 = arith.mulf %223, %227 : vector<8x16xf32>
    %229 = tpu.concatenate %228, %210 in 1 : vector<8x16xf32>, vector<8x16xf32> -> vector<8x32xf32>
    %cst_54 = arith.constant dense<0.000000e+00> : vector<8x64xf32>
    %230 = tpu.matmul %229, %5, %cst_54 {dimension_numbers = #tpu.dot_dimension_numbers<[1], [0], [0], [1], [0, 0, 1, 1], [], []>} : vector<8x32xf32>, vector<32x64xf32>, vector<8x64xf32> -> vector<8x64xf32>
    %231 = vector.broadcast %7 : vector<1x64xf32> to vector<8x64xf32>
    %232 = arith.addf %230, %231 : vector<8x64xf32>
    %233 = arith.negf %232 : vector<8x64xf32>
    %234 = math.exp %233 : vector<8x64xf32>
    %cst_55 = arith.constant 1.000000e+00 : f32
    %235 = vector.broadcast %cst_55 : f32 to vector<8x64xf32>
    %236 = arith.addf %235, %234 : vector<8x64xf32>
    %237 = arith.divf %235, %236 : vector<8x64xf32>
    %238 = math.tanh %232 : vector<8x64xf32>
    %239 = vector.extract_strided_slice %237 {offsets = [0, 0], sizes = [8, 16], strides = [1, 1]} : vector<8x64xf32> to vector<8x16xf32>
    %240 = vector.extract_strided_slice %237 {offsets = [0, 16], sizes = [8, 16], strides = [1, 1]} : vector<8x64xf32> to vector<8x16xf32>
    %241 = vector.extract_strided_slice %238 {offsets = [0, 32], sizes = [8, 16], strides = [1, 1]} : vector<8x64xf32> to vector<8x16xf32>
    %242 = vector.extract_strided_slice %237 {offsets = [0, 48], sizes = [8, 16], strides = [1, 1]} : vector<8x64xf32> to vector<8x16xf32>
    %243 = arith.mulf %240, %208 : vector<8x16xf32>
    %244 = arith.mulf %239, %241 : vector<8x16xf32>
    %245 = arith.addf %243, %244 : vector<8x16xf32>
    %246 = math.tanh %245 : vector<8x16xf32>
    %247 = arith.mulf %242, %246 : vector<8x16xf32>
    %248 = vector.extract_strided_slice %16 {offsets = [48, 0], sizes = [8, 64], strides = [1, 1]} : vector<64x64xf32> to vector<8x64xf32>
    %cst_56 = arith.constant dense<0.000000e+00> : vector<8x64xf32>
    %249 = tpu.matmul %228, %2, %cst_56 {dimension_numbers = #tpu.dot_dimension_numbers<[1], [0], [0], [1], [0, 0, 1, 1], [], []>} : vector<8x16xf32>, vector<16x64xf32>, vector<8x64xf32> -> vector<8x64xf32>
    %250 = arith.addf %248, %249 : vector<8x64xf32>
    %251 = arith.negf %250 : vector<8x64xf32>
    %252 = math.exp %251 : vector<8x64xf32>
    %cst_57 = arith.constant 1.000000e+00 : f32
    %253 = vector.broadcast %cst_57 : f32 to vector<8x64xf32>
    %254 = arith.addf %253, %252 : vector<8x64xf32>
    %255 = arith.divf %253, %254 : vector<8x64xf32>
    %256 = math.tanh %250 : vector<8x64xf32>
    %257 = vector.extract_strided_slice %255 {offsets = [0, 0], sizes = [8, 16], strides = [1, 1]} : vector<8x64xf32> to vector<8x16xf32>
    %258 = vector.extract_strided_slice %255 {offsets = [0, 16], sizes = [8, 16], strides = [1, 1]} : vector<8x64xf32> to vector<8x16xf32>
    %259 = vector.extract_strided_slice %256 {offsets = [0, 32], sizes = [8, 16], strides = [1, 1]} : vector<8x64xf32> to vector<8x16xf32>
    %260 = vector.extract_strided_slice %255 {offsets = [0, 48], sizes = [8, 16], strides = [1, 1]} : vector<8x64xf32> to vector<8x16xf32>
    %261 = arith.mulf %258, %226 : vector<8x16xf32>
    %262 = arith.mulf %257, %259 : vector<8x16xf32>
    %263 = arith.addf %261, %262 : vector<8x16xf32>
    %264 = math.tanh %263 : vector<8x16xf32>
    %265 = arith.mulf %260, %264 : vector<8x16xf32>
    %266 = tpu.concatenate %265, %247 in 1 : vector<8x16xf32>, vector<8x16xf32> -> vector<8x32xf32>
    %cst_58 = arith.constant dense<0.000000e+00> : vector<8x64xf32>
    %267 = tpu.matmul %266, %5, %cst_58 {dimension_numbers = #tpu.dot_dimension_numbers<[1], [0], [0], [1], [0, 0, 1, 1], [], []>} : vector<8x32xf32>, vector<32x64xf32>, vector<8x64xf32> -> vector<8x64xf32>
    %268 = vector.broadcast %7 : vector<1x64xf32> to vector<8x64xf32>
    %269 = arith.addf %267, %268 : vector<8x64xf32>
    %270 = arith.negf %269 : vector<8x64xf32>
    %271 = math.exp %270 : vector<8x64xf32>
    %cst_59 = arith.constant 1.000000e+00 : f32
    %272 = vector.broadcast %cst_59 : f32 to vector<8x64xf32>
    %273 = arith.addf %272, %271 : vector<8x64xf32>
    %274 = arith.divf %272, %273 : vector<8x64xf32>
    %275 = math.tanh %269 : vector<8x64xf32>
    %276 = vector.extract_strided_slice %274 {offsets = [0, 0], sizes = [8, 16], strides = [1, 1]} : vector<8x64xf32> to vector<8x16xf32>
    %277 = vector.extract_strided_slice %274 {offsets = [0, 16], sizes = [8, 16], strides = [1, 1]} : vector<8x64xf32> to vector<8x16xf32>
    %278 = vector.extract_strided_slice %275 {offsets = [0, 32], sizes = [8, 16], strides = [1, 1]} : vector<8x64xf32> to vector<8x16xf32>
    %279 = vector.extract_strided_slice %274 {offsets = [0, 48], sizes = [8, 16], strides = [1, 1]} : vector<8x64xf32> to vector<8x16xf32>
    %280 = arith.mulf %277, %245 : vector<8x16xf32>
    %281 = arith.mulf %276, %278 : vector<8x16xf32>
    %282 = arith.addf %280, %281 : vector<8x16xf32>
    %283 = math.tanh %282 : vector<8x16xf32>
    %284 = arith.mulf %279, %283 : vector<8x16xf32>
    %285 = vector.extract_strided_slice %16 {offsets = [56, 0], sizes = [8, 64], strides = [1, 1]} : vector<64x64xf32> to vector<8x64xf32>
    %cst_60 = arith.constant dense<0.000000e+00> : vector<8x64xf32>
    %286 = tpu.matmul %265, %2, %cst_60 {dimension_numbers = #tpu.dot_dimension_numbers<[1], [0], [0], [1], [0, 0, 1, 1], [], []>} : vector<8x16xf32>, vector<16x64xf32>, vector<8x64xf32> -> vector<8x64xf32>
    %287 = arith.addf %285, %286 : vector<8x64xf32>
    %288 = arith.negf %287 : vector<8x64xf32>
    %289 = math.exp %288 : vector<8x64xf32>
    %cst_61 = arith.constant 1.000000e+00 : f32
    %290 = vector.broadcast %cst_61 : f32 to vector<8x64xf32>
    %291 = arith.addf %290, %289 : vector<8x64xf32>
    %292 = arith.divf %290, %291 : vector<8x64xf32>
    %293 = math.tanh %287 : vector<8x64xf32>
    %294 = vector.extract_strided_slice %292 {offsets = [0, 0], sizes = [8, 16], strides = [1, 1]} : vector<8x64xf32> to vector<8x16xf32>
    %295 = vector.extract_strided_slice %292 {offsets = [0, 16], sizes = [8, 16], strides = [1, 1]} : vector<8x64xf32> to vector<8x16xf32>
    %296 = vector.extract_strided_slice %293 {offsets = [0, 32], sizes = [8, 16], strides = [1, 1]} : vector<8x64xf32> to vector<8x16xf32>
    %297 = vector.extract_strided_slice %292 {offsets = [0, 48], sizes = [8, 16], strides = [1, 1]} : vector<8x64xf32> to vector<8x16xf32>
    %298 = arith.mulf %295, %263 : vector<8x16xf32>
    %299 = arith.mulf %294, %296 : vector<8x16xf32>
    %300 = arith.addf %298, %299 : vector<8x16xf32>
    %301 = math.tanh %300 : vector<8x16xf32>
    %302 = arith.mulf %297, %301 : vector<8x16xf32>
    %303 = tpu.concatenate %302, %284 in 1 : vector<8x16xf32>, vector<8x16xf32> -> vector<8x32xf32>
    %cst_62 = arith.constant dense<0.000000e+00> : vector<8x64xf32>
    %304 = tpu.matmul %303, %5, %cst_62 {dimension_numbers = #tpu.dot_dimension_numbers<[1], [0], [0], [1], [0, 0, 1, 1], [], []>} : vector<8x32xf32>, vector<32x64xf32>, vector<8x64xf32> -> vector<8x64xf32>
    %305 = vector.broadcast %7 : vector<1x64xf32> to vector<8x64xf32>
    %306 = arith.addf %304, %305 : vector<8x64xf32>
    %307 = arith.negf %306 : vector<8x64xf32>
    %308 = math.exp %307 : vector<8x64xf32>
    %cst_63 = arith.constant 1.000000e+00 : f32
    %309 = vector.broadcast %cst_63 : f32 to vector<8x64xf32>
    %310 = arith.addf %309, %308 : vector<8x64xf32>
    %311 = arith.divf %309, %310 : vector<8x64xf32>
    %312 = math.tanh %306 : vector<8x64xf32>
    %313 = vector.extract_strided_slice %311 {offsets = [0, 0], sizes = [8, 16], strides = [1, 1]} : vector<8x64xf32> to vector<8x16xf32>
    %314 = vector.extract_strided_slice %311 {offsets = [0, 16], sizes = [8, 16], strides = [1, 1]} : vector<8x64xf32> to vector<8x16xf32>
    %315 = vector.extract_strided_slice %312 {offsets = [0, 32], sizes = [8, 16], strides = [1, 1]} : vector<8x64xf32> to vector<8x16xf32>
    %316 = vector.extract_strided_slice %311 {offsets = [0, 48], sizes = [8, 16], strides = [1, 1]} : vector<8x64xf32> to vector<8x16xf32>
    %317 = arith.mulf %314, %282 : vector<8x16xf32>
    %318 = arith.mulf %313, %315 : vector<8x16xf32>
    %319 = arith.addf %317, %318 : vector<8x16xf32>
    %320 = math.tanh %319 : vector<8x16xf32>
    %321 = arith.mulf %316, %320 : vector<8x16xf32>
    %322 = vector.extract_strided_slice %21 {offsets = [0, 0], sizes = [8, 64], strides = [1, 1]} : vector<48x64xf32> to vector<8x64xf32>
    %cst_64 = arith.constant dense<0.000000e+00> : vector<8x64xf32>
    %323 = tpu.matmul %302, %3, %cst_64 {dimension_numbers = #tpu.dot_dimension_numbers<[1], [0], [0], [1], [0, 0, 1, 1], [], []>} : vector<8x16xf32>, vector<16x64xf32>, vector<8x64xf32> -> vector<8x64xf32>
    %324 = arith.addf %322, %323 : vector<8x64xf32>
    %325 = arith.negf %324 : vector<8x64xf32>
    %326 = math.exp %325 : vector<8x64xf32>
    %cst_65 = arith.constant 1.000000e+00 : f32
    %327 = vector.broadcast %cst_65 : f32 to vector<8x64xf32>
    %328 = arith.addf %327, %326 : vector<8x64xf32>
    %329 = arith.divf %327, %328 : vector<8x64xf32>
    %330 = math.tanh %324 : vector<8x64xf32>
    %331 = vector.extract_strided_slice %329 {offsets = [0, 0], sizes = [8, 16], strides = [1, 1]} : vector<8x64xf32> to vector<8x16xf32>
    %332 = vector.extract_strided_slice %329 {offsets = [0, 16], sizes = [8, 16], strides = [1, 1]} : vector<8x64xf32> to vector<8x16xf32>
    %333 = vector.extract_strided_slice %330 {offsets = [0, 32], sizes = [8, 16], strides = [1, 1]} : vector<8x64xf32> to vector<8x16xf32>
    %334 = vector.extract_strided_slice %329 {offsets = [0, 48], sizes = [8, 16], strides = [1, 1]} : vector<8x64xf32> to vector<8x16xf32>
    %335 = arith.mulf %332, %300 : vector<8x16xf32>
    %336 = arith.mulf %331, %333 : vector<8x16xf32>
    %337 = arith.addf %335, %336 : vector<8x16xf32>
    %338 = math.tanh %337 : vector<8x16xf32>
    %339 = arith.mulf %334, %338 : vector<8x16xf32>
    %340 = tpu.concatenate %339, %321 in 1 : vector<8x16xf32>, vector<8x16xf32> -> vector<8x32xf32>
    %cst_66 = arith.constant dense<0.000000e+00> : vector<8x64xf32>
    %341 = tpu.matmul %340, %9, %cst_66 {dimension_numbers = #tpu.dot_dimension_numbers<[1], [0], [0], [1], [0, 0, 1, 1], [], []>} : vector<8x32xf32>, vector<32x64xf32>, vector<8x64xf32> -> vector<8x64xf32>
    %342 = vector.broadcast %11 : vector<1x64xf32> to vector<8x64xf32>
    %343 = arith.addf %341, %342 : vector<8x64xf32>
    %344 = arith.negf %343 : vector<8x64xf32>
    %345 = math.exp %344 : vector<8x64xf32>
    %cst_67 = arith.constant 1.000000e+00 : f32
    %346 = vector.broadcast %cst_67 : f32 to vector<8x64xf32>
    %347 = arith.addf %346, %345 : vector<8x64xf32>
    %348 = arith.divf %346, %347 : vector<8x64xf32>
    %349 = math.tanh %343 : vector<8x64xf32>
    %350 = vector.extract_strided_slice %348 {offsets = [0, 0], sizes = [8, 16], strides = [1, 1]} : vector<8x64xf32> to vector<8x16xf32>
    %351 = vector.extract_strided_slice %348 {offsets = [0, 16], sizes = [8, 16], strides = [1, 1]} : vector<8x64xf32> to vector<8x16xf32>
    %352 = vector.extract_strided_slice %349 {offsets = [0, 32], sizes = [8, 16], strides = [1, 1]} : vector<8x64xf32> to vector<8x16xf32>
    %353 = vector.extract_strided_slice %348 {offsets = [0, 48], sizes = [8, 16], strides = [1, 1]} : vector<8x64xf32> to vector<8x16xf32>
    %354 = arith.mulf %351, %319 : vector<8x16xf32>
    %355 = arith.mulf %350, %352 : vector<8x16xf32>
    %356 = arith.addf %354, %355 : vector<8x16xf32>
    %357 = math.tanh %356 : vector<8x16xf32>
    %358 = arith.mulf %353, %357 : vector<8x16xf32>
    %359 = vector.extract_strided_slice %21 {offsets = [8, 0], sizes = [8, 64], strides = [1, 1]} : vector<48x64xf32> to vector<8x64xf32>
    %cst_68 = arith.constant dense<0.000000e+00> : vector<8x64xf32>
    %360 = tpu.matmul %339, %3, %cst_68 {dimension_numbers = #tpu.dot_dimension_numbers<[1], [0], [0], [1], [0, 0, 1, 1], [], []>} : vector<8x16xf32>, vector<16x64xf32>, vector<8x64xf32> -> vector<8x64xf32>
    %361 = arith.addf %359, %360 : vector<8x64xf32>
    %362 = arith.negf %361 : vector<8x64xf32>
    %363 = math.exp %362 : vector<8x64xf32>
    %cst_69 = arith.constant 1.000000e+00 : f32
    %364 = vector.broadcast %cst_69 : f32 to vector<8x64xf32>
    %365 = arith.addf %364, %363 : vector<8x64xf32>
    %366 = arith.divf %364, %365 : vector<8x64xf32>
    %367 = math.tanh %361 : vector<8x64xf32>
    %368 = vector.extract_strided_slice %366 {offsets = [0, 0], sizes = [8, 16], strides = [1, 1]} : vector<8x64xf32> to vector<8x16xf32>
    %369 = vector.extract_strided_slice %366 {offsets = [0, 16], sizes = [8, 16], strides = [1, 1]} : vector<8x64xf32> to vector<8x16xf32>
    %370 = vector.extract_strided_slice %367 {offsets = [0, 32], sizes = [8, 16], strides = [1, 1]} : vector<8x64xf32> to vector<8x16xf32>
    %371 = vector.extract_strided_slice %366 {offsets = [0, 48], sizes = [8, 16], strides = [1, 1]} : vector<8x64xf32> to vector<8x16xf32>
    %372 = arith.mulf %369, %337 : vector<8x16xf32>
    %373 = arith.mulf %368, %370 : vector<8x16xf32>
    %374 = arith.addf %372, %373 : vector<8x16xf32>
    %375 = math.tanh %374 : vector<8x16xf32>
    %376 = arith.mulf %371, %375 : vector<8x16xf32>
    %377 = tpu.concatenate %376, %358 in 1 : vector<8x16xf32>, vector<8x16xf32> -> vector<8x32xf32>
    %cst_70 = arith.constant dense<0.000000e+00> : vector<8x64xf32>
    %378 = tpu.matmul %377, %9, %cst_70 {dimension_numbers = #tpu.dot_dimension_numbers<[1], [0], [0], [1], [0, 0, 1, 1], [], []>} : vector<8x32xf32>, vector<32x64xf32>, vector<8x64xf32> -> vector<8x64xf32>
    %379 = vector.broadcast %11 : vector<1x64xf32> to vector<8x64xf32>
    %380 = arith.addf %378, %379 : vector<8x64xf32>
    %381 = arith.negf %380 : vector<8x64xf32>
    %382 = math.exp %381 : vector<8x64xf32>
    %cst_71 = arith.constant 1.000000e+00 : f32
    %383 = vector.broadcast %cst_71 : f32 to vector<8x64xf32>
    %384 = arith.addf %383, %382 : vector<8x64xf32>
    %385 = arith.divf %383, %384 : vector<8x64xf32>
    %386 = math.tanh %380 : vector<8x64xf32>
    %387 = vector.extract_strided_slice %385 {offsets = [0, 0], sizes = [8, 16], strides = [1, 1]} : vector<8x64xf32> to vector<8x16xf32>
    %388 = vector.extract_strided_slice %385 {offsets = [0, 16], sizes = [8, 16], strides = [1, 1]} : vector<8x64xf32> to vector<8x16xf32>
    %389 = vector.extract_strided_slice %386 {offsets = [0, 32], sizes = [8, 16], strides = [1, 1]} : vector<8x64xf32> to vector<8x16xf32>
    %390 = vector.extract_strided_slice %385 {offsets = [0, 48], sizes = [8, 16], strides = [1, 1]} : vector<8x64xf32> to vector<8x16xf32>
    %391 = arith.mulf %388, %356 : vector<8x16xf32>
    %392 = arith.mulf %387, %389 : vector<8x16xf32>
    %393 = arith.addf %391, %392 : vector<8x16xf32>
    %394 = math.tanh %393 : vector<8x16xf32>
    %395 = arith.mulf %390, %394 : vector<8x16xf32>
    %396 = vector.extract_strided_slice %21 {offsets = [16, 0], sizes = [8, 64], strides = [1, 1]} : vector<48x64xf32> to vector<8x64xf32>
    %cst_72 = arith.constant dense<0.000000e+00> : vector<8x64xf32>
    %397 = tpu.matmul %376, %3, %cst_72 {dimension_numbers = #tpu.dot_dimension_numbers<[1], [0], [0], [1], [0, 0, 1, 1], [], []>} : vector<8x16xf32>, vector<16x64xf32>, vector<8x64xf32> -> vector<8x64xf32>
    %398 = arith.addf %396, %397 : vector<8x64xf32>
    %399 = arith.negf %398 : vector<8x64xf32>
    %400 = math.exp %399 : vector<8x64xf32>
    %cst_73 = arith.constant 1.000000e+00 : f32
    %401 = vector.broadcast %cst_73 : f32 to vector<8x64xf32>
    %402 = arith.addf %401, %400 : vector<8x64xf32>
    %403 = arith.divf %401, %402 : vector<8x64xf32>
    %404 = math.tanh %398 : vector<8x64xf32>
    %405 = vector.extract_strided_slice %403 {offsets = [0, 0], sizes = [8, 16], strides = [1, 1]} : vector<8x64xf32> to vector<8x16xf32>
    %406 = vector.extract_strided_slice %403 {offsets = [0, 16], sizes = [8, 16], strides = [1, 1]} : vector<8x64xf32> to vector<8x16xf32>
    %407 = vector.extract_strided_slice %404 {offsets = [0, 32], sizes = [8, 16], strides = [1, 1]} : vector<8x64xf32> to vector<8x16xf32>
    %408 = vector.extract_strided_slice %403 {offsets = [0, 48], sizes = [8, 16], strides = [1, 1]} : vector<8x64xf32> to vector<8x16xf32>
    %409 = arith.mulf %406, %374 : vector<8x16xf32>
    %410 = arith.mulf %405, %407 : vector<8x16xf32>
    %411 = arith.addf %409, %410 : vector<8x16xf32>
    %412 = math.tanh %411 : vector<8x16xf32>
    %413 = arith.mulf %408, %412 : vector<8x16xf32>
    %414 = tpu.concatenate %413, %395 in 1 : vector<8x16xf32>, vector<8x16xf32> -> vector<8x32xf32>
    %cst_74 = arith.constant dense<0.000000e+00> : vector<8x64xf32>
    %415 = tpu.matmul %414, %9, %cst_74 {dimension_numbers = #tpu.dot_dimension_numbers<[1], [0], [0], [1], [0, 0, 1, 1], [], []>} : vector<8x32xf32>, vector<32x64xf32>, vector<8x64xf32> -> vector<8x64xf32>
    %416 = vector.broadcast %11 : vector<1x64xf32> to vector<8x64xf32>
    %417 = arith.addf %415, %416 : vector<8x64xf32>
    %418 = arith.negf %417 : vector<8x64xf32>
    %419 = math.exp %418 : vector<8x64xf32>
    %cst_75 = arith.constant 1.000000e+00 : f32
    %420 = vector.broadcast %cst_75 : f32 to vector<8x64xf32>
    %421 = arith.addf %420, %419 : vector<8x64xf32>
    %422 = arith.divf %420, %421 : vector<8x64xf32>
    %423 = math.tanh %417 : vector<8x64xf32>
    %424 = vector.extract_strided_slice %422 {offsets = [0, 0], sizes = [8, 16], strides = [1, 1]} : vector<8x64xf32> to vector<8x16xf32>
    %425 = vector.extract_strided_slice %422 {offsets = [0, 16], sizes = [8, 16], strides = [1, 1]} : vector<8x64xf32> to vector<8x16xf32>
    %426 = vector.extract_strided_slice %423 {offsets = [0, 32], sizes = [8, 16], strides = [1, 1]} : vector<8x64xf32> to vector<8x16xf32>
    %427 = vector.extract_strided_slice %422 {offsets = [0, 48], sizes = [8, 16], strides = [1, 1]} : vector<8x64xf32> to vector<8x16xf32>
    %428 = arith.mulf %425, %393 : vector<8x16xf32>
    %429 = arith.mulf %424, %426 : vector<8x16xf32>
    %430 = arith.addf %428, %429 : vector<8x16xf32>
    %431 = math.tanh %430 : vector<8x16xf32>
    %432 = arith.mulf %427, %431 : vector<8x16xf32>
    %433 = vector.extract_strided_slice %21 {offsets = [24, 0], sizes = [8, 64], strides = [1, 1]} : vector<48x64xf32> to vector<8x64xf32>
    %cst_76 = arith.constant dense<0.000000e+00> : vector<8x64xf32>
    %434 = tpu.matmul %413, %3, %cst_76 {dimension_numbers = #tpu.dot_dimension_numbers<[1], [0], [0], [1], [0, 0, 1, 1], [], []>} : vector<8x16xf32>, vector<16x64xf32>, vector<8x64xf32> -> vector<8x64xf32>
    %435 = arith.addf %433, %434 : vector<8x64xf32>
    %436 = arith.negf %435 : vector<8x64xf32>
    %437 = math.exp %436 : vector<8x64xf32>
    %cst_77 = arith.constant 1.000000e+00 : f32
    %438 = vector.broadcast %cst_77 : f32 to vector<8x64xf32>
    %439 = arith.addf %438, %437 : vector<8x64xf32>
    %440 = arith.divf %438, %439 : vector<8x64xf32>
    %441 = math.tanh %435 : vector<8x64xf32>
    %442 = vector.extract_strided_slice %440 {offsets = [0, 0], sizes = [8, 16], strides = [1, 1]} : vector<8x64xf32> to vector<8x16xf32>
    %443 = vector.extract_strided_slice %440 {offsets = [0, 16], sizes = [8, 16], strides = [1, 1]} : vector<8x64xf32> to vector<8x16xf32>
    %444 = vector.extract_strided_slice %441 {offsets = [0, 32], sizes = [8, 16], strides = [1, 1]} : vector<8x64xf32> to vector<8x16xf32>
    %445 = vector.extract_strided_slice %440 {offsets = [0, 48], sizes = [8, 16], strides = [1, 1]} : vector<8x64xf32> to vector<8x16xf32>
    %446 = arith.mulf %443, %411 : vector<8x16xf32>
    %447 = arith.mulf %442, %444 : vector<8x16xf32>
    %448 = arith.addf %446, %447 : vector<8x16xf32>
    %449 = math.tanh %448 : vector<8x16xf32>
    %450 = arith.mulf %445, %449 : vector<8x16xf32>
    %451 = tpu.concatenate %450, %432 in 1 : vector<8x16xf32>, vector<8x16xf32> -> vector<8x32xf32>
    %cst_78 = arith.constant dense<0.000000e+00> : vector<8x64xf32>
    %452 = tpu.matmul %451, %9, %cst_78 {dimension_numbers = #tpu.dot_dimension_numbers<[1], [0], [0], [1], [0, 0, 1, 1], [], []>} : vector<8x32xf32>, vector<32x64xf32>, vector<8x64xf32> -> vector<8x64xf32>
    %453 = vector.broadcast %11 : vector<1x64xf32> to vector<8x64xf32>
    %454 = arith.addf %452, %453 : vector<8x64xf32>
    %455 = arith.negf %454 : vector<8x64xf32>
    %456 = math.exp %455 : vector<8x64xf32>
    %cst_79 = arith.constant 1.000000e+00 : f32
    %457 = vector.broadcast %cst_79 : f32 to vector<8x64xf32>
    %458 = arith.addf %457, %456 : vector<8x64xf32>
    %459 = arith.divf %457, %458 : vector<8x64xf32>
    %460 = math.tanh %454 : vector<8x64xf32>
    %461 = vector.extract_strided_slice %459 {offsets = [0, 0], sizes = [8, 16], strides = [1, 1]} : vector<8x64xf32> to vector<8x16xf32>
    %462 = vector.extract_strided_slice %459 {offsets = [0, 16], sizes = [8, 16], strides = [1, 1]} : vector<8x64xf32> to vector<8x16xf32>
    %463 = vector.extract_strided_slice %460 {offsets = [0, 32], sizes = [8, 16], strides = [1, 1]} : vector<8x64xf32> to vector<8x16xf32>
    %464 = vector.extract_strided_slice %459 {offsets = [0, 48], sizes = [8, 16], strides = [1, 1]} : vector<8x64xf32> to vector<8x16xf32>
    %465 = arith.mulf %462, %430 : vector<8x16xf32>
    %466 = arith.mulf %461, %463 : vector<8x16xf32>
    %467 = arith.addf %465, %466 : vector<8x16xf32>
    %468 = math.tanh %467 : vector<8x16xf32>
    %469 = arith.mulf %464, %468 : vector<8x16xf32>
    %470 = vector.extract_strided_slice %21 {offsets = [32, 0], sizes = [8, 64], strides = [1, 1]} : vector<48x64xf32> to vector<8x64xf32>
    %cst_80 = arith.constant dense<0.000000e+00> : vector<8x64xf32>
    %471 = tpu.matmul %450, %3, %cst_80 {dimension_numbers = #tpu.dot_dimension_numbers<[1], [0], [0], [1], [0, 0, 1, 1], [], []>} : vector<8x16xf32>, vector<16x64xf32>, vector<8x64xf32> -> vector<8x64xf32>
    %472 = arith.addf %470, %471 : vector<8x64xf32>
    %473 = arith.negf %472 : vector<8x64xf32>
    %474 = math.exp %473 : vector<8x64xf32>
    %cst_81 = arith.constant 1.000000e+00 : f32
    %475 = vector.broadcast %cst_81 : f32 to vector<8x64xf32>
    %476 = arith.addf %475, %474 : vector<8x64xf32>
    %477 = arith.divf %475, %476 : vector<8x64xf32>
    %478 = math.tanh %472 : vector<8x64xf32>
    %479 = vector.extract_strided_slice %477 {offsets = [0, 0], sizes = [8, 16], strides = [1, 1]} : vector<8x64xf32> to vector<8x16xf32>
    %480 = vector.extract_strided_slice %477 {offsets = [0, 16], sizes = [8, 16], strides = [1, 1]} : vector<8x64xf32> to vector<8x16xf32>
    %481 = vector.extract_strided_slice %478 {offsets = [0, 32], sizes = [8, 16], strides = [1, 1]} : vector<8x64xf32> to vector<8x16xf32>
    %482 = vector.extract_strided_slice %477 {offsets = [0, 48], sizes = [8, 16], strides = [1, 1]} : vector<8x64xf32> to vector<8x16xf32>
    %483 = arith.mulf %480, %448 : vector<8x16xf32>
    %484 = arith.mulf %479, %481 : vector<8x16xf32>
    %485 = arith.addf %483, %484 : vector<8x16xf32>
    %486 = math.tanh %485 : vector<8x16xf32>
    %487 = arith.mulf %482, %486 : vector<8x16xf32>
    %488 = tpu.concatenate %487, %469 in 1 : vector<8x16xf32>, vector<8x16xf32> -> vector<8x32xf32>
    %cst_82 = arith.constant dense<0.000000e+00> : vector<8x64xf32>
    %489 = tpu.matmul %488, %9, %cst_82 {dimension_numbers = #tpu.dot_dimension_numbers<[1], [0], [0], [1], [0, 0, 1, 1], [], []>} : vector<8x32xf32>, vector<32x64xf32>, vector<8x64xf32> -> vector<8x64xf32>
    %490 = vector.broadcast %11 : vector<1x64xf32> to vector<8x64xf32>
    %491 = arith.addf %489, %490 : vector<8x64xf32>
    %492 = arith.negf %491 : vector<8x64xf32>
    %493 = math.exp %492 : vector<8x64xf32>
    %cst_83 = arith.constant 1.000000e+00 : f32
    %494 = vector.broadcast %cst_83 : f32 to vector<8x64xf32>
    %495 = arith.addf %494, %493 : vector<8x64xf32>
    %496 = arith.divf %494, %495 : vector<8x64xf32>
    %497 = math.tanh %491 : vector<8x64xf32>
    %498 = vector.extract_strided_slice %496 {offsets = [0, 0], sizes = [8, 16], strides = [1, 1]} : vector<8x64xf32> to vector<8x16xf32>
    %499 = vector.extract_strided_slice %496 {offsets = [0, 16], sizes = [8, 16], strides = [1, 1]} : vector<8x64xf32> to vector<8x16xf32>
    %500 = vector.extract_strided_slice %497 {offsets = [0, 32], sizes = [8, 16], strides = [1, 1]} : vector<8x64xf32> to vector<8x16xf32>
    %501 = vector.extract_strided_slice %496 {offsets = [0, 48], sizes = [8, 16], strides = [1, 1]} : vector<8x64xf32> to vector<8x16xf32>
    %502 = arith.mulf %499, %467 : vector<8x16xf32>
    %503 = arith.mulf %498, %500 : vector<8x16xf32>
    %504 = arith.addf %502, %503 : vector<8x16xf32>
    %505 = math.tanh %504 : vector<8x16xf32>
    %506 = arith.mulf %501, %505 : vector<8x16xf32>
    %507 = vector.extract_strided_slice %21 {offsets = [40, 0], sizes = [8, 64], strides = [1, 1]} : vector<48x64xf32> to vector<8x64xf32>
    %cst_84 = arith.constant dense<0.000000e+00> : vector<8x64xf32>
    %508 = tpu.matmul %487, %3, %cst_84 {dimension_numbers = #tpu.dot_dimension_numbers<[1], [0], [0], [1], [0, 0, 1, 1], [], []>} : vector<8x16xf32>, vector<16x64xf32>, vector<8x64xf32> -> vector<8x64xf32>
    %509 = arith.addf %507, %508 : vector<8x64xf32>
    %510 = arith.negf %509 : vector<8x64xf32>
    %511 = math.exp %510 : vector<8x64xf32>
    %cst_85 = arith.constant 1.000000e+00 : f32
    %512 = vector.broadcast %cst_85 : f32 to vector<8x64xf32>
    %513 = arith.addf %512, %511 : vector<8x64xf32>
    %514 = arith.divf %512, %513 : vector<8x64xf32>
    %515 = math.tanh %509 : vector<8x64xf32>
    %516 = vector.extract_strided_slice %514 {offsets = [0, 0], sizes = [8, 16], strides = [1, 1]} : vector<8x64xf32> to vector<8x16xf32>
    %517 = vector.extract_strided_slice %514 {offsets = [0, 16], sizes = [8, 16], strides = [1, 1]} : vector<8x64xf32> to vector<8x16xf32>
    %518 = vector.extract_strided_slice %515 {offsets = [0, 32], sizes = [8, 16], strides = [1, 1]} : vector<8x64xf32> to vector<8x16xf32>
    %519 = vector.extract_strided_slice %514 {offsets = [0, 48], sizes = [8, 16], strides = [1, 1]} : vector<8x64xf32> to vector<8x16xf32>
    %520 = arith.mulf %517, %485 : vector<8x16xf32>
    %521 = arith.mulf %516, %518 : vector<8x16xf32>
    %522 = arith.addf %520, %521 : vector<8x16xf32>
    %523 = math.tanh %522 : vector<8x16xf32>
    %524 = arith.mulf %519, %523 : vector<8x16xf32>
    %525 = tpu.concatenate %524, %506 in 1 : vector<8x16xf32>, vector<8x16xf32> -> vector<8x32xf32>
    %cst_86 = arith.constant dense<0.000000e+00> : vector<8x64xf32>
    %526 = tpu.matmul %525, %9, %cst_86 {dimension_numbers = #tpu.dot_dimension_numbers<[1], [0], [0], [1], [0, 0, 1, 1], [], []>} : vector<8x32xf32>, vector<32x64xf32>, vector<8x64xf32> -> vector<8x64xf32>
    %527 = vector.broadcast %11 : vector<1x64xf32> to vector<8x64xf32>
    %528 = arith.addf %526, %527 : vector<8x64xf32>
    %529 = arith.negf %528 : vector<8x64xf32>
    %530 = math.exp %529 : vector<8x64xf32>
    %cst_87 = arith.constant 1.000000e+00 : f32
    %531 = vector.broadcast %cst_87 : f32 to vector<8x64xf32>
    %532 = arith.addf %531, %530 : vector<8x64xf32>
    %533 = arith.divf %531, %532 : vector<8x64xf32>
    %534 = math.tanh %528 : vector<8x64xf32>
    %535 = vector.extract_strided_slice %533 {offsets = [0, 0], sizes = [8, 16], strides = [1, 1]} : vector<8x64xf32> to vector<8x16xf32>
    %536 = vector.extract_strided_slice %533 {offsets = [0, 16], sizes = [8, 16], strides = [1, 1]} : vector<8x64xf32> to vector<8x16xf32>
    %537 = vector.extract_strided_slice %534 {offsets = [0, 32], sizes = [8, 16], strides = [1, 1]} : vector<8x64xf32> to vector<8x16xf32>
    %538 = vector.extract_strided_slice %533 {offsets = [0, 48], sizes = [8, 16], strides = [1, 1]} : vector<8x64xf32> to vector<8x16xf32>
    %539 = arith.mulf %536, %504 : vector<8x16xf32>
    %540 = arith.mulf %535, %537 : vector<8x16xf32>
    %541 = arith.addf %539, %540 : vector<8x16xf32>
    %542 = math.tanh %541 : vector<8x16xf32>
    %543 = arith.mulf %538, %542 : vector<8x16xf32>
    %544 = tpu.concatenate %358, %395, %432, %469, %506, %543 in 0 : vector<8x16xf32>, vector<8x16xf32>, vector<8x16xf32>, vector<8x16xf32>, vector<8x16xf32>, vector<8x16xf32> -> vector<48x16xf32>
    %c0_88 = arith.constant 0 : index
    %c0_89 = arith.constant 0 : index
    %545 = vector.load %arg12[%c0_88, %c0_89] : memref<16x128xf32, #tpu.memory_space<vmem>>, vector<16x128xf32>
    %cst_90 = arith.constant dense<0.000000e+00> : vector<48x128xf32>
    %546 = tpu.matmul %544, %545, %cst_90 {dimension_numbers = #tpu.dot_dimension_numbers<[1], [0], [0], [1], [0, 0, 1, 1], [], []>} : vector<48x16xf32>, vector<16x128xf32>, vector<48x128xf32> -> vector<48x128xf32>
    %c0_91 = arith.constant 0 : index
    %c0_92 = arith.constant 0 : index
    %547 = vector.load %arg13[%c0_91, %c0_92] : memref<1x128xf32, #tpu.memory_space<vmem>>, vector<1x128xf32>
    %548 = vector.broadcast %547 : vector<1x128xf32> to vector<48x128xf32>
    %549 = arith.addf %546, %548 : vector<48x128xf32>
    %c0_93 = arith.constant 0 : index
    %c0_94 = arith.constant 0 : index
    %550 = vector.load %arg14[%c0_93, %c0_94] : memref<48x128xf32, #tpu.memory_space<vmem>>, vector<48x128xf32>
    tpu.vector_store %arg14[%c0_93, %c0_94], %549 {strides = array<i32>} : memref<48x128xf32, #tpu.memory_space<vmem>>, vector<48x128xf32>,
    %551 = vector.shape_cast %524 : vector<8x16xf32> to vector<1x8x16xf32>
    %552 = vector.shape_cast %543 : vector<8x16xf32> to vector<1x8x16xf32>
    %553 = tpu.concatenate %551, %552 in 0 : vector<1x8x16xf32>, vector<1x8x16xf32> -> vector<2x8x16xf32>
    %c0_95 = arith.constant 0 : index
    %c0_96 = arith.constant 0 : index
    %c0_97 = arith.constant 0 : index
    %554 = vector.load %arg15[%c0_95, %c0_96, %c0_97] : memref<2x8x16xf32, #tpu.memory_space<vmem>>, vector<2x8x16xf32>
    tpu.vector_store %arg15[%c0_95, %c0_96, %c0_97], %553 {strides = array<i32>} : memref<2x8x16xf32, #tpu.memory_space<vmem>>, vector<2x8x16xf32>,
    %555 = vector.shape_cast %522 : vector<8x16xf32> to vector<1x8x16xf32>
    %556 = vector.shape_cast %541 : vector<8x16xf32> to vector<1x8x16xf32>
    %557 = tpu.concatenate %555, %556 in 0 : vector<1x8x16xf32>, vector<1x8x16xf32> -> vector<2x8x16xf32>
    %c0_98 = arith.constant 0 : index
    %c0_99 = arith.constant 0 : index
    %c0_100 = arith.constant 0 : index
    %558 = vector.load %arg16[%c0_98, %c0_99, %c0_100] : memref<2x8x16xf32, #tpu.memory_space<vmem>>, vector<2x8x16xf32>
    tpu.vector_store %arg16[%c0_98, %c0_99, %c0_100], %557 {strides = array<i32>} : memref<2x8x16xf32, #tpu.memory_space<vmem>>, vector<2x8x16xf32>,
    return
  }
}

</mosaic_0001>

<llo_original>
// kernel: seq2seq_forward.1
$region0: #{seq2seq_forward.1}
  #allocation0 [shape = 'u32[]', space=smem, size = 0x4, offset = 0x4, fixed_abs, tag = 'smem constant byte address 0x4 - core index']
  #allocation1 [shape = 'u32[144,128]{1,0:T(1,128)}', space=vmem, size = 0x12000, scoped, tag = 'internal scratch']
  %s0 = inlined_call_operand.vmem [shape: f32[64,16], index: 0, kind: input, shape index: {}]
  %s1 = inlined_call_operand.vmem [shape: f32[48,16], index: 1, kind: input, shape index: {}]
  %s2 = inlined_call_operand.vmem [shape: f32[16,64], index: 2, kind: input, shape index: {}]
  %s3 = inlined_call_operand.vmem [shape: f32[16,64], index: 3, kind: input, shape index: {}]
  %s4 = inlined_call_operand.vmem [shape: f32[1,64], index: 4, kind: input, shape index: {}]
  %s5 = inlined_call_operand.vmem [shape: f32[1,32,64], index: 5, kind: input, shape index: {}]
  %s6 = inlined_call_operand.vmem [shape: f32[1,1,64], index: 6, kind: input, shape index: {}]
  %s7 = inlined_call_operand.vmem [shape: f32[16,64], index: 7, kind: input, shape index: {}]
  %s8 = inlined_call_operand.vmem [shape: f32[16,64], index: 8, kind: input, shape index: {}]
  %s9 = inlined_call_operand.vmem [shape: f32[1,64], index: 9, kind: input, shape index: {}]
  %s10 = inlined_call_operand.vmem [shape: f32[1,32,64], index: 10, kind: input, shape index: {}]
  %s11 = inlined_call_operand.vmem [shape: f32[1,1,64], index: 11, kind: input, shape index: {}]
  %s12 = inlined_call_operand.vmem [shape: f32[16,128], index: 12, kind: input, shape index: {}]
  %s13 = inlined_call_operand.vmem [shape: f32[1,128], index: 13, kind: input, shape index: {}]
  %s14 = inlined_call_operand.vmem [shape: f32[48,128], index: 14, kind: output, shape index: {0}]
  %s15 = inlined_call_operand.vmem [shape: f32[2,8,16], index: 15, kind: output, shape index: {1}]
  %s16 = inlined_call_operand.vmem [shape: f32[2,8,16], index: 16, kind: output, shape index: {2}]
  %17 = xla_tuple %s14, %s15, %s16
  %s18 = sld [smem:[#allocation0]]
  $region82: #{seq2seq_forward.1} parent=0
    _
  %s20 = ssub.s32 1, %s18
  %s21 = scalar_select 0, %s20, %s18
  // Predicated region
  $region2: #{seq2seq_forward.1} parent=0 // pred_check
    _
  $region3: #{seq2seq_forward.1} parent=0 // pred_check_branch
    %23 = sbr.rel (0) target = $region5
  $region4: #{seq2seq_forward.1} parent=0 // pred_region
    _
  $region5: #{seq2seq_forward.1} parent=0 // pred_fallthru
    _
  // Predicated region
  $region6: #{seq2seq_forward.1} parent=0 // pred_check
    _
  $region7: #{seq2seq_forward.1} parent=0 // pred_check_branch
    %25 = sbr.rel (0) target = $region9
  $region8: #{seq2seq_forward.1} parent=0 // pred_region
    _
  $region9: #{seq2seq_forward.1} parent=0 // pred_fallthru
    _
  // Predicated region
  $region10: #{seq2seq_forward.1} parent=0 // pred_check
    _
  $region11: #{seq2seq_forward.1} parent=0 // pred_check_branch
    %27 = sbr.rel (0) target = $region13
  $region12: #{seq2seq_forward.1} parent=0 // pred_region
    _
  $region13: #{seq2seq_forward.1} parent=0 // pred_fallthru
    _
  // Predicated region
  $region14: #{seq2seq_forward.1} parent=0 // pred_check
    _
  $region15: #{seq2seq_forward.1} parent=0 // pred_check_branch
    %29 = sbr.rel (0) target = $region17
  $region16: #{seq2seq_forward.1} parent=0 // pred_region
    _
  $region17: #{seq2seq_forward.1} parent=0 // pred_fallthru
    _
  // Predicated region
  $region18: #{seq2seq_forward.1} parent=0 // pred_check
    _
  $region19: #{seq2seq_forward.1} parent=0 // pred_check_branch
    %31 = sbr.rel (0) target = $region21
  $region20: #{seq2seq_forward.1} parent=0 // pred_region
    _
  $region21: #{seq2seq_forward.1} parent=0 // pred_fallthru
    _
  // Predicated region
  $region22: #{seq2seq_forward.1} parent=0 // pred_check
    _
  $region23: #{seq2seq_forward.1} parent=0 // pred_check_branch
    %33 = sbr.rel (0) target = $region25
  $region24: #{seq2seq_forward.1} parent=0 // pred_region
    _
  $region25: #{seq2seq_forward.1} parent=0 // pred_fallthru
    _
  // Predicated region
  $region26: #{seq2seq_forward.1} parent=0 // pred_check
    _
  $region27: #{seq2seq_forward.1} parent=0 // pred_check_branch
    %35 = sbr.rel (0) target = $region29
  $region28: #{seq2seq_forward.1} parent=0 // pred_region
    _
  $region29: #{seq2seq_forward.1} parent=0 // pred_fallthru
    _
  // Predicated region
  $region30: #{seq2seq_forward.1} parent=0 // pred_check
    _
  $region31: #{seq2seq_forward.1} parent=0 // pred_check_branch
    %37 = sbr.rel (0) target = $region33
  $region32: #{seq2seq_forward.1} parent=0 // pred_region
    _
  $region33: #{seq2seq_forward.1} parent=0 // pred_fallthru
    _
  // Predicated region
  $region34: #{seq2seq_forward.1} parent=0 // pred_check
    _
  $region35: #{seq2seq_forward.1} parent=0 // pred_check_branch
    %39 = sbr.rel (0) target = $region37
  $region36: #{seq2seq_forward.1} parent=0 // pred_region
    _
  $region37: #{seq2seq_forward.1} parent=0 // pred_fallthru
    _
  // Predicated region
  $region38: #{seq2seq_forward.1} parent=0 // pred_check
    _
  $region39: #{seq2seq_forward.1} parent=0 // pred_check_branch
    %41 = sbr.rel (0) target = $region41
  $region40: #{seq2seq_forward.1} parent=0 // pred_region
    _
  $region41: #{seq2seq_forward.1} parent=0 // pred_fallthru
    _
  // Predicated region
  $region42: #{seq2seq_forward.1} parent=0 // pred_check
    _
  $region43: #{seq2seq_forward.1} parent=0 // pred_check_branch
    %43 = sbr.rel (0) target = $region45
  $region44: #{seq2seq_forward.1} parent=0 // pred_region
    _
  $region45: #{seq2seq_forward.1} parent=0 // pred_fallthru
    _
  // Predicated region
  $region46: #{seq2seq_forward.1} parent=0 // pred_check
    _
  $region47: #{seq2seq_forward.1} parent=0 // pred_check_branch
    %45 = sbr.rel (0) target = $region49
  $region48: #{seq2seq_forward.1} parent=0 // pred_region
    _
  $region49: #{seq2seq_forward.1} parent=0 // pred_fallthru
    _
  // Predicated region
  $region50: #{seq2seq_forward.1} parent=0 // pred_check
    _
  $region51: #{seq2seq_forward.1} parent=0 // pred_check_branch
    %47 = sbr.rel (0) target = $region53
  $region52: #{seq2seq_forward.1} parent=0 // pred_region
    _
  $region53: #{seq2seq_forward.1} parent=0 // pred_fallthru
    _
  // Predicated region
  $region54: #{seq2seq_forward.1} parent=0 // pred_check
    _
  $region55: #{seq2seq_forward.1} parent=0 // pred_check_branch
    %49 = sbr.rel (0) target = $region57
  $region56: #{seq2seq_forward.1} parent=0 // pred_region
    _
  $region57: #{seq2seq_forward.1} parent=0 // pred_fallthru
    _
  %v50 = vld [vmem:[%s0] sm:$0xff]
  %v51 = vld [vmem:[%s0 + $0x8] sm:$0xff]
  %v52 = vld [vmem:[%s0 + $0x10] sm:$0xff]
  %v53 = vld [vmem:[%s0 + $0x18] sm:$0xff]
  %v54 = vld [vmem:[%s0 + $0x20] sm:$0xff]
  %v55 = vld [vmem:[%s0 + $0x28] sm:$0xff]
  %v56 = vld [vmem:[%s0 + $0x30] sm:$0xff]
  %v57 = vld [vmem:[%s0 + $0x38] sm:$0xff]
  %v58 = vld [vmem:[%s1] sm:$0xff]
  %v59 = vld [vmem:[%s1 + $0x8] sm:$0xff]
  %v60 = vld [vmem:[%s1 + $0x10] sm:$0xff]
  %v61 = vld [vmem:[%s1 + $0x18] sm:$0xff]
  %v62 = vld [vmem:[%s1 + $0x20] sm:$0xff]
  %v63 = vld [vmem:[%s1 + $0x28] sm:$0xff]
  %v64 = vld [vmem:[%s3] sm:$0xff]
  %v65 = vld [vmem:[%s3 + $0x8] sm:$0xff]
  %v66 = vld [vmem:[%s8] sm:$0xff]
  %v67 = vld [vmem:[%s8 + $0x8] sm:$0xff]
  %v68 = vld [vmem:[%s5] sm:$0xff]
  %v69 = vld [vmem:[%s5 + $0x8] sm:$0xff]
  %v70 = vld [vmem:[%s5 + $0x10] sm:$0xff]
  %v71 = vld [vmem:[%s5 + $0x18] sm:$0xff]
  %v72 = vld [vmem:[%s6] sm:$0x1]
  %v73 = vld [vmem:[%s10] sm:$0xff]
  %v74 = vld [vmem:[%s10 + $0x8] sm:$0xff]
  %v75 = vld [vmem:[%s10 + $0x10] sm:$0xff]
  %v76 = vld [vmem:[%s10 + $0x18] sm:$0xff]
  %v77 = vld [vmem:[%s11] sm:$0x1]
  %v78 = vld [vmem:[%s2] sm:$0xff]
  %v79 = vld [vmem:[%s2 + $0x8] sm:$0xff]
  %v80 = vld [vmem:[%s4] sm:$0x1]
  %v82 = vlaneseq
  %v83 = vshrl.u32 %v82, 7
  %v84 = vsub.s32 0, %v83
  %v85 = vrot.slane %v80, %v84
  %vm87 = vcmask 130048
  %v89 = vsel %vm87, %v50, 0
  %v92 = vsel %vm87, %v51, 0
  %v95 = vsel %vm87, %v52, 0
  %v98 = vsel %vm87, %v53, 0
  %v101 = vsel %vm87, %v54, 0
  %v104 = vsel %vm87, %v55, 0
  %v107 = vsel %vm87, %v56, 0
  %v110 = vsel %vm87, %v57, 0
  %112 = vmatprep.subr.mxu0 0.0
  %113 = vmatpush1.msra.mxu0 %v78
  %114 = vmatprep.subr.mxu0 0.0
  %115 = vmatpush1.msra.mxu0 %v79
  %116 = vmatprep.subr.mxu0 0.0
  %117 = vmatpush1.msra.mxu0 0.0
  %118 = vmatprep.subr.mxu0 0.0
  %119 = vmatpush1.msra.mxu0 0.0
  %120 = vmatprep.subr.mxu0 0.0
  %121 = vmatpush1.msra.mxu0 0.0
  %122 = vmatprep.subr.mxu0 0.0
  %123 = vmatpush1.msra.mxu0 0.0
  %124 = vmatprep.subr.mxu0 0.0
  %125 = vmatpush1.msra.mxu0 0.0
  %126 = vmatprep.subr.mxu0 0.0
  %127 = vmatpush1.msra.mxu0 0.0
  %128 = vmatprep.subr.mxu0 0.0
  %129 = vmatpush1.msra.mxu0 0.0
  %130 = vmatprep.subr.mxu0 0.0
  %131 = vmatpush1.msra.mxu0 0.0
  %132 = vmatprep.subr.mxu0 0.0
  %133 = vmatpush1.msra.mxu0 0.0
  %134 = vmatprep.subr.mxu0 0.0
  %135 = vmatpush1.msra.mxu0 0.0
  %136 = vmatprep.subr.mxu0 0.0
  %137 = vmatpush1.msra.mxu0 0.0
  %138 = vmatprep.subr.mxu0 0.0
  %139 = vmatpush1.msra.mxu0 0.0
  %140 = vmatprep.subr.mxu0 0.0
  %141 = vmatpush1.msra.mxu0 0.0
  %142 = vmatprep.subr.mxu0 0.0
  %143 = vmatpush1.msra.mxu0 0.0
  %144 = vmatprep.subr.mxu0 0.0
  %145 = vmatpush1.msra.mxu0 0.0
  %146 = vmatprep.subr.mxu0 0.0
  %147 = vmatpush1.msra.mxu0 0.0
  %148 = vmatprep.subr.mxu0 0.0
  %149 = vmatpush1.msra.mxu0 0.0
  %150 = vmatprep.subr.mxu0 0.0
  %151 = vmatpush1.msra.mxu0 0.0
  %152 = vmatprep.subr.mxu0 0.0
  %153 = vmatpush1.msra.mxu0 0.0
  %154 = vmatprep.subr.mxu0 0.0
  %155 = vmatpush1.msra.mxu0 0.0
  %156 = vmatprep.subr.mxu0 0.0
  %157 = vmatpush1.msra.mxu0 0.0
  %158 = vmatprep.subr.mxu0 0.0
  %159 = vmatpush1.msra.mxu0 0.0
  %160 = vmatprep.subr.mxu0 0.0
  %161 = vmatpush1.msra.mxu0 0.0
  %162 = vmatprep.subr.mxu0 0.0
  %163 = vmatpush1.msra.mxu0 0.0
  %164 = vmatprep.subr.mxu0 0.0
  %165 = vmatpush1.msra.mxu0 0.0
  %166 = vmatprep.subr.mxu0 0.0
  %167 = vmatpush1.msra.mxu0 0.0
  %168 = vmatprep.subr.mxu0 0.0
  %169 = vmatpush1.msra.mxu0 0.0
  %170 = vmatprep.subr.mxu0 0.0
  %171 = vmatpush1.msra.mxu0 0.0
  %172 = vmatprep.subr.mxu0 0.0
  %173 = vmatpush1.msra.mxu0 0.0
  %174 = vmatprep.subr.mxu0 0.0
  %175 = vmatpush1.msra.mxu0 0.0
  %176 = vmatprep.mubr.f32.mxu0 0.0
  %177 = vmatmul.mubr.f32.gmra.mrb[0].mxu0 %v89
  %v178 = vpop.f32.mrb[0].mxu0
  %v179 = vadd.f32 %v85, %v178
  %v180 = vpop.f32.mrb[0].mxu0
  %181 = vmatprep.mubr.f32.mxu0 0.0
  %182 = vmatmul.mubr.f32.gmra.mrb[0].mxu0 %v92
  %v183 = vpop.f32.mrb[0].mxu0
  %v184 = vadd.f32 %v85, %v183
  %v185 = vpop.f32.mrb[0].mxu0
  %186 = vmatprep.mubr.f32.mxu0 0.0
  %187 = vmatmul.mubr.f32.gmra.mrb[0].mxu0 %v95
  %v188 = vpop.f32.mrb[0].mxu0
  %v189 = vadd.f32 %v85, %v188
  %v190 = vpop.f32.mrb[0].mxu0
  %191 = vmatprep.mubr.f32.mxu0 0.0
  %192 = vmatmul.mubr.f32.gmra.mrb[0].mxu0 %v98
  %v193 = vpop.f32.mrb[0].mxu0
  %v194 = vadd.f32 %v85, %v193
  %v195 = vpop.f32.mrb[0].mxu0
  %196 = vmatprep.mubr.f32.mxu0 0.0
  %197 = vmatmul.mubr.f32.gmra.mrb[0].mxu0 %v101
  %v198 = vpop.f32.mrb[0].mxu0
  %v199 = vadd.f32 %v85, %v198
  %v200 = vpop.f32.mrb[0].mxu0
  %201 = vmatprep.mubr.f32.mxu0 0.0
  %202 = vmatmul.mubr.f32.gmra.mrb[0].mxu0 %v104
  %v203 = vpop.f32.mrb[0].mxu0
  %v204 = vadd.f32 %v85, %v203
  %v205 = vpop.f32.mrb[0].mxu0
  %206 = vmatprep.mubr.f32.mxu0 0.0
  %207 = vmatmul.mubr.f32.gmra.mrb[0].mxu0 %v107
  %v208 = vpop.f32.mrb[0].mxu0
  %v209 = vadd.f32 %v85, %v208
  %v210 = vpop.f32.mrb[0].mxu0
  %211 = vmatprep.mubr.f32.mxu0 0.0
  %212 = vmatmul.mubr.f32.gmra.mrb[0].mxu0 %v110
  %v213 = vpop.f32.mrb[0].mxu0
  %v214 = vadd.f32 %v85, %v213
  %v215 = vpop.f32.mrb[0].mxu0
  %216 = vdwg.mxu0
  %v217 = vld [vmem:[%s7] sm:$0xff]
  %v218 = vld [vmem:[%s7 + $0x8] sm:$0xff]
  %v219 = vld [vmem:[%s9] sm:$0x1]
  %v221 = vlaneseq
  %v222 = vshrl.u32 %v221, 7
  %v223 = vsub.s32 0, %v222
  %v224 = vrot.slane %v219, %v223
  %v227 = vsel %vm87, %v58, 0
  %v230 = vsel %vm87, %v59, 0
  %v233 = vsel %vm87, %v60, 0
  %v236 = vsel %vm87, %v61, 0
  %v239 = vsel %vm87, %v62, 0
  %v242 = vsel %vm87, %v63, 0
  %244 = vmatprep.subr.mxu0 0.0
  %245 = vmatpush1.msra.mxu0 %v217
  %246 = vmatprep.subr.mxu0 0.0
  %247 = vmatpush1.msra.mxu0 %v218
  %248 = vmatprep.subr.mxu0 0.0
  %249 = vmatpush1.msra.mxu0 0.0
  %250 = vmatprep.subr.mxu0 0.0
  %251 = vmatpush1.msra.mxu0 0.0
  %252 = vmatprep.subr.mxu0 0.0
  %253 = vmatpush1.msra.mxu0 0.0
  %254 = vmatprep.subr.mxu0 0.0
  %255 = vmatpush1.msra.mxu0 0.0
  %256 = vmatprep.subr.mxu0 0.0
  %257 = vmatpush1.msra.mxu0 0.0
  %258 = vmatprep.subr.mxu0 0.0
  %259 = vmatpush1.msra.mxu0 0.0
  %260 = vmatprep.subr.mxu0 0.0
  %261 = vmatpush1.msra.mxu0 0.0
  %262 = vmatprep.subr.mxu0 0.0
  %263 = vmatpush1.msra.mxu0 0.0
  %264 = vmatprep.subr.mxu0 0.0
  %265 = vmatpush1.msra.mxu0 0.0
  %266 = vmatprep.subr.mxu0 0.0
  %267 = vmatpush1.msra.mxu0 0.0
  %268 = vmatprep.subr.mxu0 0.0
  %269 = vmatpush1.msra.mxu0 0.0
  %270 = vmatprep.subr.mxu0 0.0
  %271 = vmatpush1.msra.mxu0 0.0
  %272 = vmatprep.subr.mxu0 0.0
  %273 = vmatpush1.msra.mxu0 0.0
  %274 = vmatprep.subr.mxu0 0.0
  %275 = vmatpush1.msra.mxu0 0.0
  %276 = vmatprep.subr.mxu0 0.0
  %277 = vmatpush1.msra.mxu0 0.0
  %278 = vmatprep.subr.mxu0 0.0
  %279 = vmatpush1.msra.mxu0 0.0
  %280 = vmatprep.subr.mxu0 0.0
  %281 = vmatpush1.msra.mxu0 0.0
  %282 = vmatprep.subr.mxu0 0.0
  %283 = vmatpush1.msra.mxu0 0.0
  %284 = vmatprep.subr.mxu0 0.0
  %285 = vmatpush1.msra.mxu0 0.0
  %286 = vmatprep.subr.mxu0 0.0
  %287 = vmatpush1.msra.mxu0 0.0
  %288 = vmatprep.subr.mxu0 0.0
  %289 = vmatpush1.msra.mxu0 0.0
  %290 = vmatprep.subr.mxu0 0.0
  %291 = vmatpush1.msra.mxu0 0.0
  %292 = vmatprep.subr.mxu0 0.0
  %293 = vmatpush1.msra.mxu0 0.0
  %294 = vmatprep.subr.mxu0 0.0
  %295 = vmatpush1.msra.mxu0 0.0
  %296 = vmatprep.subr.mxu0 0.0
  %297 = vmatpush1.msra.mxu0 0.0
  %298 = vmatprep.subr.mxu0 0.0
  %299 = vmatpush1.msra.mxu0 0.0
  %300 = vmatprep.subr.mxu0 0.0
  %301 = vmatpush1.msra.mxu0 0.0
  %302 = vmatprep.subr.mxu0 0.0
  %303 = vmatpush1.msra.mxu0 0.0
  %304 = vmatprep.subr.mxu0 0.0
  %305 = vmatpush1.msra.mxu0 0.0
  %306 = vmatprep.subr.mxu0 0.0
  %307 = vmatpush1.msra.mxu0 0.0
  %308 = vmatprep.mubr.f32.mxu0 0.0
  %309 = vmatmul.mubr.f32.gmra.mrb[0].mxu0 %v227
  %v310 = vpop.f32.mrb[0].mxu0
  %v311 = vadd.f32 %v224, %v310
  %v312 = vpop.f32.mrb[0].mxu0
  %313 = vmatprep.mubr.f32.mxu0 0.0
  %314 = vmatmul.mubr.f32.gmra.mrb[0].mxu0 %v230
  %v315 = vpop.f32.mrb[0].mxu0
  %v316 = vadd.f32 %v224, %v315
  %v317 = vpop.f32.mrb[0].mxu0
  %318 = vmatprep.mubr.f32.mxu0 0.0
  %319 = vmatmul.mubr.f32.gmra.mrb[0].mxu0 %v233
  %v320 = vpop.f32.mrb[0].mxu0
  %v321 = vadd.f32 %v224, %v320
  %v322 = vpop.f32.mrb[0].mxu0
  %323 = vmatprep.mubr.f32.mxu0 0.0
  %324 = vmatmul.mubr.f32.gmra.mrb[0].mxu0 %v236
  %v325 = vpop.f32.mrb[0].mxu0
  %v326 = vadd.f32 %v224, %v325
  %v327 = vpop.f32.mrb[0].mxu0
  %328 = vmatprep.mubr.f32.mxu0 0.0
  %329 = vmatmul.mubr.f32.gmra.mrb[0].mxu0 %v239
  %v330 = vpop.f32.mrb[0].mxu0
  %v331 = vadd.f32 %v224, %v330
  %v332 = vpop.f32.mrb[0].mxu0
  %333 = vmatprep.mubr.f32.mxu0 0.0
  %334 = vmatmul.mubr.f32.gmra.mrb[0].mxu0 %v242
  %v335 = vpop.f32.mrb[0].mxu0
  %v336 = vadd.f32 %v224, %v335
  %v337 = vpop.f32.mrb[0].mxu0
  %338 = vdwg.mxu0
  %v340 = vsel %vm87, 0.0, 0
  %342 = vmatprep.subr.mxu0 0.0
  %343 = vmatpush1.msra.mxu0 %v64
  %344 = vmatprep.subr.mxu0 0.0
  %345 = vmatpush1.msra.mxu0 %v65
  %346 = vmatprep.subr.mxu0 0.0
  %347 = vmatpush1.msra.mxu0 0.0
  %348 = vmatprep.subr.mxu0 0.0
  %349 = vmatpush1.msra.mxu0 0.0
  %350 = vmatprep.subr.mxu0 0.0
  %351 = vmatpush1.msra.mxu0 0.0
  %352 = vmatprep.subr.mxu0 0.0
  %353 = vmatpush1.msra.mxu0 0.0
  %354 = vmatprep.subr.mxu0 0.0
  %355 = vmatpush1.msra.mxu0 0.0
  %356 = vmatprep.subr.mxu0 0.0
  %357 = vmatpush1.msra.mxu0 0.0
  %358 = vmatprep.subr.mxu0 0.0
  %359 = vmatpush1.msra.mxu0 0.0
  %360 = vmatprep.subr.mxu0 0.0
  %361 = vmatpush1.msra.mxu0 0.0
  %362 = vmatprep.subr.mxu0 0.0
  %363 = vmatpush1.msra.mxu0 0.0
  %364 = vmatprep.subr.mxu0 0.0
  %365 = vmatpush1.msra.mxu0 0.0
  %366 = vmatprep.subr.mxu0 0.0
  %367 = vmatpush1.msra.mxu0 0.0
  %368 = vmatprep.subr.mxu0 0.0
  %369 = vmatpush1.msra.mxu0 0.0
  %370 = vmatprep.subr.mxu0 0.0
  %371 = vmatpush1.msra.mxu0 0.0
  %372 = vmatprep.subr.mxu0 0.0
  %373 = vmatpush1.msra.mxu0 0.0
  %374 = vmatprep.subr.mxu0 0.0
  %375 = vmatpush1.msra.mxu0 0.0
  %376 = vmatprep.subr.mxu0 0.0
  %377 = vmatpush1.msra.mxu0 0.0
  %378 = vmatprep.subr.mxu0 0.0
  %379 = vmatpush1.msra.mxu0 0.0
  %380 = vmatprep.subr.mxu0 0.0
  %381 = vmatpush1.msra.mxu0 0.0
  %382 = vmatprep.subr.mxu0 0.0
  %383 = vmatpush1.msra.mxu0 0.0
  %384 = vmatprep.subr.mxu0 0.0
  %385 = vmatpush1.msra.mxu0 0.0
  %386 = vmatprep.subr.mxu0 0.0
  %387 = vmatpush1.msra.mxu0 0.0
  %388 = vmatprep.subr.mxu0 0.0
  %389 = vmatpush1.msra.mxu0 0.0
  %390 = vmatprep.subr.mxu0 0.0
  %391 = vmatpush1.msra.mxu0 0.0
  %392 = vmatprep.subr.mxu0 0.0
  %393 = vmatpush1.msra.mxu0 0.0
  %394 = vmatprep.subr.mxu0 0.0
  %395 = vmatpush1.msra.mxu0 0.0
  %396 = vmatprep.subr.mxu0 0.0
  %397 = vmatpush1.msra.mxu0 0.0
  %398 = vmatprep.subr.mxu0 0.0
  %399 = vmatpush1.msra.mxu0 0.0
  %400 = vmatprep.subr.mxu0 0.0
  %401 = vmatpush1.msra.mxu0 0.0
  %402 = vmatprep.subr.mxu0 0.0
  %403 = vmatpush1.msra.mxu0 0.0
  %404 = vmatprep.subr.mxu0 0.0
  %405 = vmatpush1.msra.mxu0 0.0
  %406 = vmatprep.mubr.f32.mxu0 0.0
  %407 = vmatmul.mubr.f32.gmra.mrb[0].mxu0 %v340
  %v408 = vpop.f32.mrb[0].mxu0
  %v409 = vadd.f32 0.0, %v408
  %v410 = vpop.f32.mrb[0].mxu0
  %411 = vdwg.mxu0
  %v412 = vadd.f32 %v179, %v409
  %v413 = vxor.u32 %v412, 2147483648
  %v414 = vmul.f32 %v413, 1.442695
  %v415 = vpow.pop %v414
  %v416 = vadd.f32 %v415, 1.0
  %v417 = vrcp.pop %v416
  %v418 = vmul.f32 1.0, %v417
  %v419 = vtanh.pop %v412
  %v420 = vmul.f32 %v418, 0.0
  %422 = vrot.lane.b32.xlu0 %v419, 96
  %v423 = vpop.permute.xlu0 %422
  %v425 = vmul.f32 %v418, %v423
  %427 = vrot.lane.b32.xlu0 %v425, 16
  %v428 = vpop.permute.xlu0 %427
  %v430 = vadd.f32 %v420, %v428
  %v431 = vtanh.pop %v430
  %433 = vrot.lane.b32.xlu0 %v431, 32
  %v434 = vpop.permute.xlu0 %433
  %v436 = vmul.f32 %v418, %v434
  %438 = vrot.lane.b32.xlu0 %v436, 80
  %v439 = vpop.permute.xlu0 %438
  %v441 = vsel %vm87, %v439, 0.0
  %v443 = vlaneseq
  %v444 = vshrl.u32 %v443, 7
  %v445 = vsub.s32 0, %v444
  %v446 = vrot.slane %v72, %v445
  %vm448 = vcmask 261120
  %v450 = vsel %vm448, %v441, 0
  %452 = vmatprep.subr.mxu0 0.0
  %453 = vmatpush1.msra.mxu0 %v68
  %454 = vmatprep.subr.mxu0 0.0
  %455 = vmatpush1.msra.mxu0 %v69
  %456 = vmatprep.subr.mxu0 0.0
  %457 = vmatpush1.msra.mxu0 %v70
  %458 = vmatprep.subr.mxu0 0.0
  %459 = vmatpush1.msra.mxu0 %v71
  %460 = vmatprep.subr.mxu0 0.0
  %461 = vmatpush1.msra.mxu0 0.0
  %462 = vmatprep.subr.mxu0 0.0
  %463 = vmatpush1.msra.mxu0 0.0
  %464 = vmatprep.subr.mxu0 0.0
  %465 = vmatpush1.msra.mxu0 0.0
  %466 = vmatprep.subr.mxu0 0.0
  %467 = vmatpush1.msra.mxu0 0.0
  %468 = vmatprep.subr.mxu0 0.0
  %469 = vmatpush1.msra.mxu0 0.0
  %470 = vmatprep.subr.mxu0 0.0
  %471 = vmatpush1.msra.mxu0 0.0
  %472 = vmatprep.subr.mxu0 0.0
  %473 = vmatpush1.msra.mxu0 0.0
  %474 = vmatprep.subr.mxu0 0.0
  %475 = vmatpush1.msra.mxu0 0.0
  %476 = vmatprep.subr.mxu0 0.0
  %477 = vmatpush1.msra.mxu0 0.0
  %478 = vmatprep.subr.mxu0 0.0
  %479 = vmatpush1.msra.mxu0 0.0
  %480 = vmatprep.subr.mxu0 0.0
  %481 = vmatpush1.msra.mxu0 0.0
  %482 = vmatprep.subr.mxu0 0.0
  %483 = vmatpush1.msra.mxu0 0.0
  %484 = vmatprep.subr.mxu0 0.0
  %485 = vmatpush1.msra.mxu0 0.0
  %486 = vmatprep.subr.mxu0 0.0
  %487 = vmatpush1.msra.mxu0 0.0
  %488 = vmatprep.subr.mxu0 0.0
  %489 = vmatpush1.msra.mxu0 0.0
  %490 = vmatprep.subr.mxu0 0.0
  %491 = vmatpush1.msra.mxu0 0.0
  %492 = vmatprep.subr.mxu0 0.0
  %493 = vmatpush1.msra.mxu0 0.0
  %494 = vmatprep.subr.mxu0 0.0
  %495 = vmatpush1.msra.mxu0 0.0
  %496 = vmatprep.subr.mxu0 0.0
  %497 = vmatpush1.msra.mxu0 0.0
  %498 = vmatprep.subr.mxu0 0.0
  %499 = vmatpush1.msra.mxu0 0.0
  %500 = vmatprep.subr.mxu0 0.0
  %501 = vmatpush1.msra.mxu0 0.0
  %502 = vmatprep.subr.mxu0 0.0
  %503 = vmatpush1.msra.mxu0 0.0
  %504 = vmatprep.subr.mxu0 0.0
  %505 = vmatpush1.msra.mxu0 0.0
  %506 = vmatprep.subr.mxu0 0.0
  %507 = vmatpush1.msra.mxu0 0.0
  %508 = vmatprep.subr.mxu0 0.0
  %509 = vmatpush1.msra.mxu0 0.0
  %510 = vmatprep.subr.mxu0 0.0
  %511 = vmatpush1.msra.mxu0 0.0
  %512 = vmatprep.subr.mxu0 0.0
  %513 = vmatpush1.msra.mxu0 0.0
  %514 = vmatprep.subr.mxu0 0.0
  %515 = vmatpush1.msra.mxu0 0.0
  %516 = vmatprep.mubr.f32.mxu0 0.0
  %517 = vmatmul.mubr.f32.gmra.mrb[0].mxu0 %v450
  %v518 = vpop.f32.mrb[0].mxu0
  %v519 = vadd.f32 %v446, %v518
  %v520 = vpop.f32.mrb[0].mxu0
  %521 = vdwg.mxu0
  %v522 = vxor.u32 %v519, 2147483648
  %v523 = vmul.f32 %v522, 1.442695
  %v524 = vpow.pop %v523
  %v525 = vadd.f32 %v524, 1.0
  %v526 = vrcp.pop %v525
  %v527 = vmul.f32 1.0, %v526
  %v528 = vtanh.pop %v519
  %v529 = vmul.f32 %v527, 0.0
  %531 = vrot.lane.b32.xlu0 %v528, 96
  %v532 = vpop.permute.xlu0 %531
  %v534 = vmul.f32 %v527, %v532
  %536 = vrot.lane.b32.xlu0 %v534, 16
  %v537 = vpop.permute.xlu0 %536
  %v539 = vadd.f32 %v529, %v537
  %v540 = vtanh.pop %v539
  %542 = vrot.lane.b32.xlu0 %v540, 32
  %v543 = vpop.permute.xlu0 %542
  %v545 = vmul.f32 %v527, %v543
  %v546 = vsel %vm87, %v439, 0
  %548 = vmatprep.subr.mxu0 0.0
  %549 = vmatpush1.msra.mxu0 %v64
  %550 = vmatprep.subr.mxu0 0.0
  %551 = vmatpush1.msra.mxu0 %v65
  %552 = vmatprep.subr.mxu0 0.0
  %553 = vmatpush1.msra.mxu0 0.0
  %554 = vmatprep.subr.mxu0 0.0
  %555 = vmatpush1.msra.mxu0 0.0
  %556 = vmatprep.subr.mxu0 0.0
  %557 = vmatpush1.msra.mxu0 0.0
  %558 = vmatprep.subr.mxu0 0.0
  %559 = vmatpush1.msra.mxu0 0.0
  %560 = vmatprep.subr.mxu0 0.0
  %561 = vmatpush1.msra.mxu0 0.0
  %562 = vmatprep.subr.mxu0 0.0
  %563 = vmatpush1.msra.mxu0 0.0
  %564 = vmatprep.subr.mxu0 0.0
  %565 = vmatpush1.msra.mxu0 0.0
  %566 = vmatprep.subr.mxu0 0.0
  %567 = vmatpush1.msra.mxu0 0.0
  %568 = vmatprep.subr.mxu0 0.0
  %569 = vmatpush1.msra.mxu0 0.0
  %570 = vmatprep.subr.mxu0 0.0
  %571 = vmatpush1.msra.mxu0 0.0
  %572 = vmatprep.subr.mxu0 0.0
  %573 = vmatpush1.msra.mxu0 0.0
  %574 = vmatprep.subr.mxu0 0.0
  %575 = vmatpush1.msra.mxu0 0.0
  %576 = vmatprep.subr.mxu0 0.0
  %577 = vmatpush1.msra.mxu0 0.0
  %578 = vmatprep.subr.mxu0 0.0
  %579 = vmatpush1.msra.mxu0 0.0
  %580 = vmatprep.subr.mxu0 0.0
  %581 = vmatpush1.msra.mxu0 0.0
  %582 = vmatprep.subr.mxu0 0.0
  %583 = vmatpush1.msra.mxu0 0.0
  %584 = vmatprep.subr.mxu0 0.0
  %585 = vmatpush1.msra.mxu0 0.0
  %586 = vmatprep.subr.mxu0 0.0
  %587 = vmatpush1.msra.mxu0 0.0
  %588 = vmatprep.subr.mxu0 0.0
  %589 = vmatpush1.msra.mxu0 0.0
  %590 = vmatprep.subr.mxu0 0.0
  %591 = vmatpush1.msra.mxu0 0.0
  %592 = vmatprep.subr.mxu0 0.0
  %593 = vmatpush1.msra.mxu0 0.0
  %594 = vmatprep.subr.mxu0 0.0
  %595 = vmatpush1.msra.mxu0 0.0
  %596 = vmatprep.subr.mxu0 0.0
  %597 = vmatpush1.msra.mxu0 0.0
  %598 = vmatprep.subr.mxu0 0.0
  %599 = vmatpush1.msra.mxu0 0.0
  %600 = vmatprep.subr.mxu0 0.0
  %601 = vmatpush1.msra.mxu0 0.0
  %602 = vmatprep.subr.mxu0 0.0
  %603 = vmatpush1.msra.mxu0 0.0
  %604 = vmatprep.subr.mxu0 0.0
  %605 = vmatpush1.msra.mxu0 0.0
  %606 = vmatprep.subr.mxu0 0.0
  %607 = vmatpush1.msra.mxu0 0.0
  %608 = vmatprep.subr.mxu0 0.0
  %609 = vmatpush1.msra.mxu0 0.0
  %610 = vmatprep.subr.mxu0 0.0
  %611 = vmatpush1.msra.mxu0 0.0
  %612 = vmatprep.mubr.f32.mxu0 0.0
  %613 = vmatmul.mubr.f32.gmra.mrb[0].mxu0 %v546
  %v614 = vpop.f32.mrb[0].mxu0
  %v615 = vadd.f32 0.0, %v614
  %v616 = vpop.f32.mrb[0].mxu0
  %617 = vdwg.mxu0
  %v618 = vadd.f32 %v184, %v615
  %v619 = vxor.u32 %v618, 2147483648
  %v620 = vmul.f32 %v619, 1.442695
  %v621 = vpow.pop %v620
  %v622 = vadd.f32 %v621, 1.0
  %v623 = vrcp.pop %v622
  %v624 = vmul.f32 1.0, %v623
  %v625 = vtanh.pop %v618
  %v626 = vmul.f32 %v624, %v430
  %628 = vrot.lane.b32.xlu0 %v625, 96
  %v629 = vpop.permute.xlu0 %628
  %v631 = vmul.f32 %v624, %v629
  %633 = vrot.lane.b32.xlu0 %v631, 16
  %v634 = vpop.permute.xlu0 %633
  %v636 = vadd.f32 %v626, %v634
  %v637 = vtanh.pop %v636
  %639 = vrot.lane.b32.xlu0 %v637, 32
  %v640 = vpop.permute.xlu0 %639
  %v642 = vmul.f32 %v624, %v640
  %644 = vrot.lane.b32.xlu0 %v642, 80
  %v645 = vpop.permute.xlu0 %644
  %648 = vrot.lane.b32.xlu0 %v545, 96
  %v649 = vpop.permute.xlu0 %648
  %v651 = vsel %vm87, %v645, %v649
  %v653 = vsel %vm448, %v651, 0
  %655 = vmatprep.subr.mxu0 0.0
  %656 = vmatpush1.msra.mxu0 %v68
  %657 = vmatprep.subr.mxu0 0.0
  %658 = vmatpush1.msra.mxu0 %v69
  %659 = vmatprep.subr.mxu0 0.0
  %660 = vmatpush1.msra.mxu0 %v70
  %661 = vmatprep.subr.mxu0 0.0
  %662 = vmatpush1.msra.mxu0 %v71
  %663 = vmatprep.subr.mxu0 0.0
  %664 = vmatpush1.msra.mxu0 0.0
  %665 = vmatprep.subr.mxu0 0.0
  %666 = vmatpush1.msra.mxu0 0.0
  %667 = vmatprep.subr.mxu0 0.0
  %668 = vmatpush1.msra.mxu0 0.0
  %669 = vmatprep.subr.mxu0 0.0
  %670 = vmatpush1.msra.mxu0 0.0
  %671 = vmatprep.subr.mxu0 0.0
  %672 = vmatpush1.msra.mxu0 0.0
  %673 = vmatprep.subr.mxu0 0.0
  %674 = vmatpush1.msra.mxu0 0.0
  %675 = vmatprep.subr.mxu0 0.0
  %676 = vmatpush1.msra.mxu0 0.0
  %677 = vmatprep.subr.mxu0 0.0
  %678 = vmatpush1.msra.mxu0 0.0
  %679 = vmatprep.subr.mxu0 0.0
  %680 = vmatpush1.msra.mxu0 0.0
  %681 = vmatprep.subr.mxu0 0.0
  %682 = vmatpush1.msra.mxu0 0.0
  %683 = vmatprep.subr.mxu0 0.0
  %684 = vmatpush1.msra.mxu0 0.0
  %685 = vmatprep.subr.mxu0 0.0
  %686 = vmatpush1.msra.mxu0 0.0
  %687 = vmatprep.subr.mxu0 0.0
  %688 = vmatpush1.msra.mxu0 0.0
  %689 = vmatprep.subr.mxu0 0.0
  %690 = vmatpush1.msra.mxu0 0.0
  %691 = vmatprep.subr.mxu0 0.0
  %692 = vmatpush1.msra.mxu0 0.0
  %693 = vmatprep.subr.mxu0 0.0
  %694 = vmatpush1.msra.mxu0 0.0
  %695 = vmatprep.subr.mxu0 0.0
  %696 = vmatpush1.msra.mxu0 0.0
  %697 = vmatprep.subr.mxu0 0.0
  %698 = vmatpush1.msra.mxu0 0.0
  %699 = vmatprep.subr.mxu0 0.0
  %700 = vmatpush1.msra.mxu0 0.0
  %701 = vmatprep.subr.mxu0 0.0
  %702 = vmatpush1.msra.mxu0 0.0
  %703 = vmatprep.subr.mxu0 0.0
  %704 = vmatpush1.msra.mxu0 0.0
  %705 = vmatprep.subr.mxu0 0.0
  %706 = vmatpush1.msra.mxu0 0.0
  %707 = vmatprep.subr.mxu0 0.0
  %708 = vmatpush1.msra.mxu0 0.0
  %709 = vmatprep.subr.mxu0 0.0
  %710 = vmatpush1.msra.mxu0 0.0
  %711 = vmatprep.subr.mxu0 0.0
  %712 = vmatpush1.msra.mxu0 0.0
  %713 = vmatprep.subr.mxu0 0.0
  %714 = vmatpush1.msra.mxu0 0.0
  %715 = vmatprep.subr.mxu0 0.0
  %716 = vmatpush1.msra.mxu0 0.0
  %717 = vmatprep.subr.mxu0 0.0
  %718 = vmatpush1.msra.mxu0 0.0
  %719 = vmatprep.mubr.f32.mxu0 0.0
  %720 = vmatmul.mubr.f32.gmra.mrb[0].mxu0 %v653
  %v721 = vpop.f32.mrb[0].mxu0
  %v722 = vadd.f32 %v446, %v721
  %v723 = vpop.f32.mrb[0].mxu0
  %724 = vdwg.mxu0
  %v725 = vxor.u32 %v722, 2147483648
  %v726 = vmul.f32 %v725, 1.442695
  %v727 = vpow.pop %v726
  %v728 = vadd.f32 %v727, 1.0
  %v729 = vrcp.pop %v728
  %v730 = vmul.f32 1.0, %v729
  %v731 = vtanh.pop %v722
  %v732 = vmul.f32 %v730, %v539
  %734 = vrot.lane.b32.xlu0 %v731, 96
  %v735 = vpop.permute.xlu0 %734
  %v737 = vmul.f32 %v730, %v735
  %739 = vrot.lane.b32.xlu0 %v737, 16
  %v740 = vpop.permute.xlu0 %739
  %v742 = vadd.f32 %v732, %v740
  %v743 = vtanh.pop %v742
  %745 = vrot.lane.b32.xlu0 %v743, 32
  %v746 = vpop.permute.xlu0 %745
  %v748 = vmul.f32 %v730, %v746
  %v749 = vsel %vm87, %v645, 0
  %751 = vmatprep.subr.mxu0 0.0
  %752 = vmatpush1.msra.mxu0 %v64
  %753 = vmatprep.subr.mxu0 0.0
  %754 = vmatpush1.msra.mxu0 %v65
  %755 = vmatprep.subr.mxu0 0.0
  %756 = vmatpush1.msra.mxu0 0.0
  %757 = vmatprep.subr.mxu0 0.0
  %758 = vmatpush1.msra.mxu0 0.0
  %759 = vmatprep.subr.mxu0 0.0
  %760 = vmatpush1.msra.mxu0 0.0
  %761 = vmatprep.subr.mxu0 0.0
  %762 = vmatpush1.msra.mxu0 0.0
  %763 = vmatprep.subr.mxu0 0.0
  %764 = vmatpush1.msra.mxu0 0.0
  %765 = vmatprep.subr.mxu0 0.0
  %766 = vmatpush1.msra.mxu0 0.0
  %767 = vmatprep.subr.mxu0 0.0
  %768 = vmatpush1.msra.mxu0 0.0
  %769 = vmatprep.subr.mxu0 0.0
  %770 = vmatpush1.msra.mxu0 0.0
  %771 = vmatprep.subr.mxu0 0.0
  %772 = vmatpush1.msra.mxu0 0.0
  %773 = vmatprep.subr.mxu0 0.0
  %774 = vmatpush1.msra.mxu0 0.0
  %775 = vmatprep.subr.mxu0 0.0
  %776 = vmatpush1.msra.mxu0 0.0
  %777 = vmatprep.subr.mxu0 0.0
  %778 = vmatpush1.msra.mxu0 0.0
  %779 = vmatprep.subr.mxu0 0.0
  %780 = vmatpush1.msra.mxu0 0.0
  %781 = vmatprep.subr.mxu0 0.0
  %782 = vmatpush1.msra.mxu0 0.0
  %783 = vmatprep.subr.mxu0 0.0
  %784 = vmatpush1.msra.mxu0 0.0
  %785 = vmatprep.subr.mxu0 0.0
  %786 = vmatpush1.msra.mxu0 0.0
  %787 = vmatprep.subr.mxu0 0.0
  %788 = vmatpush1.msra.mxu0 0.0
  %789 = vmatprep.subr.mxu0 0.0
  %790 = vmatpush1.msra.mxu0 0.0
  %791 = vmatprep.subr.mxu0 0.0
  %792 = vmatpush1.msra.mxu0 0.0
  %793 = vmatprep.subr.mxu0 0.0
  %794 = vmatpush1.msra.mxu0 0.0
  %795 = vmatprep.subr.mxu0 0.0
  %796 = vmatpush1.msra.mxu0 0.0
  %797 = vmatprep.subr.mxu0 0.0
  %798 = vmatpush1.msra.mxu0 0.0
  %799 = vmatprep.subr.mxu0 0.0
  %800 = vmatpush1.msra.mxu0 0.0
  %801 = vmatprep.subr.mxu0 0.0
  %802 = vmatpush1.msra.mxu0 0.0
  %803 = vmatprep.subr.mxu0 0.0
  %804 = vmatpush1.msra.mxu0 0.0
  %805 = vmatprep.subr.mxu0 0.0
  %806 = vmatpush1.msra.mxu0 0.0
  %807 = vmatprep.subr.mxu0 0.0
  %808 = vmatpush1.msra.mxu0 0.0
  %809 = vmatprep.subr.mxu0 0.0
  %810 = vmatpush1.msra.mxu0 0.0
  %811 = vmatprep.subr.mxu0 0.0
  %812 = vmatpush1.msra.mxu0 0.0
  %813 = vmatprep.subr.mxu0 0.0
  %814 = vmatpush1.msra.mxu0 0.0
  %815 = vmatprep.mubr.f32.mxu0 0.0
  %816 = vmatmul.mubr.f32.gmra.mrb[0].mxu0 %v749
  %v817 = vpop.f32.mrb[0].mxu0
  %v818 = vadd.f32 0.0, %v817
  %v819 = vpop.f32.mrb[0].mxu0
  %820 = vdwg.mxu0
  %v821 = vadd.f32 %v189, %v818
  %v822 = vxor.u32 %v821, 2147483648
  %v823 = vmul.f32 %v822, 1.442695
  %v824 = vpow.pop %v823
  %v825 = vadd.f32 %v824, 1.0
  %v826 = vrcp.pop %v825
  %v827 = vmul.f32 1.0, %v826
  %v828 = vtanh.pop %v821
  %v829 = vmul.f32 %v827, %v636
  %831 = vrot.lane.b32.xlu0 %v828, 96
  %v832 = vpop.permute.xlu0 %831
  %v834 = vmul.f32 %v827, %v832
  %836 = vrot.lane.b32.xlu0 %v834, 16
  %v837 = vpop.permute.xlu0 %836
  %v839 = vadd.f32 %v829, %v837
  %v840 = vtanh.pop %v839
  %842 = vrot.lane.b32.xlu0 %v840, 32
  %v843 = vpop.permute.xlu0 %842
  %v845 = vmul.f32 %v827, %v843
  %847 = vrot.lane.b32.xlu0 %v845, 80
  %v848 = vpop.permute.xlu0 %847
  %851 = vrot.lane.b32.xlu0 %v748, 96
  %v852 = vpop.permute.xlu0 %851
  %v854 = vsel %vm87, %v848, %v852
  %v856 = vsel %vm448, %v854, 0
  %858 = vmatprep.subr.mxu0 0.0
  %859 = vmatpush1.msra.mxu0 %v68
  %860 = vmatprep.subr.mxu0 0.0
  %861 = vmatpush1.msra.mxu0 %v69
  %862 = vmatprep.subr.mxu0 0.0
  %863 = vmatpush1.msra.mxu0 %v70
  %864 = vmatprep.subr.mxu0 0.0
  %865 = vmatpush1.msra.mxu0 %v71
  %866 = vmatprep.subr.mxu0 0.0
  %867 = vmatpush1.msra.mxu0 0.0
  %868 = vmatprep.subr.mxu0 0.0
  %869 = vmatpush1.msra.mxu0 0.0
  %870 = vmatprep.subr.mxu0 0.0
  %871 = vmatpush1.msra.mxu0 0.0
  %872 = vmatprep.subr.mxu0 0.0
  %873 = vmatpush1.msra.mxu0 0.0
  %874 = vmatprep.subr.mxu0 0.0
  %875 = vmatpush1.msra.mxu0 0.0
  %876 = vmatprep.subr.mxu0 0.0
  %877 = vmatpush1.msra.mxu0 0.0
  %878 = vmatprep.subr.mxu0 0.0
  %879 = vmatpush1.msra.mxu0 0.0
  %880 = vmatprep.subr.mxu0 0.0
  %881 = vmatpush1.msra.mxu0 0.0
  %882 = vmatprep.subr.mxu0 0.0
  %883 = vmatpush1.msra.mxu0 0.0
  %884 = vmatprep.subr.mxu0 0.0
  %885 = vmatpush1.msra.mxu0 0.0
  %886 = vmatprep.subr.mxu0 0.0
  %887 = vmatpush1.msra.mxu0 0.0
  %888 = vmatprep.subr.mxu0 0.0
  %889 = vmatpush1.msra.mxu0 0.0
  %890 = vmatprep.subr.mxu0 0.0
  %891 = vmatpush1.msra.mxu0 0.0
  %892 = vmatprep.subr.mxu0 0.0
  %893 = vmatpush1.msra.mxu0 0.0
  %894 = vmatprep.subr.mxu0 0.0
  %895 = vmatpush1.msra.mxu0 0.0
  %896 = vmatprep.subr.mxu0 0.0
  %897 = vmatpush1.msra.mxu0 0.0
  %898 = vmatprep.subr.mxu0 0.0
  %899 = vmatpush1.msra.mxu0 0.0
  %900 = vmatprep.subr.mxu0 0.0
  %901 = vmatpush1.msra.mxu0 0.0
  %902 = vmatprep.subr.mxu0 0.0
  %903 = vmatpush1.msra.mxu0 0.0
  %904 = vmatprep.subr.mxu0 0.0
  %905 = vmatpush1.msra.mxu0 0.0
  %906 = vmatprep.subr.mxu0 0.0
  %907 = vmatpush1.msra.mxu0 0.0
  %908 = vmatprep.subr.mxu0 0.0
  %909 = vmatpush1.msra.mxu0 0.0
  %910 = vmatprep.subr.mxu0 0.0
  %911 = vmatpush1.msra.mxu0 0.0
  %912 = vmatprep.subr.mxu0 0.0
  %913 = vmatpush1.msra.mxu0 0.0
  %914 = vmatprep.subr.mxu0 0.0
  %915 = vmatpush1.msra.mxu0 0.0
  %916 = vmatprep.subr.mxu0 0.0
  %917 = vmatpush1.msra.mxu0 0.0
  %918 = vmatprep.subr.mxu0 0.0
  %919 = vmatpush1.msra.mxu0 0.0
  %920 = vmatprep.subr.mxu0 0.0
  %921 = vmatpush1.msra.mxu0 0.0
  %922 = vmatprep.mubr.f32.mxu0 0.0
  %923 = vmatmul.mubr.f32.gmra.mrb[0].mxu0 %v856
  %v924 = vpop.f32.mrb[0].mxu0
  %v925 = vadd.f32 %v446, %v924
  %v926 = vpop.f32.mrb[0].mxu0
  %927 = vdwg.mxu0
  %v928 = vxor.u32 %v925, 2147483648
  %v929 = vmul.f32 %v928, 1.442695
  %v930 = vpow.pop %v929
  %v931 = vadd.f32 %v930, 1.0
  %v932 = vrcp.pop %v931
  %v933 = vmul.f32 1.0, %v932
  %v934 = vtanh.pop %v925
  %v935 = vmul.f32 %v933, %v742
  %937 = vrot.lane.b32.xlu0 %v934, 96
  %v938 = vpop.permute.xlu0 %937
  %v940 = vmul.f32 %v933, %v938
  %942 = vrot.lane.b32.xlu0 %v940, 16
  %v943 = vpop.permute.xlu0 %942
  %v945 = vadd.f32 %v935, %v943
  %v946 = vtanh.pop %v945
  %948 = vrot.lane.b32.xlu0 %v946, 32
  %v949 = vpop.permute.xlu0 %948
  %v951 = vmul.f32 %v933, %v949
  %v952 = vsel %vm87, %v848, 0
  %954 = vmatprep.subr.mxu0 0.0
  %955 = vmatpush1.msra.mxu0 %v64
  %956 = vmatprep.subr.mxu0 0.0
  %957 = vmatpush1.msra.mxu0 %v65
  %958 = vmatprep.subr.mxu0 0.0
  %959 = vmatpush1.msra.mxu0 0.0
  %960 = vmatprep.subr.mxu0 0.0
  %961 = vmatpush1.msra.mxu0 0.0
  %962 = vmatprep.subr.mxu0 0.0
  %963 = vmatpush1.msra.mxu0 0.0
  %964 = vmatprep.subr.mxu0 0.0
  %965 = vmatpush1.msra.mxu0 0.0
  %966 = vmatprep.subr.mxu0 0.0
  %967 = vmatpush1.msra.mxu0 0.0
  %968 = vmatprep.subr.mxu0 0.0
  %969 = vmatpush1.msra.mxu0 0.0
  %970 = vmatprep.subr.mxu0 0.0
  %971 = vmatpush1.msra.mxu0 0.0
  %972 = vmatprep.subr.mxu0 0.0
  %973 = vmatpush1.msra.mxu0 0.0
  %974 = vmatprep.subr.mxu0 0.0
  %975 = vmatpush1.msra.mxu0 0.0
  %976 = vmatprep.subr.mxu0 0.0
  %977 = vmatpush1.msra.mxu0 0.0
  %978 = vmatprep.subr.mxu0 0.0
  %979 = vmatpush1.msra.mxu0 0.0
  %980 = vmatprep.subr.mxu0 0.0
  %981 = vmatpush1.msra.mxu0 0.0
  %982 = vmatprep.subr.mxu0 0.0
  %983 = vmatpush1.msra.mxu0 0.0
  %984 = vmatprep.subr.mxu0 0.0
  %985 = vmatpush1.msra.mxu0 0.0
  %986 = vmatprep.subr.mxu0 0.0
  %987 = vmatpush1.msra.mxu0 0.0
  %988 = vmatprep.subr.mxu0 0.0
  %989 = vmatpush1.msra.mxu0 0.0
  %990 = vmatprep.subr.mxu0 0.0
  %991 = vmatpush1.msra.mxu0 0.0
  %992 = vmatprep.subr.mxu0 0.0
  %993 = vmatpush1.msra.mxu0 0.0
  %994 = vmatprep.subr.mxu0 0.0
  %995 = vmatpush1.msra.mxu0 0.0
  %996 = vmatprep.subr.mxu0 0.0
  %997 = vmatpush1.msra.mxu0 0.0
  %998 = vmatprep.subr.mxu0 0.0
  %999 = vmatpush1.msra.mxu0 0.0
  %1000 = vmatprep.subr.mxu0 0.0
  %1001 = vmatpush1.msra.mxu0 0.0
  %1002 = vmatprep.subr.mxu0 0.0
  %1003 = vmatpush1.msra.mxu0 0.0
  %1004 = vmatprep.subr.mxu0 0.0
  %1005 = vmatpush1.msra.mxu0 0.0
  %1006 = vmatprep.subr.mxu0 0.0
  %1007 = vmatpush1.msra.mxu0 0.0
  %1008 = vmatprep.subr.mxu0 0.0
  %1009 = vmatpush1.msra.mxu0 0.0
  %1010 = vmatprep.subr.mxu0 0.0
  %1011 = vmatpush1.msra.mxu0 0.0
  %1012 = vmatprep.subr.mxu0 0.0
  %1013 = vmatpush1.msra.mxu0 0.0
  %1014 = vmatprep.subr.mxu0 0.0
  %1015 = vmatpush1.msra.mxu0 0.0
  %1016 = vmatprep.subr.mxu0 0.0
  %1017 = vmatpush1.msra.mxu0 0.0
  %1018 = vmatprep.mubr.f32.mxu0 0.0
  %1019 = vmatmul.mubr.f32.gmra.mrb[0].mxu0 %v952
  %v1020 = vpop.f32.mrb[0].mxu0
  %v1021 = vadd.f32 0.0, %v1020
  %v1022 = vpop.f32.mrb[0].mxu0
  %1023 = vdwg.mxu0
  %v1024 = vadd.f32 %v194, %v1021
  %v1025 = vxor.u32 %v1024, 2147483648
  %v1026 = vmul.f32 %v1025, 1.442695
  %v1027 = vpow.pop %v1026
  %v1028 = vadd.f32 %v1027, 1.0
  %v1029 = vrcp.pop %v1028
  %v1030 = vmul.f32 1.0, %v1029
  %v1031 = vtanh.pop %v1024
  %v1032 = vmul.f32 %v1030, %v839
  %1034 = vrot.lane.b32.xlu0 %v1031, 96
  %v1035 = vpop.permute.xlu0 %1034
  %v1037 = vmul.f32 %v1030, %v1035
  %1039 = vrot.lane.b32.xlu0 %v1037, 16
  %v1040 = vpop.permute.xlu0 %1039
  %v1042 = vadd.f32 %v1032, %v1040
  %v1043 = vtanh.pop %v1042
  %1045 = vrot.lane.b32.xlu0 %v1043, 32
  %v1046 = vpop.permute.xlu0 %1045
  %v1048 = vmul.f32 %v1030, %v1046
  %1050 = vrot.lane.b32.xlu0 %v1048, 80
  %v1051 = vpop.permute.xlu0 %1050
  %1054 = vrot.lane.b32.xlu0 %v951, 96
  %v1055 = vpop.permute.xlu0 %1054
  %v1057 = vsel %vm87, %v1051, %v1055
  %v1059 = vsel %vm448, %v1057, 0
  %1061 = vmatprep.subr.mxu0 0.0
  %1062 = vmatpush1.msra.mxu0 %v68
  %1063 = vmatprep.subr.mxu0 0.0
  %1064 = vmatpush1.msra.mxu0 %v69
  %1065 = vmatprep.subr.mxu0 0.0
  %1066 = vmatpush1.msra.mxu0 %v70
  %1067 = vmatprep.subr.mxu0 0.0
  %1068 = vmatpush1.msra.mxu0 %v71
  %1069 = vmatprep.subr.mxu0 0.0
  %1070 = vmatpush1.msra.mxu0 0.0
  %1071 = vmatprep.subr.mxu0 0.0
  %1072 = vmatpush1.msra.mxu0 0.0
  %1073 = vmatprep.subr.mxu0 0.0
  %1074 = vmatpush1.msra.mxu0 0.0
  %1075 = vmatprep.subr.mxu0 0.0
  %1076 = vmatpush1.msra.mxu0 0.0
  %1077 = vmatprep.subr.mxu0 0.0
  %1078 = vmatpush1.msra.mxu0 0.0
  %1079 = vmatprep.subr.mxu0 0.0
  %1080 = vmatpush1.msra.mxu0 0.0
  %1081 = vmatprep.subr.mxu0 0.0
  %1082 = vmatpush1.msra.mxu0 0.0
  %1083 = vmatprep.subr.mxu0 0.0
  %1084 = vmatpush1.msra.mxu0 0.0
  %1085 = vmatprep.subr.mxu0 0.0
  %1086 = vmatpush1.msra.mxu0 0.0
  %1087 = vmatprep.subr.mxu0 0.0
  %1088 = vmatpush1.msra.mxu0 0.0
  %1089 = vmatprep.subr.mxu0 0.0
  %1090 = vmatpush1.msra.mxu0 0.0
  %1091 = vmatprep.subr.mxu0 0.0
  %1092 = vmatpush1.msra.mxu0 0.0
  %1093 = vmatprep.subr.mxu0 0.0
  %1094 = vmatpush1.msra.mxu0 0.0
  %1095 = vmatprep.subr.mxu0 0.0
  %1096 = vmatpush1.msra.mxu0 0.0
  %1097 = vmatprep.subr.mxu0 0.0
  %1098 = vmatpush1.msra.mxu0 0.0
  %1099 = vmatprep.subr.mxu0 0.0
  %1100 = vmatpush1.msra.mxu0 0.0
  %1101 = vmatprep.subr.mxu0 0.0
  %1102 = vmatpush1.msra.mxu0 0.0
  %1103 = vmatprep.subr.mxu0 0.0
  %1104 = vmatpush1.msra.mxu0 0.0
  %1105 = vmatprep.subr.mxu0 0.0
  %1106 = vmatpush1.msra.mxu0 0.0
  %1107 = vmatprep.subr.mxu0 0.0
  %1108 = vmatpush1.msra.mxu0 0.0
  %1109 = vmatprep.subr.mxu0 0.0
  %1110 = vmatpush1.msra.mxu0 0.0
  %1111 = vmatprep.subr.mxu0 0.0
  %1112 = vmatpush1.msra.mxu0 0.0
  %1113 = vmatprep.subr.mxu0 0.0
  %1114 = vmatpush1.msra.mxu0 0.0
  %1115 = vmatprep.subr.mxu0 0.0
  %1116 = vmatpush1.msra.mxu0 0.0
  %1117 = vmatprep.subr.mxu0 0.0
  %1118 = vmatpush1.msra.mxu0 0.0
  %1119 = vmatprep.subr.mxu0 0.0
  %1120 = vmatpush1.msra.mxu0 0.0
  %1121 = vmatprep.subr.mxu0 0.0
  %1122 = vmatpush1.msra.mxu0 0.0
  %1123 = vmatprep.subr.mxu0 0.0
  %1124 = vmatpush1.msra.mxu0 0.0
  %1125 = vmatprep.mubr.f32.mxu0 0.0
  %1126 = vmatmul.mubr.f32.gmra.mrb[0].mxu0 %v1059
  %v1127 = vpop.f32.mrb[0].mxu0
  %v1128 = vadd.f32 %v446, %v1127
  %v1129 = vpop.f32.mrb[0].mxu0
  %1130 = vdwg.mxu0
  %v1131 = vxor.u32 %v1128, 2147483648
  %v1132 = vmul.f32 %v1131, 1.442695
  %v1133 = vpow.pop %v1132
  %v1134 = vadd.f32 %v1133, 1.0
  %v1135 = vrcp.pop %v1134
  %v1136 = vmul.f32 1.0, %v1135
  %v1137 = vtanh.pop %v1128
  %v1138 = vmul.f32 %v1136, %v945
  %1140 = vrot.lane.b32.xlu0 %v1137, 96
  %v1141 = vpop.permute.xlu0 %1140
  %v1143 = vmul.f32 %v1136, %v1141
  %1145 = vrot.lane.b32.xlu0 %v1143, 16
  %v1146 = vpop.permute.xlu0 %1145
  %v1148 = vadd.f32 %v1138, %v1146
  %v1149 = vtanh.pop %v1148
  %1151 = vrot.lane.b32.xlu0 %v1149, 32
  %v1152 = vpop.permute.xlu0 %1151
  %v1154 = vmul.f32 %v1136, %v1152
  %v1155 = vsel %vm87, %v1051, 0
  %1157 = vmatprep.subr.mxu0 0.0
  %1158 = vmatpush1.msra.mxu0 %v64
  %1159 = vmatprep.subr.mxu0 0.0
  %1160 = vmatpush1.msra.mxu0 %v65
  %1161 = vmatprep.subr.mxu0 0.0
  %1162 = vmatpush1.msra.mxu0 0.0
  %1163 = vmatprep.subr.mxu0 0.0
  %1164 = vmatpush1.msra.mxu0 0.0
  %1165 = vmatprep.subr.mxu0 0.0
  %1166 = vmatpush1.msra.mxu0 0.0
  %1167 = vmatprep.subr.mxu0 0.0
  %1168 = vmatpush1.msra.mxu0 0.0
  %1169 = vmatprep.subr.mxu0 0.0
  %1170 = vmatpush1.msra.mxu0 0.0
  %1171 = vmatprep.subr.mxu0 0.0
  %1172 = vmatpush1.msra.mxu0 0.0
  %1173 = vmatprep.subr.mxu0 0.0
  %1174 = vmatpush1.msra.mxu0 0.0
  %1175 = vmatprep.subr.mxu0 0.0
  %1176 = vmatpush1.msra.mxu0 0.0
  %1177 = vmatprep.subr.mxu0 0.0
  %1178 = vmatpush1.msra.mxu0 0.0
  %1179 = vmatprep.subr.mxu0 0.0
  %1180 = vmatpush1.msra.mxu0 0.0
  %1181 = vmatprep.subr.mxu0 0.0
  %1182 = vmatpush1.msra.mxu0 0.0
  %1183 = vmatprep.subr.mxu0 0.0
  %1184 = vmatpush1.msra.mxu0 0.0
  %1185 = vmatprep.subr.mxu0 0.0
  %1186 = vmatpush1.msra.mxu0 0.0
  %1187 = vmatprep.subr.mxu0 0.0
  %1188 = vmatpush1.msra.mxu0 0.0
  %1189 = vmatprep.subr.mxu0 0.0
  %1190 = vmatpush1.msra.mxu0 0.0
  %1191 = vmatprep.subr.mxu0 0.0
  %1192 = vmatpush1.msra.mxu0 0.0
  %1193 = vmatprep.subr.mxu0 0.0
  %1194 = vmatpush1.msra.mxu0 0.0
  %1195 = vmatprep.subr.mxu0 0.0
  %1196 = vmatpush1.msra.mxu0 0.0
  %1197 = vmatprep.subr.mxu0 0.0
  %1198 = vmatpush1.msra.mxu0 0.0
  %1199 = vmatprep.subr.mxu0 0.0
  %1200 = vmatpush1.msra.mxu0 0.0
  %1201 = vmatprep.subr.mxu0 0.0
  %1202 = vmatpush1.msra.mxu0 0.0
  %1203 = vmatprep.subr.mxu0 0.0
  %1204 = vmatpush1.msra.mxu0 0.0
  %1205 = vmatprep.subr.mxu0 0.0
  %1206 = vmatpush1.msra.mxu0 0.0
  %1207 = vmatprep.subr.mxu0 0.0
  %1208 = vmatpush1.msra.mxu0 0.0
  %1209 = vmatprep.subr.mxu0 0.0
  %1210 = vmatpush1.msra.mxu0 0.0
  %1211 = vmatprep.subr.mxu0 0.0
  %1212 = vmatpush1.msra.mxu0 0.0
  %1213 = vmatprep.subr.mxu0 0.0
  %1214 = vmatpush1.msra.mxu0 0.0
  %1215 = vmatprep.subr.mxu0 0.0
  %1216 = vmatpush1.msra.mxu0 0.0
  %1217 = vmatprep.subr.mxu0 0.0
  %1218 = vmatpush1.msra.mxu0 0.0
  %1219 = vmatprep.subr.mxu0 0.0
  %1220 = vmatpush1.msra.mxu0 0.0
  %1221 = vmatprep.mubr.f32.mxu0 0.0
  %1222 = vmatmul.mubr.f32.gmra.mrb[0].mxu0 %v1155
  %v1223 = vpop.f32.mrb[0].mxu0
  %v1224 = vadd.f32 0.0, %v1223
  %v1225 = vpop.f32.mrb[0].mxu0
  %1226 = vdwg.mxu0
  %v1227 = vadd.f32 %v199, %v1224
  %v1228 = vxor.u32 %v1227, 2147483648
  %v1229 = vmul.f32 %v1228, 1.442695
  %v1230 = vpow.pop %v1229
  %v1231 = vadd.f32 %v1230, 1.0
  %v1232 = vrcp.pop %v1231
  %v1233 = vmul.f32 1.0, %v1232
  %v1234 = vtanh.pop %v1227
  %v1235 = vmul.f32 %v1233, %v1042
  %1237 = vrot.lane.b32.xlu0 %v1234, 96
  %v1238 = vpop.permute.xlu0 %1237
  %v1240 = vmul.f32 %v1233, %v1238
  %1242 = vrot.lane.b32.xlu0 %v1240, 16
  %v1243 = vpop.permute.xlu0 %1242
  %v1245 = vadd.f32 %v1235, %v1243
  %v1246 = vtanh.pop %v1245
  %1248 = vrot.lane.b32.xlu0 %v1246, 32
  %v1249 = vpop.permute.xlu0 %1248
  %v1251 = vmul.f32 %v1233, %v1249
  %1253 = vrot.lane.b32.xlu0 %v1251, 80
  %v1254 = vpop.permute.xlu0 %1253
  %1257 = vrot.lane.b32.xlu0 %v1154, 96
  %v1258 = vpop.permute.xlu0 %1257
  %v1260 = vsel %vm87, %v1254, %v1258
  %v1262 = vsel %vm448, %v1260, 0
  %1264 = vmatprep.subr.mxu0 0.0
  %1265 = vmatpush1.msra.mxu0 %v68
  %1266 = vmatprep.subr.mxu0 0.0
  %1267 = vmatpush1.msra.mxu0 %v69
  %1268 = vmatprep.subr.mxu0 0.0
  %1269 = vmatpush1.msra.mxu0 %v70
  %1270 = vmatprep.subr.mxu0 0.0
  %1271 = vmatpush1.msra.mxu0 %v71
  %1272 = vmatprep.subr.mxu0 0.0
  %1273 = vmatpush1.msra.mxu0 0.0
  %1274 = vmatprep.subr.mxu0 0.0
  %1275 = vmatpush1.msra.mxu0 0.0
  %1276 = vmatprep.subr.mxu0 0.0
  %1277 = vmatpush1.msra.mxu0 0.0
  %1278 = vmatprep.subr.mxu0 0.0
  %1279 = vmatpush1.msra.mxu0 0.0
  %1280 = vmatprep.subr.mxu0 0.0
  %1281 = vmatpush1.msra.mxu0 0.0
  %1282 = vmatprep.subr.mxu0 0.0
  %1283 = vmatpush1.msra.mxu0 0.0
  %1284 = vmatprep.subr.mxu0 0.0
  %1285 = vmatpush1.msra.mxu0 0.0
  %1286 = vmatprep.subr.mxu0 0.0
  %1287 = vmatpush1.msra.mxu0 0.0
  %1288 = vmatprep.subr.mxu0 0.0
  %1289 = vmatpush1.msra.mxu0 0.0
  %1290 = vmatprep.subr.mxu0 0.0
  %1291 = vmatpush1.msra.mxu0 0.0
  %1292 = vmatprep.subr.mxu0 0.0
  %1293 = vmatpush1.msra.mxu0 0.0
  %1294 = vmatprep.subr.mxu0 0.0
  %1295 = vmatpush1.msra.mxu0 0.0
  %1296 = vmatprep.subr.mxu0 0.0
  %1297 = vmatpush1.msra.mxu0 0.0
  %1298 = vmatprep.subr.mxu0 0.0
  %1299 = vmatpush1.msra.mxu0 0.0
  %1300 = vmatprep.subr.mxu0 0.0
  %1301 = vmatpush1.msra.mxu0 0.0
  %1302 = vmatprep.subr.mxu0 0.0
  %1303 = vmatpush1.msra.mxu0 0.0
  %1304 = vmatprep.subr.mxu0 0.0
  %1305 = vmatpush1.msra.mxu0 0.0
  %1306 = vmatprep.subr.mxu0 0.0
  %1307 = vmatpush1.msra.mxu0 0.0
  %1308 = vmatprep.subr.mxu0 0.0
  %1309 = vmatpush1.msra.mxu0 0.0
  %1310 = vmatprep.subr.mxu0 0.0
  %1311 = vmatpush1.msra.mxu0 0.0
  %1312 = vmatprep.subr.mxu0 0.0
  %1313 = vmatpush1.msra.mxu0 0.0
  %1314 = vmatprep.subr.mxu0 0.0
  %1315 = vmatpush1.msra.mxu0 0.0
  %1316 = vmatprep.subr.mxu0 0.0
  %1317 = vmatpush1.msra.mxu0 0.0
  %1318 = vmatprep.subr.mxu0 0.0
  %1319 = vmatpush1.msra.mxu0 0.0
  %1320 = vmatprep.subr.mxu0 0.0
  %1321 = vmatpush1.msra.mxu0 0.0
  %1322 = vmatprep.subr.mxu0 0.0
  %1323 = vmatpush1.msra.mxu0 0.0
  %1324 = vmatprep.subr.mxu0 0.0
  %1325 = vmatpush1.msra.mxu0 0.0
  %1326 = vmatprep.subr.mxu0 0.0
  %1327 = vmatpush1.msra.mxu0 0.0
  %1328 = vmatprep.mubr.f32.mxu0 0.0
  %1329 = vmatmul.mubr.f32.gmra.mrb[0].mxu0 %v1262
  %v1330 = vpop.f32.mrb[0].mxu0
  %v1331 = vadd.f32 %v446, %v1330
  %v1332 = vpop.f32.mrb[0].mxu0
  %1333 = vdwg.mxu0
  %v1334 = vxor.u32 %v1331, 2147483648
  %v1335 = vmul.f32 %v1334, 1.442695
  %v1336 = vpow.pop %v1335
  %v1337 = vadd.f32 %v1336, 1.0
  %v1338 = vrcp.pop %v1337
  %v1339 = vmul.f32 1.0, %v1338
  %v1340 = vtanh.pop %v1331
  %v1341 = vmul.f32 %v1339, %v1148
  %1343 = vrot.lane.b32.xlu0 %v1340, 96
  %v1344 = vpop.permute.xlu0 %1343
  %v1346 = vmul.f32 %v1339, %v1344
  %1348 = vrot.lane.b32.xlu0 %v1346, 16
  %v1349 = vpop.permute.xlu0 %1348
  %v1351 = vadd.f32 %v1341, %v1349
  %v1352 = vtanh.pop %v1351
  %1354 = vrot.lane.b32.xlu0 %v1352, 32
  %v1355 = vpop.permute.xlu0 %1354
  %v1357 = vmul.f32 %v1339, %v1355
  %v1358 = vsel %vm87, %v1254, 0
  %1360 = vmatprep.subr.mxu0 0.0
  %1361 = vmatpush1.msra.mxu0 %v64
  %1362 = vmatprep.subr.mxu0 0.0
  %1363 = vmatpush1.msra.mxu0 %v65
  %1364 = vmatprep.subr.mxu0 0.0
  %1365 = vmatpush1.msra.mxu0 0.0
  %1366 = vmatprep.subr.mxu0 0.0
  %1367 = vmatpush1.msra.mxu0 0.0
  %1368 = vmatprep.subr.mxu0 0.0
  %1369 = vmatpush1.msra.mxu0 0.0
  %1370 = vmatprep.subr.mxu0 0.0
  %1371 = vmatpush1.msra.mxu0 0.0
  %1372 = vmatprep.subr.mxu0 0.0
  %1373 = vmatpush1.msra.mxu0 0.0
  %1374 = vmatprep.subr.mxu0 0.0
  %1375 = vmatpush1.msra.mxu0 0.0
  %1376 = vmatprep.subr.mxu0 0.0
  %1377 = vmatpush1.msra.mxu0 0.0
  %1378 = vmatprep.subr.mxu0 0.0
  %1379 = vmatpush1.msra.mxu0 0.0
  %1380 = vmatprep.subr.mxu0 0.0
  %1381 = vmatpush1.msra.mxu0 0.0
  %1382 = vmatprep.subr.mxu0 0.0
  %1383 = vmatpush1.msra.mxu0 0.0
  %1384 = vmatprep.subr.mxu0 0.0
  %1385 = vmatpush1.msra.mxu0 0.0
  %1386 = vmatprep.subr.mxu0 0.0
  %1387 = vmatpush1.msra.mxu0 0.0
  %1388 = vmatprep.subr.mxu0 0.0
  %1389 = vmatpush1.msra.mxu0 0.0
  %1390 = vmatprep.subr.mxu0 0.0
  %1391 = vmatpush1.msra.mxu0 0.0
  %1392 = vmatprep.subr.mxu0 0.0
  %1393 = vmatpush1.msra.mxu0 0.0
  %1394 = vmatprep.subr.mxu0 0.0
  %1395 = vmatpush1.msra.mxu0 0.0
  %1396 = vmatprep.subr.mxu0 0.0
  %1397 = vmatpush1.msra.mxu0 0.0
  %1398 = vmatprep.subr.mxu0 0.0
  %1399 = vmatpush1.msra.mxu0 0.0
  %1400 = vmatprep.subr.mxu0 0.0
  %1401 = vmatpush1.msra.mxu0 0.0
  %1402 = vmatprep.subr.mxu0 0.0
  %1403 = vmatpush1.msra.mxu0 0.0
  %1404 = vmatprep.subr.mxu0 0.0
  %1405 = vmatpush1.msra.mxu0 0.0
  %1406 = vmatprep.subr.mxu0 0.0
  %1407 = vmatpush1.msra.mxu0 0.0
  %1408 = vmatprep.subr.mxu0 0.0
  %1409 = vmatpush1.msra.mxu0 0.0
  %1410 = vmatprep.subr.mxu0 0.0
  %1411 = vmatpush1.msra.mxu0 0.0
  %1412 = vmatprep.subr.mxu0 0.0
  %1413 = vmatpush1.msra.mxu0 0.0
  %1414 = vmatprep.subr.mxu0 0.0
  %1415 = vmatpush1.msra.mxu0 0.0
  %1416 = vmatprep.subr.mxu0 0.0
  %1417 = vmatpush1.msra.mxu0 0.0
  %1418 = vmatprep.subr.mxu0 0.0
  %1419 = vmatpush1.msra.mxu0 0.0
  %1420 = vmatprep.subr.mxu0 0.0
  %1421 = vmatpush1.msra.mxu0 0.0
  %1422 = vmatprep.subr.mxu0 0.0
  %1423 = vmatpush1.msra.mxu0 0.0
  %1424 = vmatprep.mubr.f32.mxu0 0.0
  %1425 = vmatmul.mubr.f32.gmra.mrb[0].mxu0 %v1358
  %v1426 = vpop.f32.mrb[0].mxu0
  %v1427 = vadd.f32 0.0, %v1426
  %v1428 = vpop.f32.mrb[0].mxu0
  %1429 = vdwg.mxu0
  %v1430 = vadd.f32 %v204, %v1427
  %v1431 = vxor.u32 %v1430, 2147483648
  %v1432 = vmul.f32 %v1431, 1.442695
  %v1433 = vpow.pop %v1432
  %v1434 = vadd.f32 %v1433, 1.0
  %v1435 = vrcp.pop %v1434
  %v1436 = vmul.f32 1.0, %v1435
  %v1437 = vtanh.pop %v1430
  %v1438 = vmul.f32 %v1436, %v1245
  %1440 = vrot.lane.b32.xlu0 %v1437, 96
  %v1441 = vpop.permute.xlu0 %1440
  %v1443 = vmul.f32 %v1436, %v1441
  %1445 = vrot.lane.b32.xlu0 %v1443, 16
  %v1446 = vpop.permute.xlu0 %1445
  %v1448 = vadd.f32 %v1438, %v1446
  %v1449 = vtanh.pop %v1448
  %1451 = vrot.lane.b32.xlu0 %v1449, 32
  %v1452 = vpop.permute.xlu0 %1451
  %v1454 = vmul.f32 %v1436, %v1452
  %1456 = vrot.lane.b32.xlu0 %v1454, 80
  %v1457 = vpop.permute.xlu0 %1456
  %1460 = vrot.lane.b32.xlu0 %v1357, 96
  %v1461 = vpop.permute.xlu0 %1460
  %v1463 = vsel %vm87, %v1457, %v1461
  %v1465 = vsel %vm448, %v1463, 0
  %1467 = vmatprep.subr.mxu0 0.0
  %1468 = vmatpush1.msra.mxu0 %v68
  %1469 = vmatprep.subr.mxu0 0.0
  %1470 = vmatpush1.msra.mxu0 %v69
  %1471 = vmatprep.subr.mxu0 0.0
  %1472 = vmatpush1.msra.mxu0 %v70
  %1473 = vmatprep.subr.mxu0 0.0
  %1474 = vmatpush1.msra.mxu0 %v71
  %1475 = vmatprep.subr.mxu0 0.0
  %1476 = vmatpush1.msra.mxu0 0.0
  %1477 = vmatprep.subr.mxu0 0.0
  %1478 = vmatpush1.msra.mxu0 0.0
  %1479 = vmatprep.subr.mxu0 0.0
  %1480 = vmatpush1.msra.mxu0 0.0
  %1481 = vmatprep.subr.mxu0 0.0
  %1482 = vmatpush1.msra.mxu0 0.0
  %1483 = vmatprep.subr.mxu0 0.0
  %1484 = vmatpush1.msra.mxu0 0.0
  %1485 = vmatprep.subr.mxu0 0.0
  %1486 = vmatpush1.msra.mxu0 0.0
  %1487 = vmatprep.subr.mxu0 0.0
  %1488 = vmatpush1.msra.mxu0 0.0
  %1489 = vmatprep.subr.mxu0 0.0
  %1490 = vmatpush1.msra.mxu0 0.0
  %1491 = vmatprep.subr.mxu0 0.0
  %1492 = vmatpush1.msra.mxu0 0.0
  %1493 = vmatprep.subr.mxu0 0.0
  %1494 = vmatpush1.msra.mxu0 0.0
  %1495 = vmatprep.subr.mxu0 0.0
  %1496 = vmatpush1.msra.mxu0 0.0
  %1497 = vmatprep.subr.mxu0 0.0
  %1498 = vmatpush1.msra.mxu0 0.0
  %1499 = vmatprep.subr.mxu0 0.0
  %1500 = vmatpush1.msra.mxu0 0.0
  %1501 = vmatprep.subr.mxu0 0.0
  %1502 = vmatpush1.msra.mxu0 0.0
  %1503 = vmatprep.subr.mxu0 0.0
  %1504 = vmatpush1.msra.mxu0 0.0
  %1505 = vmatprep.subr.mxu0 0.0
  %1506 = vmatpush1.msra.mxu0 0.0
  %1507 = vmatprep.subr.mxu0 0.0
  %1508 = vmatpush1.msra.mxu0 0.0
  %1509 = vmatprep.subr.mxu0 0.0
  %1510 = vmatpush1.msra.mxu0 0.0
  %1511 = vmatprep.subr.mxu0 0.0
  %1512 = vmatpush1.msra.mxu0 0.0
  %1513 = vmatprep.subr.mxu0 0.0
  %1514 = vmatpush1.msra.mxu0 0.0
  %1515 = vmatprep.subr.mxu0 0.0
  %1516 = vmatpush1.msra.mxu0 0.0
  %1517 = vmatprep.subr.mxu0 0.0
  %1518 = vmatpush1.msra.mxu0 0.0
  %1519 = vmatprep.subr.mxu0 0.0
  %1520 = vmatpush1.msra.mxu0 0.0
  %1521 = vmatprep.subr.mxu0 0.0
  %1522 = vmatpush1.msra.mxu0 0.0
  %1523 = vmatprep.subr.mxu0 0.0
  %1524 = vmatpush1.msra.mxu0 0.0
  %1525 = vmatprep.subr.mxu0 0.0
  %1526 = vmatpush1.msra.mxu0 0.0
  %1527 = vmatprep.subr.mxu0 0.0
  %1528 = vmatpush1.msra.mxu0 0.0
  %1529 = vmatprep.subr.mxu0 0.0
  %1530 = vmatpush1.msra.mxu0 0.0
  %1531 = vmatprep.mubr.f32.mxu0 0.0
  %1532 = vmatmul.mubr.f32.gmra.mrb[0].mxu0 %v1465
  %v1533 = vpop.f32.mrb[0].mxu0
  %v1534 = vadd.f32 %v446, %v1533
  %v1535 = vpop.f32.mrb[0].mxu0
  %1536 = vdwg.mxu0
  %v1537 = vxor.u32 %v1534, 2147483648
  %v1538 = vmul.f32 %v1537, 1.442695
  %v1539 = vpow.pop %v1538
  %v1540 = vadd.f32 %v1539, 1.0
  %v1541 = vrcp.pop %v1540
  %v1542 = vmul.f32 1.0, %v1541
  %v1543 = vtanh.pop %v1534
  %v1544 = vmul.f32 %v1542, %v1351
  %1546 = vrot.lane.b32.xlu0 %v1543, 96
  %v1547 = vpop.permute.xlu0 %1546
  %v1549 = vmul.f32 %v1542, %v1547
  %1551 = vrot.lane.b32.xlu0 %v1549, 16
  %v1552 = vpop.permute.xlu0 %1551
  %v1554 = vadd.f32 %v1544, %v1552
  %v1555 = vtanh.pop %v1554
  %1557 = vrot.lane.b32.xlu0 %v1555, 32
  %v1558 = vpop.permute.xlu0 %1557
  %v1560 = vmul.f32 %v1542, %v1558
  %v1561 = vsel %vm87, %v1457, 0
  %1563 = vmatprep.subr.mxu0 0.0
  %1564 = vmatpush1.msra.mxu0 %v64
  %1565 = vmatprep.subr.mxu0 0.0
  %1566 = vmatpush1.msra.mxu0 %v65
  %1567 = vmatprep.subr.mxu0 0.0
  %1568 = vmatpush1.msra.mxu0 0.0
  %1569 = vmatprep.subr.mxu0 0.0
  %1570 = vmatpush1.msra.mxu0 0.0
  %1571 = vmatprep.subr.mxu0 0.0
  %1572 = vmatpush1.msra.mxu0 0.0
  %1573 = vmatprep.subr.mxu0 0.0
  %1574 = vmatpush1.msra.mxu0 0.0
  %1575 = vmatprep.subr.mxu0 0.0
  %1576 = vmatpush1.msra.mxu0 0.0
  %1577 = vmatprep.subr.mxu0 0.0
  %1578 = vmatpush1.msra.mxu0 0.0
  %1579 = vmatprep.subr.mxu0 0.0
  %1580 = vmatpush1.msra.mxu0 0.0
  %1581 = vmatprep.subr.mxu0 0.0
  %1582 = vmatpush1.msra.mxu0 0.0
  %1583 = vmatprep.subr.mxu0 0.0
  %1584 = vmatpush1.msra.mxu0 0.0
  %1585 = vmatprep.subr.mxu0 0.0
  %1586 = vmatpush1.msra.mxu0 0.0
  %1587 = vmatprep.subr.mxu0 0.0
  %1588 = vmatpush1.msra.mxu0 0.0
  %1589 = vmatprep.subr.mxu0 0.0
  %1590 = vmatpush1.msra.mxu0 0.0
  %1591 = vmatprep.subr.mxu0 0.0
  %1592 = vmatpush1.msra.mxu0 0.0
  %1593 = vmatprep.subr.mxu0 0.0
  %1594 = vmatpush1.msra.mxu0 0.0
  %1595 = vmatprep.subr.mxu0 0.0
  %1596 = vmatpush1.msra.mxu0 0.0
  %1597 = vmatprep.subr.mxu0 0.0
  %1598 = vmatpush1.msra.mxu0 0.0
  %1599 = vmatprep.subr.mxu0 0.0
  %1600 = vmatpush1.msra.mxu0 0.0
  %1601 = vmatprep.subr.mxu0 0.0
  %1602 = vmatpush1.msra.mxu0 0.0
  %1603 = vmatprep.subr.mxu0 0.0
  %1604 = vmatpush1.msra.mxu0 0.0
  %1605 = vmatprep.subr.mxu0 0.0
  %1606 = vmatpush1.msra.mxu0 0.0
  %1607 = vmatprep.subr.mxu0 0.0
  %1608 = vmatpush1.msra.mxu0 0.0
  %1609 = vmatprep.subr.mxu0 0.0
  %1610 = vmatpush1.msra.mxu0 0.0
  %1611 = vmatprep.subr.mxu0 0.0
  %1612 = vmatpush1.msra.mxu0 0.0
  %1613 = vmatprep.subr.mxu0 0.0
  %1614 = vmatpush1.msra.mxu0 0.0
  %1615 = vmatprep.subr.mxu0 0.0
  %1616 = vmatpush1.msra.mxu0 0.0
  %1617 = vmatprep.subr.mxu0 0.0
  %1618 = vmatpush1.msra.mxu0 0.0
  %1619 = vmatprep.subr.mxu0 0.0
  %1620 = vmatpush1.msra.mxu0 0.0
  %1621 = vmatprep.subr.mxu0 0.0
  %1622 = vmatpush1.msra.mxu0 0.0
  %1623 = vmatprep.subr.mxu0 0.0
  %1624 = vmatpush1.msra.mxu0 0.0
  %1625 = vmatprep.subr.mxu0 0.0
  %1626 = vmatpush1.msra.mxu0 0.0
  %1627 = vmatprep.mubr.f32.mxu0 0.0
  %1628 = vmatmul.mubr.f32.gmra.mrb[0].mxu0 %v1561
  %v1629 = vpop.f32.mrb[0].mxu0
  %v1630 = vadd.f32 0.0, %v1629
  %v1631 = vpop.f32.mrb[0].mxu0
  %1632 = vdwg.mxu0
  %v1633 = vadd.f32 %v209, %v1630
  %v1634 = vxor.u32 %v1633, 2147483648
  %v1635 = vmul.f32 %v1634, 1.442695
  %v1636 = vpow.pop %v1635
  %v1637 = vadd.f32 %v1636, 1.0
  %v1638 = vrcp.pop %v1637
  %v1639 = vmul.f32 1.0, %v1638
  %v1640 = vtanh.pop %v1633
  %v1641 = vmul.f32 %v1639, %v1448
  %1643 = vrot.lane.b32.xlu0 %v1640, 96
  %v1644 = vpop.permute.xlu0 %1643
  %v1646 = vmul.f32 %v1639, %v1644
  %1648 = vrot.lane.b32.xlu0 %v1646, 16
  %v1649 = vpop.permute.xlu0 %1648
  %v1651 = vadd.f32 %v1641, %v1649
  %v1652 = vtanh.pop %v1651
  %1654 = vrot.lane.b32.xlu0 %v1652, 32
  %v1655 = vpop.permute.xlu0 %1654
  %v1657 = vmul.f32 %v1639, %v1655
  %1659 = vrot.lane.b32.xlu0 %v1657, 80
  %v1660 = vpop.permute.xlu0 %1659
  %1663 = vrot.lane.b32.xlu0 %v1560, 96
  %v1664 = vpop.permute.xlu0 %1663
  %v1666 = vsel %vm87, %v1660, %v1664
  %v1668 = vsel %vm448, %v1666, 0
  %1670 = vmatprep.subr.mxu0 0.0
  %1671 = vmatpush1.msra.mxu0 %v68
  %1672 = vmatprep.subr.mxu0 0.0
  %1673 = vmatpush1.msra.mxu0 %v69
  %1674 = vmatprep.subr.mxu0 0.0
  %1675 = vmatpush1.msra.mxu0 %v70
  %1676 = vmatprep.subr.mxu0 0.0
  %1677 = vmatpush1.msra.mxu0 %v71
  %1678 = vmatprep.subr.mxu0 0.0
  %1679 = vmatpush1.msra.mxu0 0.0
  %1680 = vmatprep.subr.mxu0 0.0
  %1681 = vmatpush1.msra.mxu0 0.0
  %1682 = vmatprep.subr.mxu0 0.0
  %1683 = vmatpush1.msra.mxu0 0.0
  %1684 = vmatprep.subr.mxu0 0.0
  %1685 = vmatpush1.msra.mxu0 0.0
  %1686 = vmatprep.subr.mxu0 0.0
  %1687 = vmatpush1.msra.mxu0 0.0
  %1688 = vmatprep.subr.mxu0 0.0
  %1689 = vmatpush1.msra.mxu0 0.0
  %1690 = vmatprep.subr.mxu0 0.0
  %1691 = vmatpush1.msra.mxu0 0.0
  %1692 = vmatprep.subr.mxu0 0.0
  %1693 = vmatpush1.msra.mxu0 0.0
  %1694 = vmatprep.subr.mxu0 0.0
  %1695 = vmatpush1.msra.mxu0 0.0
  %1696 = vmatprep.subr.mxu0 0.0
  %1697 = vmatpush1.msra.mxu0 0.0
  %1698 = vmatprep.subr.mxu0 0.0
  %1699 = vmatpush1.msra.mxu0 0.0
  %1700 = vmatprep.subr.mxu0 0.0
  %1701 = vmatpush1.msra.mxu0 0.0
  %1702 = vmatprep.subr.mxu0 0.0
  %1703 = vmatpush1.msra.mxu0 0.0
  %1704 = vmatprep.subr.mxu0 0.0
  %1705 = vmatpush1.msra.mxu0 0.0
  %1706 = vmatprep.subr.mxu0 0.0
  %1707 = vmatpush1.msra.mxu0 0.0
  %1708 = vmatprep.subr.mxu0 0.0
  %1709 = vmatpush1.msra.mxu0 0.0
  %1710 = vmatprep.subr.mxu0 0.0
  %1711 = vmatpush1.msra.mxu0 0.0
  %1712 = vmatprep.subr.mxu0 0.0
  %1713 = vmatpush1.msra.mxu0 0.0
  %1714 = vmatprep.subr.mxu0 0.0
  %1715 = vmatpush1.msra.mxu0 0.0
  %1716 = vmatprep.subr.mxu0 0.0
  %1717 = vmatpush1.msra.mxu0 0.0
  %1718 = vmatprep.subr.mxu0 0.0
  %1719 = vmatpush1.msra.mxu0 0.0
  %1720 = vmatprep.subr.mxu0 0.0
  %1721 = vmatpush1.msra.mxu0 0.0
  %1722 = vmatprep.subr.mxu0 0.0
  %1723 = vmatpush1.msra.mxu0 0.0
  %1724 = vmatprep.subr.mxu0 0.0
  %1725 = vmatpush1.msra.mxu0 0.0
  %1726 = vmatprep.subr.mxu0 0.0
  %1727 = vmatpush1.msra.mxu0 0.0
  %1728 = vmatprep.subr.mxu0 0.0
  %1729 = vmatpush1.msra.mxu0 0.0
  %1730 = vmatprep.subr.mxu0 0.0
  %1731 = vmatpush1.msra.mxu0 0.0
  %1732 = vmatprep.subr.mxu0 0.0
  %1733 = vmatpush1.msra.mxu0 0.0
  %1734 = vmatprep.mubr.f32.mxu0 0.0
  %1735 = vmatmul.mubr.f32.gmra.mrb[0].mxu0 %v1668
  %v1736 = vpop.f32.mrb[0].mxu0
  %v1737 = vadd.f32 %v446, %v1736
  %v1738 = vpop.f32.mrb[0].mxu0
  %1739 = vdwg.mxu0
  %v1740 = vxor.u32 %v1737, 2147483648
  %v1741 = vmul.f32 %v1740, 1.442695
  %v1742 = vpow.pop %v1741
  %v1743 = vadd.f32 %v1742, 1.0
  %v1744 = vrcp.pop %v1743
  %v1745 = vmul.f32 1.0, %v1744
  %v1746 = vtanh.pop %v1737
  %v1747 = vmul.f32 %v1745, %v1554
  %1749 = vrot.lane.b32.xlu0 %v1746, 96
  %v1750 = vpop.permute.xlu0 %1749
  %v1752 = vmul.f32 %v1745, %v1750
  %1754 = vrot.lane.b32.xlu0 %v1752, 16
  %v1755 = vpop.permute.xlu0 %1754
  %v1757 = vadd.f32 %v1747, %v1755
  %v1758 = vtanh.pop %v1757
  %1760 = vrot.lane.b32.xlu0 %v1758, 32
  %v1761 = vpop.permute.xlu0 %1760
  %v1763 = vmul.f32 %v1745, %v1761
  %v1764 = vsel %vm87, %v1660, 0
  %1766 = vmatprep.subr.mxu0 0.0
  %1767 = vmatpush1.msra.mxu0 %v64
  %1768 = vmatprep.subr.mxu0 0.0
  %1769 = vmatpush1.msra.mxu0 %v65
  %1770 = vmatprep.subr.mxu0 0.0
  %1771 = vmatpush1.msra.mxu0 0.0
  %1772 = vmatprep.subr.mxu0 0.0
  %1773 = vmatpush1.msra.mxu0 0.0
  %1774 = vmatprep.subr.mxu0 0.0
  %1775 = vmatpush1.msra.mxu0 0.0
  %1776 = vmatprep.subr.mxu0 0.0
  %1777 = vmatpush1.msra.mxu0 0.0
  %1778 = vmatprep.subr.mxu0 0.0
  %1779 = vmatpush1.msra.mxu0 0.0
  %1780 = vmatprep.subr.mxu0 0.0
  %1781 = vmatpush1.msra.mxu0 0.0
  %1782 = vmatprep.subr.mxu0 0.0
  %1783 = vmatpush1.msra.mxu0 0.0
  %1784 = vmatprep.subr.mxu0 0.0
  %1785 = vmatpush1.msra.mxu0 0.0
  %1786 = vmatprep.subr.mxu0 0.0
  %1787 = vmatpush1.msra.mxu0 0.0
  %1788 = vmatprep.subr.mxu0 0.0
  %1789 = vmatpush1.msra.mxu0 0.0
  %1790 = vmatprep.subr.mxu0 0.0
  %1791 = vmatpush1.msra.mxu0 0.0
  %1792 = vmatprep.subr.mxu0 0.0
  %1793 = vmatpush1.msra.mxu0 0.0
  %1794 = vmatprep.subr.mxu0 0.0
  %1795 = vmatpush1.msra.mxu0 0.0
  %1796 = vmatprep.subr.mxu0 0.0
  %1797 = vmatpush1.msra.mxu0 0.0
  %1798 = vmatprep.subr.mxu0 0.0
  %1799 = vmatpush1.msra.mxu0 0.0
  %1800 = vmatprep.subr.mxu0 0.0
  %1801 = vmatpush1.msra.mxu0 0.0
  %1802 = vmatprep.subr.mxu0 0.0
  %1803 = vmatpush1.msra.mxu0 0.0
  %1804 = vmatprep.subr.mxu0 0.0
  %1805 = vmatpush1.msra.mxu0 0.0
  %1806 = vmatprep.subr.mxu0 0.0
  %1807 = vmatpush1.msra.mxu0 0.0
  %1808 = vmatprep.subr.mxu0 0.0
  %1809 = vmatpush1.msra.mxu0 0.0
  %1810 = vmatprep.subr.mxu0 0.0
  %1811 = vmatpush1.msra.mxu0 0.0
  %1812 = vmatprep.subr.mxu0 0.0
  %1813 = vmatpush1.msra.mxu0 0.0
  %1814 = vmatprep.subr.mxu0 0.0
  %1815 = vmatpush1.msra.mxu0 0.0
  %1816 = vmatprep.subr.mxu0 0.0
  %1817 = vmatpush1.msra.mxu0 0.0
  %1818 = vmatprep.subr.mxu0 0.0
  %1819 = vmatpush1.msra.mxu0 0.0
  %1820 = vmatprep.subr.mxu0 0.0
  %1821 = vmatpush1.msra.mxu0 0.0
  %1822 = vmatprep.subr.mxu0 0.0
  %1823 = vmatpush1.msra.mxu0 0.0
  %1824 = vmatprep.subr.mxu0 0.0
  %1825 = vmatpush1.msra.mxu0 0.0
  %1826 = vmatprep.subr.mxu0 0.0
  %1827 = vmatpush1.msra.mxu0 0.0
  %1828 = vmatprep.subr.mxu0 0.0
  %1829 = vmatpush1.msra.mxu0 0.0
  %1830 = vmatprep.mubr.f32.mxu0 0.0
  %1831 = vmatmul.mubr.f32.gmra.mrb[0].mxu0 %v1764
  %v1832 = vpop.f32.mrb[0].mxu0
  %v1833 = vadd.f32 0.0, %v1832
  %v1834 = vpop.f32.mrb[0].mxu0
  %1835 = vdwg.mxu0
  %v1836 = vadd.f32 %v214, %v1833
  %v1837 = vxor.u32 %v1836, 2147483648
  %v1838 = vmul.f32 %v1837, 1.442695
  %v1839 = vpow.pop %v1838
  %v1840 = vadd.f32 %v1839, 1.0
  %v1841 = vrcp.pop %v1840
  %v1842 = vmul.f32 1.0, %v1841
  %v1843 = vtanh.pop %v1836
  %v1844 = vmul.f32 %v1842, %v1651
  %1846 = vrot.lane.b32.xlu0 %v1843, 96
  %v1847 = vpop.permute.xlu0 %1846
  %v1849 = vmul.f32 %v1842, %v1847
  %1851 = vrot.lane.b32.xlu0 %v1849, 16
  %v1852 = vpop.permute.xlu0 %1851
  %v1854 = vadd.f32 %v1844, %v1852
  %v1855 = vtanh.pop %v1854
  %1857 = vrot.lane.b32.xlu0 %v1855, 32
  %v1858 = vpop.permute.xlu0 %1857
  %v1860 = vmul.f32 %v1842, %v1858
  %1862 = vrot.lane.b32.xlu0 %v1860, 80
  %v1863 = vpop.permute.xlu0 %1862
  %1866 = vrot.lane.b32.xlu0 %v1763, 96
  %v1867 = vpop.permute.xlu0 %1866
  %v1869 = vsel %vm87, %v1863, %v1867
  %v1871 = vsel %vm448, %v1869, 0
  %1873 = vmatprep.subr.mxu0 0.0
  %1874 = vmatpush1.msra.mxu0 %v68
  %1875 = vmatprep.subr.mxu0 0.0
  %1876 = vmatpush1.msra.mxu0 %v69
  %1877 = vmatprep.subr.mxu0 0.0
  %1878 = vmatpush1.msra.mxu0 %v70
  %1879 = vmatprep.subr.mxu0 0.0
  %1880 = vmatpush1.msra.mxu0 %v71
  %1881 = vmatprep.subr.mxu0 0.0
  %1882 = vmatpush1.msra.mxu0 0.0
  %1883 = vmatprep.subr.mxu0 0.0
  %1884 = vmatpush1.msra.mxu0 0.0
  %1885 = vmatprep.subr.mxu0 0.0
  %1886 = vmatpush1.msra.mxu0 0.0
  %1887 = vmatprep.subr.mxu0 0.0
  %1888 = vmatpush1.msra.mxu0 0.0
  %1889 = vmatprep.subr.mxu0 0.0
  %1890 = vmatpush1.msra.mxu0 0.0
  %1891 = vmatprep.subr.mxu0 0.0
  %1892 = vmatpush1.msra.mxu0 0.0
  %1893 = vmatprep.subr.mxu0 0.0
  %1894 = vmatpush1.msra.mxu0 0.0
  %1895 = vmatprep.subr.mxu0 0.0
  %1896 = vmatpush1.msra.mxu0 0.0
  %1897 = vmatprep.subr.mxu0 0.0
  %1898 = vmatpush1.msra.mxu0 0.0
  %1899 = vmatprep.subr.mxu0 0.0
  %1900 = vmatpush1.msra.mxu0 0.0
  %1901 = vmatprep.subr.mxu0 0.0
  %1902 = vmatpush1.msra.mxu0 0.0
  %1903 = vmatprep.subr.mxu0 0.0
  %1904 = vmatpush1.msra.mxu0 0.0
  %1905 = vmatprep.subr.mxu0 0.0
  %1906 = vmatpush1.msra.mxu0 0.0
  %1907 = vmatprep.subr.mxu0 0.0
  %1908 = vmatpush1.msra.mxu0 0.0
  %1909 = vmatprep.subr.mxu0 0.0
  %1910 = vmatpush1.msra.mxu0 0.0
  %1911 = vmatprep.subr.mxu0 0.0
  %1912 = vmatpush1.msra.mxu0 0.0
  %1913 = vmatprep.subr.mxu0 0.0
  %1914 = vmatpush1.msra.mxu0 0.0
  %1915 = vmatprep.subr.mxu0 0.0
  %1916 = vmatpush1.msra.mxu0 0.0
  %1917 = vmatprep.subr.mxu0 0.0
  %1918 = vmatpush1.msra.mxu0 0.0
  %1919 = vmatprep.subr.mxu0 0.0
  %1920 = vmatpush1.msra.mxu0 0.0
  %1921 = vmatprep.subr.mxu0 0.0
  %1922 = vmatpush1.msra.mxu0 0.0
  %1923 = vmatprep.subr.mxu0 0.0
  %1924 = vmatpush1.msra.mxu0 0.0
  %1925 = vmatprep.subr.mxu0 0.0
  %1926 = vmatpush1.msra.mxu0 0.0
  %1927 = vmatprep.subr.mxu0 0.0
  %1928 = vmatpush1.msra.mxu0 0.0
  %1929 = vmatprep.subr.mxu0 0.0
  %1930 = vmatpush1.msra.mxu0 0.0
  %1931 = vmatprep.subr.mxu0 0.0
  %1932 = vmatpush1.msra.mxu0 0.0
  %1933 = vmatprep.subr.mxu0 0.0
  %1934 = vmatpush1.msra.mxu0 0.0
  %1935 = vmatprep.subr.mxu0 0.0
  %1936 = vmatpush1.msra.mxu0 0.0
  %1937 = vmatprep.mubr.f32.mxu0 0.0
  %1938 = vmatmul.mubr.f32.gmra.mrb[0].mxu0 %v1871
  %v1939 = vpop.f32.mrb[0].mxu0
  %v1940 = vadd.f32 %v446, %v1939
  %v1941 = vpop.f32.mrb[0].mxu0
  %1942 = vdwg.mxu0
  %v1943 = vxor.u32 %v1940, 2147483648
  %v1944 = vmul.f32 %v1943, 1.442695
  %v1945 = vpow.pop %v1944
  %v1946 = vadd.f32 %v1945, 1.0
  %v1947 = vrcp.pop %v1946
  %v1948 = vmul.f32 1.0, %v1947
  %v1949 = vtanh.pop %v1940
  %v1950 = vmul.f32 %v1948, %v1757
  %1952 = vrot.lane.b32.xlu0 %v1949, 96
  %v1953 = vpop.permute.xlu0 %1952
  %v1955 = vmul.f32 %v1948, %v1953
  %1957 = vrot.lane.b32.xlu0 %v1955, 16
  %v1958 = vpop.permute.xlu0 %1957
  %v1960 = vadd.f32 %v1950, %v1958
  %v1961 = vtanh.pop %v1960
  %1963 = vrot.lane.b32.xlu0 %v1961, 32
  %v1964 = vpop.permute.xlu0 %1963
  %v1966 = vmul.f32 %v1948, %v1964
  %v1967 = vsel %vm87, %v1863, 0
  %1969 = vmatprep.subr.mxu0 0.0
  %1970 = vmatpush1.msra.mxu0 %v66
  %1971 = vmatprep.subr.mxu0 0.0
  %1972 = vmatpush1.msra.mxu0 %v67
  %1973 = vmatprep.subr.mxu0 0.0
  %1974 = vmatpush1.msra.mxu0 0.0
  %1975 = vmatprep.subr.mxu0 0.0
  %1976 = vmatpush1.msra.mxu0 0.0
  %1977 = vmatprep.subr.mxu0 0.0
  %1978 = vmatpush1.msra.mxu0 0.0
  %1979 = vmatprep.subr.mxu0 0.0
  %1980 = vmatpush1.msra.mxu0 0.0
  %1981 = vmatprep.subr.mxu0 0.0
  %1982 = vmatpush1.msra.mxu0 0.0
  %1983 = vmatprep.subr.mxu0 0.0
  %1984 = vmatpush1.msra.mxu0 0.0
  %1985 = vmatprep.subr.mxu0 0.0
  %1986 = vmatpush1.msra.mxu0 0.0
  %1987 = vmatprep.subr.mxu0 0.0
  %1988 = vmatpush1.msra.mxu0 0.0
  %1989 = vmatprep.subr.mxu0 0.0
  %1990 = vmatpush1.msra.mxu0 0.0
  %1991 = vmatprep.subr.mxu0 0.0
  %1992 = vmatpush1.msra.mxu0 0.0
  %1993 = vmatprep.subr.mxu0 0.0
  %1994 = vmatpush1.msra.mxu0 0.0
  %1995 = vmatprep.subr.mxu0 0.0
  %1996 = vmatpush1.msra.mxu0 0.0
  %1997 = vmatprep.subr.mxu0 0.0
  %1998 = vmatpush1.msra.mxu0 0.0
  %1999 = vmatprep.subr.mxu0 0.0
  %2000 = vmatpush1.msra.mxu0 0.0
  %2001 = vmatprep.subr.mxu0 0.0
  %2002 = vmatpush1.msra.mxu0 0.0
  %2003 = vmatprep.subr.mxu0 0.0
  %2004 = vmatpush1.msra.mxu0 0.0
  %2005 = vmatprep.subr.mxu0 0.0
  %2006 = vmatpush1.msra.mxu0 0.0
  %2007 = vmatprep.subr.mxu0 0.0
  %2008 = vmatpush1.msra.mxu0 0.0
  %2009 = vmatprep.subr.mxu0 0.0
  %2010 = vmatpush1.msra.mxu0 0.0
  %2011 = vmatprep.subr.mxu0 0.0
  %2012 = vmatpush1.msra.mxu0 0.0
  %2013 = vmatprep.subr.mxu0 0.0
  %2014 = vmatpush1.msra.mxu0 0.0
  %2015 = vmatprep.subr.mxu0 0.0
  %2016 = vmatpush1.msra.mxu0 0.0
  %2017 = vmatprep.subr.mxu0 0.0
  %2018 = vmatpush1.msra.mxu0 0.0
  %2019 = vmatprep.subr.mxu0 0.0
  %2020 = vmatpush1.msra.mxu0 0.0
  %2021 = vmatprep.subr.mxu0 0.0
  %2022 = vmatpush1.msra.mxu0 0.0
  %2023 = vmatprep.subr.mxu0 0.0
  %2024 = vmatpush1.msra.mxu0 0.0
  %2025 = vmatprep.subr.mxu0 0.0
  %2026 = vmatpush1.msra.mxu0 0.0
  %2027 = vmatprep.subr.mxu0 0.0
  %2028 = vmatpush1.msra.mxu0 0.0
  %2029 = vmatprep.subr.mxu0 0.0
  %2030 = vmatpush1.msra.mxu0 0.0
  %2031 = vmatprep.subr.mxu0 0.0
  %2032 = vmatpush1.msra.mxu0 0.0
  %2033 = vmatprep.mubr.f32.mxu0 0.0
  %2034 = vmatmul.mubr.f32.gmra.mrb[0].mxu0 %v1967
  %v2035 = vpop.f32.mrb[0].mxu0
  %v2036 = vadd.f32 0.0, %v2035
  %v2037 = vpop.f32.mrb[0].mxu0
  %2038 = vdwg.mxu0
  %v2039 = vadd.f32 %v311, %v2036
  %v2040 = vxor.u32 %v2039, 2147483648
  %v2041 = vmul.f32 %v2040, 1.442695
  %v2042 = vpow.pop %v2041
  %v2043 = vadd.f32 %v2042, 1.0
  %v2044 = vrcp.pop %v2043
  %v2045 = vmul.f32 1.0, %v2044
  %v2046 = vtanh.pop %v2039
  %v2047 = vmul.f32 %v2045, %v1854
  %2049 = vrot.lane.b32.xlu0 %v2046, 96
  %v2050 = vpop.permute.xlu0 %2049
  %v2052 = vmul.f32 %v2045, %v2050
  %2054 = vrot.lane.b32.xlu0 %v2052, 16
  %v2055 = vpop.permute.xlu0 %2054
  %v2057 = vadd.f32 %v2047, %v2055
  %v2058 = vtanh.pop %v2057
  %2060 = vrot.lane.b32.xlu0 %v2058, 32
  %v2061 = vpop.permute.xlu0 %2060
  %v2063 = vmul.f32 %v2045, %v2061
  %2065 = vrot.lane.b32.xlu0 %v2063, 80
  %v2066 = vpop.permute.xlu0 %2065
  %2069 = vrot.lane.b32.xlu0 %v1966, 96
  %v2070 = vpop.permute.xlu0 %2069
  %v2072 = vsel %vm87, %v2066, %v2070
  %v2074 = vlaneseq
  %v2075 = vshrl.u32 %v2074, 7
  %v2076 = vsub.s32 0, %v2075
  %v2077 = vrot.slane %v77, %v2076
  %v2080 = vsel %vm448, %v2072, 0
  %2082 = vmatprep.subr.mxu0 0.0
  %2083 = vmatpush1.msra.mxu0 %v73
  %2084 = vmatprep.subr.mxu0 0.0
  %2085 = vmatpush1.msra.mxu0 %v74
  %2086 = vmatprep.subr.mxu0 0.0
  %2087 = vmatpush1.msra.mxu0 %v75
  %2088 = vmatprep.subr.mxu0 0.0
  %2089 = vmatpush1.msra.mxu0 %v76
  %2090 = vmatprep.subr.mxu0 0.0
  %2091 = vmatpush1.msra.mxu0 0.0
  %2092 = vmatprep.subr.mxu0 0.0
  %2093 = vmatpush1.msra.mxu0 0.0
  %2094 = vmatprep.subr.mxu0 0.0
  %2095 = vmatpush1.msra.mxu0 0.0
  %2096 = vmatprep.subr.mxu0 0.0
  %2097 = vmatpush1.msra.mxu0 0.0
  %2098 = vmatprep.subr.mxu0 0.0
  %2099 = vmatpush1.msra.mxu0 0.0
  %2100 = vmatprep.subr.mxu0 0.0
  %2101 = vmatpush1.msra.mxu0 0.0
  %2102 = vmatprep.subr.mxu0 0.0
  %2103 = vmatpush1.msra.mxu0 0.0
  %2104 = vmatprep.subr.mxu0 0.0
  %2105 = vmatpush1.msra.mxu0 0.0
  %2106 = vmatprep.subr.mxu0 0.0
  %2107 = vmatpush1.msra.mxu0 0.0
  %2108 = vmatprep.subr.mxu0 0.0
  %2109 = vmatpush1.msra.mxu0 0.0
  %2110 = vmatprep.subr.mxu0 0.0
  %2111 = vmatpush1.msra.mxu0 0.0
  %2112 = vmatprep.subr.mxu0 0.0
  %2113 = vmatpush1.msra.mxu0 0.0
  %2114 = vmatprep.subr.mxu0 0.0
  %2115 = vmatpush1.msra.mxu0 0.0
  %2116 = vmatprep.subr.mxu0 0.0
  %2117 = vmatpush1.msra.mxu0 0.0
  %2118 = vmatprep.subr.mxu0 0.0
  %2119 = vmatpush1.msra.mxu0 0.0
  %2120 = vmatprep.subr.mxu0 0.0
  %2121 = vmatpush1.msra.mxu0 0.0
  %2122 = vmatprep.subr.mxu0 0.0
  %2123 = vmatpush1.msra.mxu0 0.0
  %2124 = vmatprep.subr.mxu0 0.0
  %2125 = vmatpush1.msra.mxu0 0.0
  %2126 = vmatprep.subr.mxu0 0.0
  %2127 = vmatpush1.msra.mxu0 0.0
  %2128 = vmatprep.subr.mxu0 0.0
  %2129 = vmatpush1.msra.mxu0 0.0
  %2130 = vmatprep.subr.mxu0 0.0
  %2131 = vmatpush1.msra.mxu0 0.0
  %2132 = vmatprep.subr.mxu0 0.0
  %2133 = vmatpush1.msra.mxu0 0.0
  %2134 = vmatprep.subr.mxu0 0.0
  %2135 = vmatpush1.msra.mxu0 0.0
  %2136 = vmatprep.subr.mxu0 0.0
  %2137 = vmatpush1.msra.mxu0 0.0
  %2138 = vmatprep.subr.mxu0 0.0
  %2139 = vmatpush1.msra.mxu0 0.0
  %2140 = vmatprep.subr.mxu0 0.0
  %2141 = vmatpush1.msra.mxu0 0.0
  %2142 = vmatprep.subr.mxu0 0.0
  %2143 = vmatpush1.msra.mxu0 0.0
  %2144 = vmatprep.subr.mxu0 0.0
  %2145 = vmatpush1.msra.mxu0 0.0
  %2146 = vmatprep.mubr.f32.mxu0 0.0
  %2147 = vmatmul.mubr.f32.gmra.mrb[0].mxu0 %v2080
  %v2148 = vpop.f32.mrb[0].mxu0
  %v2149 = vadd.f32 %v2077, %v2148
  %v2150 = vpop.f32.mrb[0].mxu0
  %2151 = vdwg.mxu0
  %v2152 = vxor.u32 %v2149, 2147483648
  %v2153 = vmul.f32 %v2152, 1.442695
  %v2154 = vpow.pop %v2153
  %v2155 = vadd.f32 %v2154, 1.0
  %v2156 = vrcp.pop %v2155
  %v2157 = vmul.f32 1.0, %v2156
  %v2158 = vtanh.pop %v2149
  %v2159 = vmul.f32 %v2157, %v1960
  %2161 = vrot.lane.b32.xlu0 %v2158, 96
  %v2162 = vpop.permute.xlu0 %2161
  %v2164 = vmul.f32 %v2157, %v2162
  %2166 = vrot.lane.b32.xlu0 %v2164, 16
  %v2167 = vpop.permute.xlu0 %2166
  %v2169 = vadd.f32 %v2159, %v2167
  %v2170 = vtanh.pop %v2169
  %2172 = vrot.lane.b32.xlu0 %v2170, 32
  %v2173 = vpop.permute.xlu0 %2172
  %v2175 = vmul.f32 %v2157, %v2173
  %v2176 = vsel %vm87, %v2066, 0
  %2178 = vmatprep.subr.mxu0 0.0
  %2179 = vmatpush1.msra.mxu0 %v66
  %2180 = vmatprep.subr.mxu0 0.0
  %2181 = vmatpush1.msra.mxu0 %v67
  %2182 = vmatprep.subr.mxu0 0.0
  %2183 = vmatpush1.msra.mxu0 0.0
  %2184 = vmatprep.subr.mxu0 0.0
  %2185 = vmatpush1.msra.mxu0 0.0
  %2186 = vmatprep.subr.mxu0 0.0
  %2187 = vmatpush1.msra.mxu0 0.0
  %2188 = vmatprep.subr.mxu0 0.0
  %2189 = vmatpush1.msra.mxu0 0.0
  %2190 = vmatprep.subr.mxu0 0.0
  %2191 = vmatpush1.msra.mxu0 0.0
  %2192 = vmatprep.subr.mxu0 0.0
  %2193 = vmatpush1.msra.mxu0 0.0
  %2194 = vmatprep.subr.mxu0 0.0
  %2195 = vmatpush1.msra.mxu0 0.0
  %2196 = vmatprep.subr.mxu0 0.0
  %2197 = vmatpush1.msra.mxu0 0.0
  %2198 = vmatprep.subr.mxu0 0.0
  %2199 = vmatpush1.msra.mxu0 0.0
  %2200 = vmatprep.subr.mxu0 0.0
  %2201 = vmatpush1.msra.mxu0 0.0
  %2202 = vmatprep.subr.mxu0 0.0
  %2203 = vmatpush1.msra.mxu0 0.0
  %2204 = vmatprep.subr.mxu0 0.0
  %2205 = vmatpush1.msra.mxu0 0.0
  %2206 = vmatprep.subr.mxu0 0.0
  %2207 = vmatpush1.msra.mxu0 0.0
  %2208 = vmatprep.subr.mxu0 0.0
  %2209 = vmatpush1.msra.mxu0 0.0
  %2210 = vmatprep.subr.mxu0 0.0
  %2211 = vmatpush1.msra.mxu0 0.0
  %2212 = vmatprep.subr.mxu0 0.0
  %2213 = vmatpush1.msra.mxu0 0.0
  %2214 = vmatprep.subr.mxu0 0.0
  %2215 = vmatpush1.msra.mxu0 0.0
  %2216 = vmatprep.subr.mxu0 0.0
  %2217 = vmatpush1.msra.mxu0 0.0
  %2218 = vmatprep.subr.mxu0 0.0
  %2219 = vmatpush1.msra.mxu0 0.0
  %2220 = vmatprep.subr.mxu0 0.0
  %2221 = vmatpush1.msra.mxu0 0.0
  %2222 = vmatprep.subr.mxu0 0.0
  %2223 = vmatpush1.msra.mxu0 0.0
  %2224 = vmatprep.subr.mxu0 0.0
  %2225 = vmatpush1.msra.mxu0 0.0
  %2226 = vmatprep.subr.mxu0 0.0
  %2227 = vmatpush1.msra.mxu0 0.0
  %2228 = vmatprep.subr.mxu0 0.0
  %2229 = vmatpush1.msra.mxu0 0.0
  %2230 = vmatprep.subr.mxu0 0.0
  %2231 = vmatpush1.msra.mxu0 0.0
  %2232 = vmatprep.subr.mxu0 0.0
  %2233 = vmatpush1.msra.mxu0 0.0
  %2234 = vmatprep.subr.mxu0 0.0
  %2235 = vmatpush1.msra.mxu0 0.0
  %2236 = vmatprep.subr.mxu0 0.0
  %2237 = vmatpush1.msra.mxu0 0.0
  %2238 = vmatprep.subr.mxu0 0.0
  %2239 = vmatpush1.msra.mxu0 0.0
  %2240 = vmatprep.subr.mxu0 0.0
  %2241 = vmatpush1.msra.mxu0 0.0
  %2242 = vmatprep.mubr.f32.mxu0 0.0
  %2243 = vmatmul.mubr.f32.gmra.mrb[0].mxu0 %v2176
  %v2244 = vpop.f32.mrb[0].mxu0
  %v2245 = vadd.f32 0.0, %v2244
  %v2246 = vpop.f32.mrb[0].mxu0
  %2247 = vdwg.mxu0
  %v2248 = vadd.f32 %v316, %v2245
  %v2249 = vxor.u32 %v2248, 2147483648
  %v2250 = vmul.f32 %v2249, 1.442695
  %v2251 = vpow.pop %v2250
  %v2252 = vadd.f32 %v2251, 1.0
  %v2253 = vrcp.pop %v2252
  %v2254 = vmul.f32 1.0, %v2253
  %v2255 = vtanh.pop %v2248
  %v2256 = vmul.f32 %v2254, %v2057
  %2258 = vrot.lane.b32.xlu0 %v2255, 96
  %v2259 = vpop.permute.xlu0 %2258
  %v2261 = vmul.f32 %v2254, %v2259
  %2263 = vrot.lane.b32.xlu0 %v2261, 16
  %v2264 = vpop.permute.xlu0 %2263
  %v2266 = vadd.f32 %v2256, %v2264
  %v2267 = vtanh.pop %v2266
  %2269 = vrot.lane.b32.xlu0 %v2267, 32
  %v2270 = vpop.permute.xlu0 %2269
  %v2272 = vmul.f32 %v2254, %v2270
  %2274 = vrot.lane.b32.xlu0 %v2272, 80
  %v2275 = vpop.permute.xlu0 %2274
  %2278 = vrot.lane.b32.xlu0 %v2175, 96
  %v2279 = vpop.permute.xlu0 %2278
  %v2281 = vsel %vm87, %v2275, %v2279
  %v2283 = vsel %vm448, %v2281, 0
  %2285 = vmatprep.subr.mxu0 0.0
  %2286 = vmatpush1.msra.mxu0 %v73
  %2287 = vmatprep.subr.mxu0 0.0
  %2288 = vmatpush1.msra.mxu0 %v74
  %2289 = vmatprep.subr.mxu0 0.0
  %2290 = vmatpush1.msra.mxu0 %v75
  %2291 = vmatprep.subr.mxu0 0.0
  %2292 = vmatpush1.msra.mxu0 %v76
  %2293 = vmatprep.subr.mxu0 0.0
  %2294 = vmatpush1.msra.mxu0 0.0
  %2295 = vmatprep.subr.mxu0 0.0
  %2296 = vmatpush1.msra.mxu0 0.0
  %2297 = vmatprep.subr.mxu0 0.0
  %2298 = vmatpush1.msra.mxu0 0.0
  %2299 = vmatprep.subr.mxu0 0.0
  %2300 = vmatpush1.msra.mxu0 0.0
  %2301 = vmatprep.subr.mxu0 0.0
  %2302 = vmatpush1.msra.mxu0 0.0
  %2303 = vmatprep.subr.mxu0 0.0
  %2304 = vmatpush1.msra.mxu0 0.0
  %2305 = vmatprep.subr.mxu0 0.0
  %2306 = vmatpush1.msra.mxu0 0.0
  %2307 = vmatprep.subr.mxu0 0.0
  %2308 = vmatpush1.msra.mxu0 0.0
  %2309 = vmatprep.subr.mxu0 0.0
  %2310 = vmatpush1.msra.mxu0 0.0
  %2311 = vmatprep.subr.mxu0 0.0
  %2312 = vmatpush1.msra.mxu0 0.0
  %2313 = vmatprep.subr.mxu0 0.0
  %2314 = vmatpush1.msra.mxu0 0.0
  %2315 = vmatprep.subr.mxu0 0.0
  %2316 = vmatpush1.msra.mxu0 0.0
  %2317 = vmatprep.subr.mxu0 0.0
  %2318 = vmatpush1.msra.mxu0 0.0
  %2319 = vmatprep.subr.mxu0 0.0
  %2320 = vmatpush1.msra.mxu0 0.0
  %2321 = vmatprep.subr.mxu0 0.0
  %2322 = vmatpush1.msra.mxu0 0.0
  %2323 = vmatprep.subr.mxu0 0.0
  %2324 = vmatpush1.msra.mxu0 0.0
  %2325 = vmatprep.subr.mxu0 0.0
  %2326 = vmatpush1.msra.mxu0 0.0
  %2327 = vmatprep.subr.mxu0 0.0
  %2328 = vmatpush1.msra.mxu0 0.0
  %2329 = vmatprep.subr.mxu0 0.0
  %2330 = vmatpush1.msra.mxu0 0.0
  %2331 = vmatprep.subr.mxu0 0.0
  %2332 = vmatpush1.msra.mxu0 0.0
  %2333 = vmatprep.subr.mxu0 0.0
  %2334 = vmatpush1.msra.mxu0 0.0
  %2335 = vmatprep.subr.mxu0 0.0
  %2336 = vmatpush1.msra.mxu0 0.0
  %2337 = vmatprep.subr.mxu0 0.0
  %2338 = vmatpush1.msra.mxu0 0.0
  %2339 = vmatprep.subr.mxu0 0.0
  %2340 = vmatpush1.msra.mxu0 0.0
  %2341 = vmatprep.subr.mxu0 0.0
  %2342 = vmatpush1.msra.mxu0 0.0
  %2343 = vmatprep.subr.mxu0 0.0
  %2344 = vmatpush1.msra.mxu0 0.0
  %2345 = vmatprep.subr.mxu0 0.0
  %2346 = vmatpush1.msra.mxu0 0.0
  %2347 = vmatprep.subr.mxu0 0.0
  %2348 = vmatpush1.msra.mxu0 0.0
  %2349 = vmatprep.mubr.f32.mxu0 0.0
  %2350 = vmatmul.mubr.f32.gmra.mrb[0].mxu0 %v2283
  %v2351 = vpop.f32.mrb[0].mxu0
  %v2352 = vadd.f32 %v2077, %v2351
  %v2353 = vpop.f32.mrb[0].mxu0
  %2354 = vdwg.mxu0
  %v2355 = vxor.u32 %v2352, 2147483648
  %v2356 = vmul.f32 %v2355, 1.442695
  %v2357 = vpow.pop %v2356
  %v2358 = vadd.f32 %v2357, 1.0
  %v2359 = vrcp.pop %v2358
  %v2360 = vmul.f32 1.0, %v2359
  %v2361 = vtanh.pop %v2352
  %v2362 = vmul.f32 %v2360, %v2169
  %2364 = vrot.lane.b32.xlu0 %v2361, 96
  %v2365 = vpop.permute.xlu0 %2364
  %v2367 = vmul.f32 %v2360, %v2365
  %2369 = vrot.lane.b32.xlu0 %v2367, 16
  %v2370 = vpop.permute.xlu0 %2369
  %v2372 = vadd.f32 %v2362, %v2370
  %v2373 = vtanh.pop %v2372
  %2375 = vrot.lane.b32.xlu0 %v2373, 32
  %v2376 = vpop.permute.xlu0 %2375
  %v2378 = vmul.f32 %v2360, %v2376
  %v2379 = vsel %vm87, %v2275, 0
  %2381 = vmatprep.subr.mxu0 0.0
  %2382 = vmatpush1.msra.mxu0 %v66
  %2383 = vmatprep.subr.mxu0 0.0
  %2384 = vmatpush1.msra.mxu0 %v67
  %2385 = vmatprep.subr.mxu0 0.0
  %2386 = vmatpush1.msra.mxu0 0.0
  %2387 = vmatprep.subr.mxu0 0.0
  %2388 = vmatpush1.msra.mxu0 0.0
  %2389 = vmatprep.subr.mxu0 0.0
  %2390 = vmatpush1.msra.mxu0 0.0
  %2391 = vmatprep.subr.mxu0 0.0
  %2392 = vmatpush1.msra.mxu0 0.0
  %2393 = vmatprep.subr.mxu0 0.0
  %2394 = vmatpush1.msra.mxu0 0.0
  %2395 = vmatprep.subr.mxu0 0.0
  %2396 = vmatpush1.msra.mxu0 0.0
  %2397 = vmatprep.subr.mxu0 0.0
  %2398 = vmatpush1.msra.mxu0 0.0
  %2399 = vmatprep.subr.mxu0 0.0
  %2400 = vmatpush1.msra.mxu0 0.0
  %2401 = vmatprep.subr.mxu0 0.0
  %2402 = vmatpush1.msra.mxu0 0.0
  %2403 = vmatprep.subr.mxu0 0.0
  %2404 = vmatpush1.msra.mxu0 0.0
  %2405 = vmatprep.subr.mxu0 0.0
  %2406 = vmatpush1.msra.mxu0 0.0
  %2407 = vmatprep.subr.mxu0 0.0
  %2408 = vmatpush1.msra.mxu0 0.0
  %2409 = vmatprep.subr.mxu0 0.0
  %2410 = vmatpush1.msra.mxu0 0.0
  %2411 = vmatprep.subr.mxu0 0.0
  %2412 = vmatpush1.msra.mxu0 0.0
  %2413 = vmatprep.subr.mxu0 0.0
  %2414 = vmatpush1.msra.mxu0 0.0
  %2415 = vmatprep.subr.mxu0 0.0
  %2416 = vmatpush1.msra.mxu0 0.0
  %2417 = vmatprep.subr.mxu0 0.0
  %2418 = vmatpush1.msra.mxu0 0.0
  %2419 = vmatprep.subr.mxu0 0.0
  %2420 = vmatpush1.msra.mxu0 0.0
  %2421 = vmatprep.subr.mxu0 0.0
  %2422 = vmatpush1.msra.mxu0 0.0
  %2423 = vmatprep.subr.mxu0 0.0
  %2424 = vmatpush1.msra.mxu0 0.0
  %2425 = vmatprep.subr.mxu0 0.0
  %2426 = vmatpush1.msra.mxu0 0.0
  %2427 = vmatprep.subr.mxu0 0.0
  %2428 = vmatpush1.msra.mxu0 0.0
  %2429 = vmatprep.subr.mxu0 0.0
  %2430 = vmatpush1.msra.mxu0 0.0
  %2431 = vmatprep.subr.mxu0 0.0
  %2432 = vmatpush1.msra.mxu0 0.0
  %2433 = vmatprep.subr.mxu0 0.0
  %2434 = vmatpush1.msra.mxu0 0.0
  %2435 = vmatprep.subr.mxu0 0.0
  %2436 = vmatpush1.msra.mxu0 0.0
  %2437 = vmatprep.subr.mxu0 0.0
  %2438 = vmatpush1.msra.mxu0 0.0
  %2439 = vmatprep.subr.mxu0 0.0
  %2440 = vmatpush1.msra.mxu0 0.0
  %2441 = vmatprep.subr.mxu0 0.0
  %2442 = vmatpush1.msra.mxu0 0.0
  %2443 = vmatprep.subr.mxu0 0.0
  %2444 = vmatpush1.msra.mxu0 0.0
  %2445 = vmatprep.mubr.f32.mxu0 0.0
  %2446 = vmatmul.mubr.f32.gmra.mrb[0].mxu0 %v2379
  %v2447 = vpop.f32.mrb[0].mxu0
  %v2448 = vadd.f32 0.0, %v2447
  %v2449 = vpop.f32.mrb[0].mxu0
  %2450 = vdwg.mxu0
  %v2451 = vadd.f32 %v321, %v2448
  %v2452 = vxor.u32 %v2451, 2147483648
  %v2453 = vmul.f32 %v2452, 1.442695
  %v2454 = vpow.pop %v2453
  %v2455 = vadd.f32 %v2454, 1.0
  %v2456 = vrcp.pop %v2455
  %v2457 = vmul.f32 1.0, %v2456
  %v2458 = vtanh.pop %v2451
  %v2459 = vmul.f32 %v2457, %v2266
  %2461 = vrot.lane.b32.xlu0 %v2458, 96
  %v2462 = vpop.permute.xlu0 %2461
  %v2464 = vmul.f32 %v2457, %v2462
  %2466 = vrot.lane.b32.xlu0 %v2464, 16
  %v2467 = vpop.permute.xlu0 %2466
  %v2469 = vadd.f32 %v2459, %v2467
  %v2470 = vtanh.pop %v2469
  %2472 = vrot.lane.b32.xlu0 %v2470, 32
  %v2473 = vpop.permute.xlu0 %2472
  %v2475 = vmul.f32 %v2457, %v2473
  %2477 = vrot.lane.b32.xlu0 %v2475, 80
  %v2478 = vpop.permute.xlu0 %2477
  %2481 = vrot.lane.b32.xlu0 %v2378, 96
  %v2482 = vpop.permute.xlu0 %2481
  %v2484 = vsel %vm87, %v2478, %v2482
  %v2486 = vsel %vm448, %v2484, 0
  %2488 = vmatprep.subr.mxu0 0.0
  %2489 = vmatpush1.msra.mxu0 %v73
  %2490 = vmatprep.subr.mxu0 0.0
  %2491 = vmatpush1.msra.mxu0 %v74
  %2492 = vmatprep.subr.mxu0 0.0
  %2493 = vmatpush1.msra.mxu0 %v75
  %2494 = vmatprep.subr.mxu0 0.0
  %2495 = vmatpush1.msra.mxu0 %v76
  %2496 = vmatprep.subr.mxu0 0.0
  %2497 = vmatpush1.msra.mxu0 0.0
  %2498 = vmatprep.subr.mxu0 0.0
  %2499 = vmatpush1.msra.mxu0 0.0
  %2500 = vmatprep.subr.mxu0 0.0
  %2501 = vmatpush1.msra.mxu0 0.0
  %2502 = vmatprep.subr.mxu0 0.0
  %2503 = vmatpush1.msra.mxu0 0.0
  %2504 = vmatprep.subr.mxu0 0.0
  %2505 = vmatpush1.msra.mxu0 0.0
  %2506 = vmatprep.subr.mxu0 0.0
  %2507 = vmatpush1.msra.mxu0 0.0
  %2508 = vmatprep.subr.mxu0 0.0
  %2509 = vmatpush1.msra.mxu0 0.0
  %2510 = vmatprep.subr.mxu0 0.0
  %2511 = vmatpush1.msra.mxu0 0.0
  %2512 = vmatprep.subr.mxu0 0.0
  %2513 = vmatpush1.msra.mxu0 0.0
  %2514 = vmatprep.subr.mxu0 0.0
  %2515 = vmatpush1.msra.mxu0 0.0
  %2516 = vmatprep.subr.mxu0 0.0
  %2517 = vmatpush1.msra.mxu0 0.0
  %2518 = vmatprep.subr.mxu0 0.0
  %2519 = vmatpush1.msra.mxu0 0.0
  %2520 = vmatprep.subr.mxu0 0.0
  %2521 = vmatpush1.msra.mxu0 0.0
  %2522 = vmatprep.subr.mxu0 0.0
  %2523 = vmatpush1.msra.mxu0 0.0
  %2524 = vmatprep.subr.mxu0 0.0
  %2525 = vmatpush1.msra.mxu0 0.0
  %2526 = vmatprep.subr.mxu0 0.0
  %2527 = vmatpush1.msra.mxu0 0.0
  %2528 = vmatprep.subr.mxu0 0.0
  %2529 = vmatpush1.msra.mxu0 0.0
  %2530 = vmatprep.subr.mxu0 0.0
  %2531 = vmatpush1.msra.mxu0 0.0
  %2532 = vmatprep.subr.mxu0 0.0
  %2533 = vmatpush1.msra.mxu0 0.0
  %2534 = vmatprep.subr.mxu0 0.0
  %2535 = vmatpush1.msra.mxu0 0.0
  %2536 = vmatprep.subr.mxu0 0.0
  %2537 = vmatpush1.msra.mxu0 0.0
  %2538 = vmatprep.subr.mxu0 0.0
  %2539 = vmatpush1.msra.mxu0 0.0
  %2540 = vmatprep.subr.mxu0 0.0
  %2541 = vmatpush1.msra.mxu0 0.0
  %2542 = vmatprep.subr.mxu0 0.0
  %2543 = vmatpush1.msra.mxu0 0.0
  %2544 = vmatprep.subr.mxu0 0.0
  %2545 = vmatpush1.msra.mxu0 0.0
  %2546 = vmatprep.subr.mxu0 0.0
  %2547 = vmatpush1.msra.mxu0 0.0
  %2548 = vmatprep.subr.mxu0 0.0
  %2549 = vmatpush1.msra.mxu0 0.0
  %2550 = vmatprep.subr.mxu0 0.0
  %2551 = vmatpush1.msra.mxu0 0.0
  %2552 = vmatprep.mubr.f32.mxu0 0.0
  %2553 = vmatmul.mubr.f32.gmra.mrb[0].mxu0 %v2486
  %v2554 = vpop.f32.mrb[0].mxu0
  %v2555 = vadd.f32 %v2077, %v2554
  %v2556 = vpop.f32.mrb[0].mxu0
  %2557 = vdwg.mxu0
  %v2558 = vxor.u32 %v2555, 2147483648
  %v2559 = vmul.f32 %v2558, 1.442695
  %v2560 = vpow.pop %v2559
  %v2561 = vadd.f32 %v2560, 1.0
  %v2562 = vrcp.pop %v2561
  %v2563 = vmul.f32 1.0, %v2562
  %v2564 = vtanh.pop %v2555
  %v2565 = vmul.f32 %v2563, %v2372
  %2567 = vrot.lane.b32.xlu0 %v2564, 96
  %v2568 = vpop.permute.xlu0 %2567
  %v2570 = vmul.f32 %v2563, %v2568
  %2572 = vrot.lane.b32.xlu0 %v2570, 16
  %v2573 = vpop.permute.xlu0 %2572
  %v2575 = vadd.f32 %v2565, %v2573
  %v2576 = vtanh.pop %v2575
  %2578 = vrot.lane.b32.xlu0 %v2576, 32
  %v2579 = vpop.permute.xlu0 %2578
  %v2581 = vmul.f32 %v2563, %v2579
  %v2582 = vsel %vm87, %v2478, 0
  %2584 = vmatprep.subr.mxu0 0.0
  %2585 = vmatpush1.msra.mxu0 %v66
  %2586 = vmatprep.subr.mxu0 0.0
  %2587 = vmatpush1.msra.mxu0 %v67
  %2588 = vmatprep.subr.mxu0 0.0
  %2589 = vmatpush1.msra.mxu0 0.0
  %2590 = vmatprep.subr.mxu0 0.0
  %2591 = vmatpush1.msra.mxu0 0.0
  %2592 = vmatprep.subr.mxu0 0.0
  %2593 = vmatpush1.msra.mxu0 0.0
  %2594 = vmatprep.subr.mxu0 0.0
  %2595 = vmatpush1.msra.mxu0 0.0
  %2596 = vmatprep.subr.mxu0 0.0
  %2597 = vmatpush1.msra.mxu0 0.0
  %2598 = vmatprep.subr.mxu0 0.0
  %2599 = vmatpush1.msra.mxu0 0.0
  %2600 = vmatprep.subr.mxu0 0.0
  %2601 = vmatpush1.msra.mxu0 0.0
  %2602 = vmatprep.subr.mxu0 0.0
  %2603 = vmatpush1.msra.mxu0 0.0
  %2604 = vmatprep.subr.mxu0 0.0
  %2605 = vmatpush1.msra.mxu0 0.0
  %2606 = vmatprep.subr.mxu0 0.0
  %2607 = vmatpush1.msra.mxu0 0.0
  %2608 = vmatprep.subr.mxu0 0.0
  %2609 = vmatpush1.msra.mxu0 0.0
  %2610 = vmatprep.subr.mxu0 0.0
  %2611 = vmatpush1.msra.mxu0 0.0
  %2612 = vmatprep.subr.mxu0 0.0
  %2613 = vmatpush1.msra.mxu0 0.0
  %2614 = vmatprep.subr.mxu0 0.0
  %2615 = vmatpush1.msra.mxu0 0.0
  %2616 = vmatprep.subr.mxu0 0.0
  %2617 = vmatpush1.msra.mxu0 0.0
  %2618 = vmatprep.subr.mxu0 0.0
  %2619 = vmatpush1.msra.mxu0 0.0
  %2620 = vmatprep.subr.mxu0 0.0
  %2621 = vmatpush1.msra.mxu0 0.0
  %2622 = vmatprep.subr.mxu0 0.0
  %2623 = vmatpush1.msra.mxu0 0.0
  %2624 = vmatprep.subr.mxu0 0.0
  %2625 = vmatpush1.msra.mxu0 0.0
  %2626 = vmatprep.subr.mxu0 0.0
  %2627 = vmatpush1.msra.mxu0 0.0
  %2628 = vmatprep.subr.mxu0 0.0
  %2629 = vmatpush1.msra.mxu0 0.0
  %2630 = vmatprep.subr.mxu0 0.0
  %2631 = vmatpush1.msra.mxu0 0.0
  %2632 = vmatprep.subr.mxu0 0.0
  %2633 = vmatpush1.msra.mxu0 0.0
  %2634 = vmatprep.subr.mxu0 0.0
  %2635 = vmatpush1.msra.mxu0 0.0
  %2636 = vmatprep.subr.mxu0 0.0
  %2637 = vmatpush1.msra.mxu0 0.0
  %2638 = vmatprep.subr.mxu0 0.0
  %2639 = vmatpush1.msra.mxu0 0.0
  %2640 = vmatprep.subr.mxu0 0.0
  %2641 = vmatpush1.msra.mxu0 0.0
  %2642 = vmatprep.subr.mxu0 0.0
  %2643 = vmatpush1.msra.mxu0 0.0
  %2644 = vmatprep.subr.mxu0 0.0
  %2645 = vmatpush1.msra.mxu0 0.0
  %2646 = vmatprep.subr.mxu0 0.0
  %2647 = vmatpush1.msra.mxu0 0.0
  %2648 = vmatprep.mubr.f32.mxu0 0.0
  %2649 = vmatmul.mubr.f32.gmra.mrb[0].mxu0 %v2582
  %v2650 = vpop.f32.mrb[0].mxu0
  %v2651 = vadd.f32 0.0, %v2650
  %v2652 = vpop.f32.mrb[0].mxu0
  %2653 = vdwg.mxu0
  %v2654 = vadd.f32 %v326, %v2651
  %v2655 = vxor.u32 %v2654, 2147483648
  %v2656 = vmul.f32 %v2655, 1.442695
  %v2657 = vpow.pop %v2656
  %v2658 = vadd.f32 %v2657, 1.0
  %v2659 = vrcp.pop %v2658
  %v2660 = vmul.f32 1.0, %v2659
  %v2661 = vtanh.pop %v2654
  %v2662 = vmul.f32 %v2660, %v2469
  %2664 = vrot.lane.b32.xlu0 %v2661, 96
  %v2665 = vpop.permute.xlu0 %2664
  %v2667 = vmul.f32 %v2660, %v2665
  %2669 = vrot.lane.b32.xlu0 %v2667, 16
  %v2670 = vpop.permute.xlu0 %2669
  %v2672 = vadd.f32 %v2662, %v2670
  %v2673 = vtanh.pop %v2672
  %2675 = vrot.lane.b32.xlu0 %v2673, 32
  %v2676 = vpop.permute.xlu0 %2675
  %v2678 = vmul.f32 %v2660, %v2676
  %2680 = vrot.lane.b32.xlu0 %v2678, 80
  %v2681 = vpop.permute.xlu0 %2680
  %2684 = vrot.lane.b32.xlu0 %v2581, 96
  %v2685 = vpop.permute.xlu0 %2684
  %v2687 = vsel %vm87, %v2681, %v2685
  %v2689 = vsel %vm448, %v2687, 0
  %2691 = vmatprep.subr.mxu0 0.0
  %2692 = vmatpush1.msra.mxu0 %v73
  %2693 = vmatprep.subr.mxu0 0.0
  %2694 = vmatpush1.msra.mxu0 %v74
  %2695 = vmatprep.subr.mxu0 0.0
  %2696 = vmatpush1.msra.mxu0 %v75
  %2697 = vmatprep.subr.mxu0 0.0
  %2698 = vmatpush1.msra.mxu0 %v76
  %2699 = vmatprep.subr.mxu0 0.0
  %2700 = vmatpush1.msra.mxu0 0.0
  %2701 = vmatprep.subr.mxu0 0.0
  %2702 = vmatpush1.msra.mxu0 0.0
  %2703 = vmatprep.subr.mxu0 0.0
  %2704 = vmatpush1.msra.mxu0 0.0
  %2705 = vmatprep.subr.mxu0 0.0
  %2706 = vmatpush1.msra.mxu0 0.0
  %2707 = vmatprep.subr.mxu0 0.0
  %2708 = vmatpush1.msra.mxu0 0.0
  %2709 = vmatprep.subr.mxu0 0.0
  %2710 = vmatpush1.msra.mxu0 0.0
  %2711 = vmatprep.subr.mxu0 0.0
  %2712 = vmatpush1.msra.mxu0 0.0
  %2713 = vmatprep.subr.mxu0 0.0
  %2714 = vmatpush1.msra.mxu0 0.0
  %2715 = vmatprep.subr.mxu0 0.0
  %2716 = vmatpush1.msra.mxu0 0.0
  %2717 = vmatprep.subr.mxu0 0.0
  %2718 = vmatpush1.msra.mxu0 0.0
  %2719 = vmatprep.subr.mxu0 0.0
  %2720 = vmatpush1.msra.mxu0 0.0
  %2721 = vmatprep.subr.mxu0 0.0
  %2722 = vmatpush1.msra.mxu0 0.0
  %2723 = vmatprep.subr.mxu0 0.0
  %2724 = vmatpush1.msra.mxu0 0.0
  %2725 = vmatprep.subr.mxu0 0.0
  %2726 = vmatpush1.msra.mxu0 0.0
  %2727 = vmatprep.subr.mxu0 0.0
  %2728 = vmatpush1.msra.mxu0 0.0
  %2729 = vmatprep.subr.mxu0 0.0
  %2730 = vmatpush1.msra.mxu0 0.0
  %2731 = vmatprep.subr.mxu0 0.0
  %2732 = vmatpush1.msra.mxu0 0.0
  %2733 = vmatprep.subr.mxu0 0.0
  %2734 = vmatpush1.msra.mxu0 0.0
  %2735 = vmatprep.subr.mxu0 0.0
  %2736 = vmatpush1.msra.mxu0 0.0
  %2737 = vmatprep.subr.mxu0 0.0
  %2738 = vmatpush1.msra.mxu0 0.0
  %2739 = vmatprep.subr.mxu0 0.0
  %2740 = vmatpush1.msra.mxu0 0.0
  %2741 = vmatprep.subr.mxu0 0.0
  %2742 = vmatpush1.msra.mxu0 0.0
  %2743 = vmatprep.subr.mxu0 0.0
  %2744 = vmatpush1.msra.mxu0 0.0
  %2745 = vmatprep.subr.mxu0 0.0
  %2746 = vmatpush1.msra.mxu0 0.0
  %2747 = vmatprep.subr.mxu0 0.0
  %2748 = vmatpush1.msra.mxu0 0.0
  %2749 = vmatprep.subr.mxu0 0.0
  %2750 = vmatpush1.msra.mxu0 0.0
  %2751 = vmatprep.subr.mxu0 0.0
  %2752 = vmatpush1.msra.mxu0 0.0
  %2753 = vmatprep.subr.mxu0 0.0
  %2754 = vmatpush1.msra.mxu0 0.0
  %2755 = vmatprep.mubr.f32.mxu0 0.0
  %2756 = vmatmul.mubr.f32.gmra.mrb[0].mxu0 %v2689
  %v2757 = vpop.f32.mrb[0].mxu0
  %v2758 = vadd.f32 %v2077, %v2757
  %v2759 = vpop.f32.mrb[0].mxu0
  %2760 = vdwg.mxu0
  %v2761 = vxor.u32 %v2758, 2147483648
  %v2762 = vmul.f32 %v2761, 1.442695
  %v2763 = vpow.pop %v2762
  %v2764 = vadd.f32 %v2763, 1.0
  %v2765 = vrcp.pop %v2764
  %v2766 = vmul.f32 1.0, %v2765
  %v2767 = vtanh.pop %v2758
  %v2768 = vmul.f32 %v2766, %v2575
  %2770 = vrot.lane.b32.xlu0 %v2767, 96
  %v2771 = vpop.permute.xlu0 %2770
  %v2773 = vmul.f32 %v2766, %v2771
  %2775 = vrot.lane.b32.xlu0 %v2773, 16
  %v2776 = vpop.permute.xlu0 %2775
  %v2778 = vadd.f32 %v2768, %v2776
  %v2779 = vtanh.pop %v2778
  %2781 = vrot.lane.b32.xlu0 %v2779, 32
  %v2782 = vpop.permute.xlu0 %2781
  %v2784 = vmul.f32 %v2766, %v2782
  %v2785 = vsel %vm87, %v2681, 0
  %2787 = vmatprep.subr.mxu0 0.0
  %2788 = vmatpush1.msra.mxu0 %v66
  %2789 = vmatprep.subr.mxu0 0.0
  %2790 = vmatpush1.msra.mxu0 %v67
  %2791 = vmatprep.subr.mxu0 0.0
  %2792 = vmatpush1.msra.mxu0 0.0
  %2793 = vmatprep.subr.mxu0 0.0
  %2794 = vmatpush1.msra.mxu0 0.0
  %2795 = vmatprep.subr.mxu0 0.0
  %2796 = vmatpush1.msra.mxu0 0.0
  %2797 = vmatprep.subr.mxu0 0.0
  %2798 = vmatpush1.msra.mxu0 0.0
  %2799 = vmatprep.subr.mxu0 0.0
  %2800 = vmatpush1.msra.mxu0 0.0
  %2801 = vmatprep.subr.mxu0 0.0
  %2802 = vmatpush1.msra.mxu0 0.0
  %2803 = vmatprep.subr.mxu0 0.0
  %2804 = vmatpush1.msra.mxu0 0.0
  %2805 = vmatprep.subr.mxu0 0.0
  %2806 = vmatpush1.msra.mxu0 0.0
  %2807 = vmatprep.subr.mxu0 0.0
  %2808 = vmatpush1.msra.mxu0 0.0
  %2809 = vmatprep.subr.mxu0 0.0
  %2810 = vmatpush1.msra.mxu0 0.0
  %2811 = vmatprep.subr.mxu0 0.0
  %2812 = vmatpush1.msra.mxu0 0.0
  %2813 = vmatprep.subr.mxu0 0.0
  %2814 = vmatpush1.msra.mxu0 0.0
  %2815 = vmatprep.subr.mxu0 0.0
  %2816 = vmatpush1.msra.mxu0 0.0
  %2817 = vmatprep.subr.mxu0 0.0
  %2818 = vmatpush1.msra.mxu0 0.0
  %2819 = vmatprep.subr.mxu0 0.0
  %2820 = vmatpush1.msra.mxu0 0.0
  %2821 = vmatprep.subr.mxu0 0.0
  %2822 = vmatpush1.msra.mxu0 0.0
  %2823 = vmatprep.subr.mxu0 0.0
  %2824 = vmatpush1.msra.mxu0 0.0
  %2825 = vmatprep.subr.mxu0 0.0
  %2826 = vmatpush1.msra.mxu0 0.0
  %2827 = vmatprep.subr.mxu0 0.0
  %2828 = vmatpush1.msra.mxu0 0.0
  %2829 = vmatprep.subr.mxu0 0.0
  %2830 = vmatpush1.msra.mxu0 0.0
  %2831 = vmatprep.subr.mxu0 0.0
  %2832 = vmatpush1.msra.mxu0 0.0
  %2833 = vmatprep.subr.mxu0 0.0
  %2834 = vmatpush1.msra.mxu0 0.0
  %2835 = vmatprep.subr.mxu0 0.0
  %2836 = vmatpush1.msra.mxu0 0.0
  %2837 = vmatprep.subr.mxu0 0.0
  %2838 = vmatpush1.msra.mxu0 0.0
  %2839 = vmatprep.subr.mxu0 0.0
  %2840 = vmatpush1.msra.mxu0 0.0
  %2841 = vmatprep.subr.mxu0 0.0
  %2842 = vmatpush1.msra.mxu0 0.0
  %2843 = vmatprep.subr.mxu0 0.0
  %2844 = vmatpush1.msra.mxu0 0.0
  %2845 = vmatprep.subr.mxu0 0.0
  %2846 = vmatpush1.msra.mxu0 0.0
  %2847 = vmatprep.subr.mxu0 0.0
  %2848 = vmatpush1.msra.mxu0 0.0
  %2849 = vmatprep.subr.mxu0 0.0
  %2850 = vmatpush1.msra.mxu0 0.0
  %2851 = vmatprep.mubr.f32.mxu0 0.0
  %2852 = vmatmul.mubr.f32.gmra.mrb[0].mxu0 %v2785
  %v2853 = vpop.f32.mrb[0].mxu0
  %v2854 = vadd.f32 0.0, %v2853
  %v2855 = vpop.f32.mrb[0].mxu0
  %2856 = vdwg.mxu0
  %v2857 = vadd.f32 %v331, %v2854
  %v2858 = vxor.u32 %v2857, 2147483648
  %v2859 = vmul.f32 %v2858, 1.442695
  %v2860 = vpow.pop %v2859
  %v2861 = vadd.f32 %v2860, 1.0
  %v2862 = vrcp.pop %v2861
  %v2863 = vmul.f32 1.0, %v2862
  %v2864 = vtanh.pop %v2857
  %v2865 = vmul.f32 %v2863, %v2672
  %2867 = vrot.lane.b32.xlu0 %v2864, 96
  %v2868 = vpop.permute.xlu0 %2867
  %v2870 = vmul.f32 %v2863, %v2868
  %2872 = vrot.lane.b32.xlu0 %v2870, 16
  %v2873 = vpop.permute.xlu0 %2872
  %v2875 = vadd.f32 %v2865, %v2873
  %v2876 = vtanh.pop %v2875
  %2878 = vrot.lane.b32.xlu0 %v2876, 32
  %v2879 = vpop.permute.xlu0 %2878
  %v2881 = vmul.f32 %v2863, %v2879
  %2883 = vrot.lane.b32.xlu0 %v2881, 80
  %v2884 = vpop.permute.xlu0 %2883
  %2887 = vrot.lane.b32.xlu0 %v2784, 96
  %v2888 = vpop.permute.xlu0 %2887
  %v2890 = vsel %vm87, %v2884, %v2888
  %v2892 = vsel %vm448, %v2890, 0
  %2894 = vmatprep.subr.mxu0 0.0
  %2895 = vmatpush1.msra.mxu0 %v73
  %2896 = vmatprep.subr.mxu0 0.0
  %2897 = vmatpush1.msra.mxu0 %v74
  %2898 = vmatprep.subr.mxu0 0.0
  %2899 = vmatpush1.msra.mxu0 %v75
  %2900 = vmatprep.subr.mxu0 0.0
  %2901 = vmatpush1.msra.mxu0 %v76
  %2902 = vmatprep.subr.mxu0 0.0
  %2903 = vmatpush1.msra.mxu0 0.0
  %2904 = vmatprep.subr.mxu0 0.0
  %2905 = vmatpush1.msra.mxu0 0.0
  %2906 = vmatprep.subr.mxu0 0.0
  %2907 = vmatpush1.msra.mxu0 0.0
  %2908 = vmatprep.subr.mxu0 0.0
  %2909 = vmatpush1.msra.mxu0 0.0
  %2910 = vmatprep.subr.mxu0 0.0
  %2911 = vmatpush1.msra.mxu0 0.0
  %2912 = vmatprep.subr.mxu0 0.0
  %2913 = vmatpush1.msra.mxu0 0.0
  %2914 = vmatprep.subr.mxu0 0.0
  %2915 = vmatpush1.msra.mxu0 0.0
  %2916 = vmatprep.subr.mxu0 0.0
  %2917 = vmatpush1.msra.mxu0 0.0
  %2918 = vmatprep.subr.mxu0 0.0
  %2919 = vmatpush1.msra.mxu0 0.0
  %2920 = vmatprep.subr.mxu0 0.0
  %2921 = vmatpush1.msra.mxu0 0.0
  %2922 = vmatprep.subr.mxu0 0.0
  %2923 = vmatpush1.msra.mxu0 0.0
  %2924 = vmatprep.subr.mxu0 0.0
  %2925 = vmatpush1.msra.mxu0 0.0
  %2926 = vmatprep.subr.mxu0 0.0
  %2927 = vmatpush1.msra.mxu0 0.0
  %2928 = vmatprep.subr.mxu0 0.0
  %2929 = vmatpush1.msra.mxu0 0.0
  %2930 = vmatprep.subr.mxu0 0.0
  %2931 = vmatpush1.msra.mxu0 0.0
  %2932 = vmatprep.subr.mxu0 0.0
  %2933 = vmatpush1.msra.mxu0 0.0
  %2934 = vmatprep.subr.mxu0 0.0
  %2935 = vmatpush1.msra.mxu0 0.0
  %2936 = vmatprep.subr.mxu0 0.0
  %2937 = vmatpush1.msra.mxu0 0.0
  %2938 = vmatprep.subr.mxu0 0.0
  %2939 = vmatpush1.msra.mxu0 0.0
  %2940 = vmatprep.subr.mxu0 0.0
  %2941 = vmatpush1.msra.mxu0 0.0
  %2942 = vmatprep.subr.mxu0 0.0
  %2943 = vmatpush1.msra.mxu0 0.0
  %2944 = vmatprep.subr.mxu0 0.0
  %2945 = vmatpush1.msra.mxu0 0.0
  %2946 = vmatprep.subr.mxu0 0.0
  %2947 = vmatpush1.msra.mxu0 0.0
  %2948 = vmatprep.subr.mxu0 0.0
  %2949 = vmatpush1.msra.mxu0 0.0
  %2950 = vmatprep.subr.mxu0 0.0
  %2951 = vmatpush1.msra.mxu0 0.0
  %2952 = vmatprep.subr.mxu0 0.0
  %2953 = vmatpush1.msra.mxu0 0.0
  %2954 = vmatprep.subr.mxu0 0.0
  %2955 = vmatpush1.msra.mxu0 0.0
  %2956 = vmatprep.subr.mxu0 0.0
  %2957 = vmatpush1.msra.mxu0 0.0
  %2958 = vmatprep.mubr.f32.mxu0 0.0
  %2959 = vmatmul.mubr.f32.gmra.mrb[0].mxu0 %v2892
  %v2960 = vpop.f32.mrb[0].mxu0
  %v2961 = vadd.f32 %v2077, %v2960
  %v2962 = vpop.f32.mrb[0].mxu0
  %2963 = vdwg.mxu0
  %v2964 = vxor.u32 %v2961, 2147483648
  %v2965 = vmul.f32 %v2964, 1.442695
  %v2966 = vpow.pop %v2965
  %v2967 = vadd.f32 %v2966, 1.0
  %v2968 = vrcp.pop %v2967
  %v2969 = vmul.f32 1.0, %v2968
  %v2970 = vtanh.pop %v2961
  %v2971 = vmul.f32 %v2969, %v2778
  %2973 = vrot.lane.b32.xlu0 %v2970, 96
  %v2974 = vpop.permute.xlu0 %2973
  %v2976 = vmul.f32 %v2969, %v2974
  %2978 = vrot.lane.b32.xlu0 %v2976, 16
  %v2979 = vpop.permute.xlu0 %2978
  %v2981 = vadd.f32 %v2971, %v2979
  %v2982 = vtanh.pop %v2981
  %2984 = vrot.lane.b32.xlu0 %v2982, 32
  %v2985 = vpop.permute.xlu0 %2984
  %v2987 = vmul.f32 %v2969, %v2985
  %v2988 = vsel %vm87, %v2884, 0
  %2990 = vmatprep.subr.mxu0 0.0
  %2991 = vmatpush1.msra.mxu0 %v66
  %2992 = vmatprep.subr.mxu0 0.0
  %2993 = vmatpush1.msra.mxu0 %v67
  %2994 = vmatprep.subr.mxu0 0.0
  %2995 = vmatpush1.msra.mxu0 0.0
  %2996 = vmatprep.subr.mxu0 0.0
  %2997 = vmatpush1.msra.mxu0 0.0
  %2998 = vmatprep.subr.mxu0 0.0
  %2999 = vmatpush1.msra.mxu0 0.0
  %3000 = vmatprep.subr.mxu0 0.0
  %3001 = vmatpush1.msra.mxu0 0.0
  %3002 = vmatprep.subr.mxu0 0.0
  %3003 = vmatpush1.msra.mxu0 0.0
  %3004 = vmatprep.subr.mxu0 0.0
  %3005 = vmatpush1.msra.mxu0 0.0
  %3006 = vmatprep.subr.mxu0 0.0
  %3007 = vmatpush1.msra.mxu0 0.0
  %3008 = vmatprep.subr.mxu0 0.0
  %3009 = vmatpush1.msra.mxu0 0.0
  %3010 = vmatprep.subr.mxu0 0.0
  %3011 = vmatpush1.msra.mxu0 0.0
  %3012 = vmatprep.subr.mxu0 0.0
  %3013 = vmatpush1.msra.mxu0 0.0
  %3014 = vmatprep.subr.mxu0 0.0
  %3015 = vmatpush1.msra.mxu0 0.0
  %3016 = vmatprep.subr.mxu0 0.0
  %3017 = vmatpush1.msra.mxu0 0.0
  %3018 = vmatprep.subr.mxu0 0.0
  %3019 = vmatpush1.msra.mxu0 0.0
  %3020 = vmatprep.subr.mxu0 0.0
  %3021 = vmatpush1.msra.mxu0 0.0
  %3022 = vmatprep.subr.mxu0 0.0
  %3023 = vmatpush1.msra.mxu0 0.0
  %3024 = vmatprep.subr.mxu0 0.0
  %3025 = vmatpush1.msra.mxu0 0.0
  %3026 = vmatprep.subr.mxu0 0.0
  %3027 = vmatpush1.msra.mxu0 0.0
  %3028 = vmatprep.subr.mxu0 0.0
  %3029 = vmatpush1.msra.mxu0 0.0
  %3030 = vmatprep.subr.mxu0 0.0
  %3031 = vmatpush1.msra.mxu0 0.0
  %3032 = vmatprep.subr.mxu0 0.0
  %3033 = vmatpush1.msra.mxu0 0.0
  %3034 = vmatprep.subr.mxu0 0.0
  %3035 = vmatpush1.msra.mxu0 0.0
  %3036 = vmatprep.subr.mxu0 0.0
  %3037 = vmatpush1.msra.mxu0 0.0
  %3038 = vmatprep.subr.mxu0 0.0
  %3039 = vmatpush1.msra.mxu0 0.0
  %3040 = vmatprep.subr.mxu0 0.0
  %3041 = vmatpush1.msra.mxu0 0.0
  %3042 = vmatprep.subr.mxu0 0.0
  %3043 = vmatpush1.msra.mxu0 0.0
  %3044 = vmatprep.subr.mxu0 0.0
  %3045 = vmatpush1.msra.mxu0 0.0
  %3046 = vmatprep.subr.mxu0 0.0
  %3047 = vmatpush1.msra.mxu0 0.0
  %3048 = vmatprep.subr.mxu0 0.0
  %3049 = vmatpush1.msra.mxu0 0.0
  %3050 = vmatprep.subr.mxu0 0.0
  %3051 = vmatpush1.msra.mxu0 0.0
  %3052 = vmatprep.subr.mxu0 0.0
  %3053 = vmatpush1.msra.mxu0 0.0
  %3054 = vmatprep.mubr.f32.mxu0 0.0
  %3055 = vmatmul.mubr.f32.gmra.mrb[0].mxu0 %v2988
  %v3056 = vpop.f32.mrb[0].mxu0
  %v3057 = vadd.f32 0.0, %v3056
  %v3058 = vpop.f32.mrb[0].mxu0
  %3059 = vdwg.mxu0
  %v3060 = vadd.f32 %v336, %v3057
  %v3061 = vxor.u32 %v3060, 2147483648
  %v3062 = vmul.f32 %v3061, 1.442695
  %v3063 = vpow.pop %v3062
  %v3064 = vadd.f32 %v3063, 1.0
  %v3065 = vrcp.pop %v3064
  %v3066 = vmul.f32 1.0, %v3065
  %v3067 = vtanh.pop %v3060
  %v3068 = vmul.f32 %v3066, %v2875
  %3070 = vrot.lane.b32.xlu0 %v3067, 96
  %v3071 = vpop.permute.xlu0 %3070
  %v3073 = vmul.f32 %v3066, %v3071
  %3075 = vrot.lane.b32.xlu0 %v3073, 16
  %v3076 = vpop.permute.xlu0 %3075
  %v3078 = vadd.f32 %v3068, %v3076
  %v3079 = vtanh.pop %v3078
  %3081 = vrot.lane.b32.xlu0 %v3079, 32
  %v3082 = vpop.permute.xlu0 %3081
  %v3084 = vmul.f32 %v3066, %v3082
  %3086 = vrot.lane.b32.xlu0 %v3084, 80
  %v3087 = vpop.permute.xlu0 %3086
  %3090 = vrot.lane.b32.xlu0 %v2987, 96
  %v3091 = vpop.permute.xlu0 %3090
  %v3093 = vsel %vm87, %v3087, %v3091
  %v3095 = vsel %vm448, %v3093, 0
  %3097 = vmatprep.subr.mxu0 0.0
  %3098 = vmatpush1.msra.mxu0 %v73
  %3099 = vmatprep.subr.mxu0 0.0
  %3100 = vmatpush1.msra.mxu0 %v74
  %3101 = vmatprep.subr.mxu0 0.0
  %3102 = vmatpush1.msra.mxu0 %v75
  %3103 = vmatprep.subr.mxu0 0.0
  %3104 = vmatpush1.msra.mxu0 %v76
  %3105 = vmatprep.subr.mxu0 0.0
  %3106 = vmatpush1.msra.mxu0 0.0
  %3107 = vmatprep.subr.mxu0 0.0
  %3108 = vmatpush1.msra.mxu0 0.0
  %3109 = vmatprep.subr.mxu0 0.0
  %3110 = vmatpush1.msra.mxu0 0.0
  %3111 = vmatprep.subr.mxu0 0.0
  %3112 = vmatpush1.msra.mxu0 0.0
  %3113 = vmatprep.subr.mxu0 0.0
  %3114 = vmatpush1.msra.mxu0 0.0
  %3115 = vmatprep.subr.mxu0 0.0
  %3116 = vmatpush1.msra.mxu0 0.0
  %3117 = vmatprep.subr.mxu0 0.0
  %3118 = vmatpush1.msra.mxu0 0.0
  %3119 = vmatprep.subr.mxu0 0.0
  %3120 = vmatpush1.msra.mxu0 0.0
  %3121 = vmatprep.subr.mxu0 0.0
  %3122 = vmatpush1.msra.mxu0 0.0
  %3123 = vmatprep.subr.mxu0 0.0
  %3124 = vmatpush1.msra.mxu0 0.0
  %3125 = vmatprep.subr.mxu0 0.0
  %3126 = vmatpush1.msra.mxu0 0.0
  %3127 = vmatprep.subr.mxu0 0.0
  %3128 = vmatpush1.msra.mxu0 0.0
  %3129 = vmatprep.subr.mxu0 0.0
  %3130 = vmatpush1.msra.mxu0 0.0
  %3131 = vmatprep.subr.mxu0 0.0
  %3132 = vmatpush1.msra.mxu0 0.0
  %3133 = vmatprep.subr.mxu0 0.0
  %3134 = vmatpush1.msra.mxu0 0.0
  %3135 = vmatprep.subr.mxu0 0.0
  %3136 = vmatpush1.msra.mxu0 0.0
  %3137 = vmatprep.subr.mxu0 0.0
  %3138 = vmatpush1.msra.mxu0 0.0
  %3139 = vmatprep.subr.mxu0 0.0
  %3140 = vmatpush1.msra.mxu0 0.0
  %3141 = vmatprep.subr.mxu0 0.0
  %3142 = vmatpush1.msra.mxu0 0.0
  %3143 = vmatprep.subr.mxu0 0.0
  %3144 = vmatpush1.msra.mxu0 0.0
  %3145 = vmatprep.subr.mxu0 0.0
  %3146 = vmatpush1.msra.mxu0 0.0
  %3147 = vmatprep.subr.mxu0 0.0
  %3148 = vmatpush1.msra.mxu0 0.0
  %3149 = vmatprep.subr.mxu0 0.0
  %3150 = vmatpush1.msra.mxu0 0.0
  %3151 = vmatprep.subr.mxu0 0.0
  %3152 = vmatpush1.msra.mxu0 0.0
  %3153 = vmatprep.subr.mxu0 0.0
  %3154 = vmatpush1.msra.mxu0 0.0
  %3155 = vmatprep.subr.mxu0 0.0
  %3156 = vmatpush1.msra.mxu0 0.0
  %3157 = vmatprep.subr.mxu0 0.0
  %3158 = vmatpush1.msra.mxu0 0.0
  %3159 = vmatprep.subr.mxu0 0.0
  %3160 = vmatpush1.msra.mxu0 0.0
  %3161 = vmatprep.mubr.f32.mxu0 0.0
  %3162 = vmatmul.mubr.f32.gmra.mrb[0].mxu0 %v3095
  %v3163 = vpop.f32.mrb[0].mxu0
  %v3164 = vadd.f32 %v2077, %v3163
  %v3165 = vpop.f32.mrb[0].mxu0
  %3166 = vdwg.mxu0
  %v3167 = vxor.u32 %v3164, 2147483648
  %v3168 = vmul.f32 %v3167, 1.442695
  %v3169 = vpow.pop %v3168
  %v3170 = vadd.f32 %v3169, 1.0
  %v3171 = vrcp.pop %v3170
  %v3172 = vmul.f32 1.0, %v3171
  %v3173 = vtanh.pop %v3164
  %v3174 = vmul.f32 %v3172, %v2981
  %3176 = vrot.lane.b32.xlu0 %v3173, 96
  %v3177 = vpop.permute.xlu0 %3176
  %v3179 = vmul.f32 %v3172, %v3177
  %3181 = vrot.lane.b32.xlu0 %v3179, 16
  %v3182 = vpop.permute.xlu0 %3181
  %v3184 = vadd.f32 %v3174, %v3182
  %v3185 = vtanh.pop %v3184
  %3187 = vrot.lane.b32.xlu0 %v3185, 32
  %v3188 = vpop.permute.xlu0 %3187
  %v3190 = vmul.f32 %v3172, %v3188
  %v3191 = vld [vmem:[%s12] sm:$0xff]
  %v3192 = vld [vmem:[%s12 + $0x8] sm:$0xff]
  %v3193 = vld [vmem:[%s13] sm:$0x1]
  %v3195 = vlaneseq
  %v3196 = vshrl.u32 %v3195, 7
  %v3197 = vsub.s32 0, %v3196
  %v3198 = vrot.slane %v3193, %v3197
  %3201 = vrot.lane.b32.xlu0 %v2175, 80
  %v3202 = vpop.permute.xlu0 %3201
  %3203 = vrot.lane.b32.xlu0 %v2378, 80
  %v3204 = vpop.permute.xlu0 %3203
  %3205 = vrot.lane.b32.xlu0 %v2581, 80
  %v3206 = vpop.permute.xlu0 %3205
  %3207 = vrot.lane.b32.xlu0 %v2784, 80
  %v3208 = vpop.permute.xlu0 %3207
  %3209 = vrot.lane.b32.xlu0 %v2987, 80
  %v3210 = vpop.permute.xlu0 %3209
  %3211 = vrot.lane.b32.xlu0 %v3190, 80
  %v3212 = vpop.permute.xlu0 %3211
  %v3213 = vsel %vm87, %v3202, 0
  %v3215 = vsel %vm87, %v3204, 0
  %v3217 = vsel %vm87, %v3206, 0
  %v3219 = vsel %vm87, %v3208, 0
  %v3221 = vsel %vm87, %v3210, 0
  %v3223 = vsel %vm87, %v3212, 0
  %3225 = vmatprep.subr.mxu0 0.0
  %3226 = vmatpush1.msra.mxu0 %v3191
  %3227 = vmatprep.subr.mxu0 0.0
  %3228 = vmatpush1.msra.mxu0 %v3192
  %3229 = vmatprep.subr.mxu0 0.0
  %3230 = vmatpush1.msra.mxu0 0.0
  %3231 = vmatprep.subr.mxu0 0.0
  %3232 = vmatpush1.msra.mxu0 0.0
  %3233 = vmatprep.subr.mxu0 0.0
  %3234 = vmatpush1.msra.mxu0 0.0
  %3235 = vmatprep.subr.mxu0 0.0
  %3236 = vmatpush1.msra.mxu0 0.0
  %3237 = vmatprep.subr.mxu0 0.0
  %3238 = vmatpush1.msra.mxu0 0.0
  %3239 = vmatprep.subr.mxu0 0.0
  %3240 = vmatpush1.msra.mxu0 0.0
  %3241 = vmatprep.subr.mxu0 0.0
  %3242 = vmatpush1.msra.mxu0 0.0
  %3243 = vmatprep.subr.mxu0 0.0
  %3244 = vmatpush1.msra.mxu0 0.0
  %3245 = vmatprep.subr.mxu0 0.0
  %3246 = vmatpush1.msra.mxu0 0.0
  %3247 = vmatprep.subr.mxu0 0.0
  %3248 = vmatpush1.msra.mxu0 0.0
  %3249 = vmatprep.subr.mxu0 0.0
  %3250 = vmatpush1.msra.mxu0 0.0
  %3251 = vmatprep.subr.mxu0 0.0
  %3252 = vmatpush1.msra.mxu0 0.0
  %3253 = vmatprep.subr.mxu0 0.0
  %3254 = vmatpush1.msra.mxu0 0.0
  %3255 = vmatprep.subr.mxu0 0.0
  %3256 = vmatpush1.msra.mxu0 0.0
  %3257 = vmatprep.subr.mxu0 0.0
  %3258 = vmatpush1.msra.mxu0 0.0
  %3259 = vmatprep.subr.mxu0 0.0
  %3260 = vmatpush1.msra.mxu0 0.0
  %3261 = vmatprep.subr.mxu0 0.0
  %3262 = vmatpush1.msra.mxu0 0.0
  %3263 = vmatprep.subr.mxu0 0.0
  %3264 = vmatpush1.msra.mxu0 0.0
  %3265 = vmatprep.subr.mxu0 0.0
  %3266 = vmatpush1.msra.mxu0 0.0
  %3267 = vmatprep.subr.mxu0 0.0
  %3268 = vmatpush1.msra.mxu0 0.0
  %3269 = vmatprep.subr.mxu0 0.0
  %3270 = vmatpush1.msra.mxu0 0.0
  %3271 = vmatprep.subr.mxu0 0.0
  %3272 = vmatpush1.msra.mxu0 0.0
  %3273 = vmatprep.subr.mxu0 0.0
  %3274 = vmatpush1.msra.mxu0 0.0
  %3275 = vmatprep.subr.mxu0 0.0
  %3276 = vmatpush1.msra.mxu0 0.0
  %3277 = vmatprep.subr.mxu0 0.0
  %3278 = vmatpush1.msra.mxu0 0.0
  %3279 = vmatprep.subr.mxu0 0.0
  %3280 = vmatpush1.msra.mxu0 0.0
  %3281 = vmatprep.subr.mxu0 0.0
  %3282 = vmatpush1.msra.mxu0 0.0
  %3283 = vmatprep.subr.mxu0 0.0
  %3284 = vmatpush1.msra.mxu0 0.0
  %3285 = vmatprep.subr.mxu0 0.0
  %3286 = vmatpush1.msra.mxu0 0.0
  %3287 = vmatprep.subr.mxu0 0.0
  %3288 = vmatpush1.msra.mxu0 0.0
  %3289 = vmatprep.mubr.f32.mxu0 0.0
  %3290 = vmatmul.mubr.f32.gmra.mrb[0].mxu0 %v3213
  %v3291 = vpop.f32.mrb[0].mxu0
  %v3292 = vadd.f32 %v3198, %v3291
  %v3293 = vpop.f32.mrb[0].mxu0
  %3294 = vmatprep.mubr.f32.mxu0 0.0
  %3295 = vmatmul.mubr.f32.gmra.mrb[0].mxu0 %v3215
  %v3296 = vpop.f32.mrb[0].mxu0
  %v3297 = vadd.f32 %v3198, %v3296
  %v3298 = vpop.f32.mrb[0].mxu0
  %3299 = vmatprep.mubr.f32.mxu0 0.0
  %3300 = vmatmul.mubr.f32.gmra.mrb[0].mxu0 %v3217
  %v3301 = vpop.f32.mrb[0].mxu0
  %v3302 = vadd.f32 %v3198, %v3301
  %v3303 = vpop.f32.mrb[0].mxu0
  %3304 = vmatprep.mubr.f32.mxu0 0.0
  %3305 = vmatmul.mubr.f32.gmra.mrb[0].mxu0 %v3219
  %v3306 = vpop.f32.mrb[0].mxu0
  %v3307 = vadd.f32 %v3198, %v3306
  %v3308 = vpop.f32.mrb[0].mxu0
  %3309 = vmatprep.mubr.f32.mxu0 0.0
  %3310 = vmatmul.mubr.f32.gmra.mrb[0].mxu0 %v3221
  %v3311 = vpop.f32.mrb[0].mxu0
  %v3312 = vadd.f32 %v3198, %v3311
  %v3313 = vpop.f32.mrb[0].mxu0
  %3314 = vmatprep.mubr.f32.mxu0 0.0
  %3315 = vmatmul.mubr.f32.gmra.mrb[0].mxu0 %v3223
  %v3316 = vpop.f32.mrb[0].mxu0
  %v3317 = vadd.f32 %v3198, %v3316
  %v3318 = vpop.f32.mrb[0].mxu0
  %3319 = vdwg.mxu0
  %3320 = vst [vmem:[%s14] sm:$0xff] %v3292
  %3321 = vst [vmem:[%s14 + $0x8] sm:$0xff] %v3297
  %3322 = vst [vmem:[%s14 + $0x10] sm:$0xff] %v3302
  %3323 = vst [vmem:[%s14 + $0x18] sm:$0xff] %v3307
  %3324 = vst [vmem:[%s14 + $0x20] sm:$0xff] %v3312
  %3325 = vst [vmem:[%s14 + $0x28] sm:$0xff] %v3317
  %3327 = vst.msk [vmem:[%s15] sm:$0xff] %vm87, %v3087
  %3328 = vst.msk [vmem:[%s15 + $0x8] sm:$0xff] %vm87, %v3212
  %3331 = vrot.lane.b32.xlu0 %v3078, 112
  %v3332 = vpop.permute.xlu0 %3331
  %3333 = vrot.lane.b32.xlu0 %v3184, 112
  %v3334 = vpop.permute.xlu0 %3333
  %3337 = vst.msk [vmem:[%s16] sm:$0xff] %vm87, %v3332
  %3338 = vst.msk [vmem:[%s16 + $0x8] sm:$0xff] %vm87, %v3334
  // Predicated region
  $region58: #{seq2seq_forward.1} parent=0 // pred_check
    _
  $region59: #{seq2seq_forward.1} parent=0 // pred_check_branch
    %3340 = sbr.rel (0) target = $region61
  $region60: #{seq2seq_forward.1} parent=0 // pred_region
    _
  $region61: #{seq2seq_forward.1} parent=0 // pred_fallthru
    _
  // Predicated region
  $region62: #{seq2seq_forward.1} parent=0 // pred_check
    _
  $region63: #{seq2seq_forward.1} parent=0 // pred_check_branch
    %3342 = sbr.rel (0) target = $region65
  $region64: #{seq2seq_forward.1} parent=0 // pred_region
    _
  $region65: #{seq2seq_forward.1} parent=0 // pred_fallthru
    _
  // Predicated region
  $region66: #{seq2seq_forward.1} parent=0 // pred_check
    _
  $region67: #{seq2seq_forward.1} parent=0 // pred_check_branch
    %3344 = sbr.rel (0) target = $region69
  $region68: #{seq2seq_forward.1} parent=0 // pred_region
    _
  $region69: #{seq2seq_forward.1} parent=0 // pred_fallthru
    _
  // Predicated region
  $region70: #{seq2seq_forward.1} parent=0 // pred_check
    _
  $region71: #{seq2seq_forward.1} parent=0 // pred_check_branch
    %3346 = sbr.rel (0) target = $region73
  $region72: #{seq2seq_forward.1} parent=0 // pred_region
    _
  $region73: #{seq2seq_forward.1} parent=0 // pred_fallthru
    _
  // Predicated region
  $region74: #{seq2seq_forward.1} parent=0 // pred_check
    _
  $region75: #{seq2seq_forward.1} parent=0 // pred_check_branch
    %3348 = sbr.rel (0) target = $region77
  $region76: #{seq2seq_forward.1} parent=0 // pred_region
    _
  $region77: #{seq2seq_forward.1} parent=0 // pred_fallthru
    _
  // Predicated region
  $region78: #{seq2seq_forward.1} parent=0 // pred_check
    _
  $region79: #{seq2seq_forward.1} parent=0 // pred_check_branch
    %3350 = sbr.rel (0) target = $region81
  $region80: #{seq2seq_forward.1} parent=0 // pred_region
    _
  $region81: #{seq2seq_forward.1} parent=0 // pred_fallthru
    _

</llo_original>
